<compile_context>
chip_gen: v5e
topology: v5e:2x2
jax: 0.10.0
libtpu: 0.0.40
codegen_flags: <defaults>
</compile_context>

<pallas_src>
import functools

import jax
import jax.numpy as jnp
from jax.experimental import pallas as pl
from jax.experimental.pallas import tpu as pltpu


# Flattening order of the per-GraphNetwork parameter dicts (kernel unpacks in
# exactly this order).
ENC_DEC_KEYS = ("we_e", "we_s", "we_r", "be1", "we2", "be2",
                "wn_n", "wn_a", "bn1", "wn2", "bn2")
PROC_KEYS = ("we_ge", "we_ee", "we_gs", "we_es", "we_gr", "we_er",
             "be1", "we2", "be2",
             "wn_gn", "wn_en", "wn_a", "bn1", "wn2", "bn2")


# ---------------------------------------------------------------------------
# Fused Pallas kernel: encode -> process (x num_steps) -> decode
# ---------------------------------------------------------------------------
def make_fused_kernel(num_processing_steps):
    def kernel(*refs):
        it = iter(refs)
        nodes_ref = next(it)          # [N, Dn_in]   f32
        edges_ref = next(it)          # [E, De_in]   f32
        s_oh_ref = next(it)           # [E, N]       bf16 one-hot (senders)
        r_oh_ref = next(it)           # [E, N]       bf16 one-hot (receivers)
        enc = {k: next(it) for k in ENC_DEC_KEYS}
        proc = {k: next(it) for k in PROC_KEYS}
        dec = {k: next(it) for k in ENC_DEC_KEYS}
        nodes_out_ref = next(it)      # [N, OUT_PAD] f32 (lane-dense slab)
        edges_out_ref = next(it)      # [E, OUT_PAD] f32 (lane-dense slab)

        f32 = jnp.float32
        bf16 = jnp.bfloat16

        nodes = nodes_ref[...]
        edges = edges_ref[...]
        s_oh = s_oh_ref[...]          # bf16, exact 0/1
        r_oh = r_oh_ref[...]

        def dot(a, b):
            return jnp.dot(a, b, preferred_element_type=f32)

        def gather(oh, x):
            # Row gather expressed as a one-hot matmul on the MXU
            # (bf16 x bf16 operands, f32 accumulation).
            return jnp.dot(oh, x.astype(bf16), preferred_element_type=f32)

        def scatter_add(oh, x):
            # sum over edges with receiver == v  ==  oh^T @ x, done directly
            # as a dot_general contracting dim 0 (no pre-transposed copy).
            return jax.lax.dot_general(
                oh, x.astype(bf16),
                dimension_numbers=(((0,), (0,)), ((), ())),
                preferred_element_type=f32)

        def gn_block(p, edge_feats, node_feats, we_keys, ws_keys, wr_keys,
                     wn_keys):
            """One GraphNetwork block; concat == sum of block matmuls."""
            # edge MLP, layer 1
            eh = p["be1"][...]
            for x, k in zip(edge_feats, we_keys):
                eh = eh + dot(x, p[k][...])
            for x, k in zip(node_feats, ws_keys):
                eh = eh + dot(gather(s_oh, x), p[k][...])
            for x, k in zip(node_feats, wr_keys):
                eh = eh + dot(gather(r_oh, x), p[k][...])
            eh = jnp.maximum(eh, 0.0)
            new_e = dot(eh, p["we2"][...]) + p["be2"][...]
            # scatter-add edges onto their receiver nodes
            agg = scatter_add(r_oh, new_e)
            # node MLP
            nh = p["bn1"][...]
            for x, k in zip(node_feats, wn_keys):
                nh = nh + dot(x, p[k][...])
            nh = nh + dot(agg, p["wn_a"][...])
            nh = jnp.maximum(nh, 0.0)
            new_n = dot(nh, p["wn2"][...]) + p["bn2"][...]
            return new_n, new_e

        # ---------------- encode ----------------
        enc_n, enc_e = gn_block(enc, [edges], [nodes],
                                ["we_e"], ["we_s"], ["we_r"], ["wn_n"])
        g_n, g_e = enc_n, enc_e

        # ---------------- process (skip-concat with encoded graph) ----------
        for _ in range(num_processing_steps):
            g_n, g_e = gn_block(
                proc,
                [g_e, enc_e],                       # edge blocks: [latent, encoded]
                [g_n, enc_n],                       # node blocks: [latent, encoded]
                ["we_ge", "we_ee"], ["we_gs", "we_es"],
                ["we_gr", "we_er"], ["wn_gn", "wn_en"])

        # ---------------- decode (output weights zero-padded to 128 lanes) --
        dec_n, dec_e = gn_block(dec, [g_e], [g_n],
                                ["we_e"], ["we_s"], ["we_r"], ["wn_n"])
        nodes_out_ref[...] = dec_n
        edges_out_ref[...] = dec_e

    return kernel


def encode_process_decode(params, nodes, edges, send_oh, recv_oh, *,
                          num_processing_steps, node_out, edge_out):
    """Whole EncodeProcessDecode forward as one Pallas call."""
    n_nodes = nodes.shape[0]
    n_edges = edges.shape[0]
    out_pad = params["decoder"]["wn2"].shape[1]     # lane-dense padded width

    flat = [nodes, edges, send_oh, recv_oh]
    flat += [params["encoder"][k] for k in ENC_DEC_KEYS]
    flat += [params["processor"][k] for k in PROC_KEYS]
    flat += [params["decoder"][k] for k in ENC_DEC_KEYS]

    vmem = pl.BlockSpec(memory_space=pltpu.MemorySpace.VMEM)
    nodes_pad, edges_pad = pl.pallas_call(
        make_fused_kernel(num_processing_steps),
        out_shape=(
            jax.ShapeDtypeStruct((n_nodes, out_pad), jnp.float32),
            jax.ShapeDtypeStruct((n_edges, out_pad), jnp.float32),
        ),
        in_specs=[vmem] * len(flat),
        out_specs=(vmem, vmem),
    )(*flat)

    # strip the inert zero-padded lanes back to the true feature widths
    return nodes_pad[:, :node_out], edges_pad[:, :edge_out]


# ---------------------------------------------------------------------------
# Parameter construction (deterministic, in-script)
# ---------------------------------------------------------------------------
def _w(key, shape, scale=0.1):
    return (scale * jax.random.normal(key, shape)).astype(jnp.float32)


def make_enc_params(key, node_in, edge_in, hidden, node_out, edge_out):
    ks = jax.random.split(key, 7)
    z = lambda *s: jnp.zeros(s, jnp.float32)
    return {
        "we_e": _w(ks[0], (edge_in, hidden)),
        "we_s": _w(ks[1], (node_in, hidden)),
        "we_r": _w(ks[2], (node_in, hidden)),
        "be1": z(1, hidden),
        "we2": _w(ks[3], (hidden, edge_out)),
        "be2": z(1, edge_out),
        "wn_n": _w(ks[4], (node_in, hidden)),
        "wn_a": _w(ks[5], (edge_out, hidden)),
        "bn1": z(1, hidden),
        "wn2": _w(ks[6], (hidden, node_out)),
        "bn2": z(1, node_out),
    }


def make_proc_params(key, latent, hidden):
    # First-layer weights pre-split into (latent, encoded) blocks — replaces
    # the concat([g, encoded]) of the reference module exactly.
    ks = jax.random.split(key, 11)
    z = lambda *s: jnp.zeros(s, jnp.float32)
    return {
        "we_ge": _w(ks[0], (latent, hidden)),
        "we_ee": _w(ks[1], (latent, hidden)),
        "we_gs": _w(ks[2], (latent, hidden)),
        "we_es": _w(ks[3], (latent, hidden)),
        "we_gr": _w(ks[4], (latent, hidden)),
        "we_er": _w(ks[5], (latent, hidden)),
        "be1": z(1, hidden),
        "we2": _w(ks[6], (hidden, latent)),
        "be2": z(1, latent),
        "wn_gn": _w(ks[7], (latent, hidden)),
        "wn_en": _w(ks[8], (latent, hidden)),
        "wn_a": _w(ks[9], (latent, hidden)),
        "bn1": z(1, hidden),
        "wn2": _w(ks[10], (hidden, latent)),
        "bn2": z(1, latent),
    }


def make_dec_params(key, latent, hidden, node_out, edge_out, out_pad):
    base = make_enc_params(key, latent, latent, hidden, node_out, edge_out)
    # Zero-pad the output-producing weights/biases to a lane-dense width so the
    # final stores are full 128-lane vregs; the padding columns stay exactly 0.
    we2 = jnp.zeros((hidden, out_pad), jnp.float32).at[:, :edge_out].set(base["we2"])
    wn2 = jnp.zeros((hidden, out_pad), jnp.float32).at[:, :node_out].set(base["wn2"])
    wn_a = jnp.zeros((out_pad, hidden), jnp.float32).at[:edge_out, :].set(base["wn_a"])
    base.update(
        we2=we2, wn2=wn2, wn_a=wn_a,
        be2=jnp.zeros((1, out_pad), jnp.float32),
        bn2=jnp.zeros((1, out_pad), jnp.float32),
    )
    return base


# ---------------------------------------------------------------------------
if __name__ == "__main__":
    N_NODES = 16
    N_EDGES = 32
    NODE_F = 8
    EDGE_F = 8
    HIDDEN = 128      # MXU-native width
    LATENT = 128
    OUT_PAD = 128     # lane-dense padded output width (sliced back outside)
    NUM_STEPS = 2

    key = jax.random.PRNGKey(0)
    k_n, k_e, k_s, k_r, k_enc, k_proc, k_dec = jax.random.split(key, 7)

    nodes = jax.random.normal(k_n, (N_NODES, NODE_F), dtype=jnp.float32)
    edges = jax.random.normal(k_e, (N_EDGES, EDGE_F), dtype=jnp.float32)
    senders = jax.random.randint(k_s, (N_EDGES,), 0, N_NODES)
    receivers = jax.random.randint(k_r, (N_EDGES,), 0, N_NODES)

    # bf16 one-hot connectivity (0/1 exact in bf16); no transposed copy needed.
    send_oh = jax.nn.one_hot(senders, N_NODES, dtype=jnp.bfloat16)    # [E, N]
    recv_oh = jax.nn.one_hot(receivers, N_NODES, dtype=jnp.bfloat16)  # [E, N]

    params = {
        "encoder": make_enc_params(k_enc, NODE_F, EDGE_F, HIDDEN, LATENT, LATENT),
        "processor": make_proc_params(k_proc, LATENT, HIDDEN),
        "decoder": make_dec_params(k_dec, LATENT, HIDDEN, NODE_F, EDGE_F, OUT_PAD),
    }

    fwd = jax.jit(functools.partial(
        encode_process_decode,
        num_processing_steps=NUM_STEPS, node_out=NODE_F, edge_out=EDGE_F))
    out_nodes, out_edges = fwd(params, nodes, edges, send_oh, recv_oh)
    jax.block_until_ready((out_nodes, out_edges))

    assert out_nodes.shape == (N_NODES, NODE_F)
    assert out_edges.shape == (N_EDGES, EDGE_F)
    assert bool(jnp.isfinite(out_nodes).all()) and bool(jnp.isfinite(out_edges).all())
    print("KERNEL_OK")
</pallas_src>

<mosaic_0001>
module attributes {stable_mosaic.version = 11 : i64} {
  func.func @kernel(%arg0: memref<16x8xf32, #tpu.memory_space<vmem>>, %arg1: memref<32x8xf32, #tpu.memory_space<vmem>>, %arg2: memref<32x16xbf16, #tpu.memory_space<vmem>>, %arg3: memref<32x16xbf16, #tpu.memory_space<vmem>>, %arg4: memref<8x128xf32, #tpu.memory_space<vmem>>, %arg5: memref<8x128xf32, #tpu.memory_space<vmem>>, %arg6: memref<8x128xf32, #tpu.memory_space<vmem>>, %arg7: memref<1x128xf32, #tpu.memory_space<vmem>>, %arg8: memref<128x128xf32, #tpu.memory_space<vmem>>, %arg9: memref<1x128xf32, #tpu.memory_space<vmem>>, %arg10: memref<8x128xf32, #tpu.memory_space<vmem>>, %arg11: memref<128x128xf32, #tpu.memory_space<vmem>>, %arg12: memref<1x128xf32, #tpu.memory_space<vmem>>, %arg13: memref<128x128xf32, #tpu.memory_space<vmem>>, %arg14: memref<1x128xf32, #tpu.memory_space<vmem>>, %arg15: memref<128x128xf32, #tpu.memory_space<vmem>>, %arg16: memref<128x128xf32, #tpu.memory_space<vmem>>, %arg17: memref<128x128xf32, #tpu.memory_space<vmem>>, %arg18: memref<128x128xf32, #tpu.memory_space<vmem>>, %arg19: memref<128x128xf32, #tpu.memory_space<vmem>>, %arg20: memref<128x128xf32, #tpu.memory_space<vmem>>, %arg21: memref<1x128xf32, #tpu.memory_space<vmem>>, %arg22: memref<128x128xf32, #tpu.memory_space<vmem>>, %arg23: memref<1x128xf32, #tpu.memory_space<vmem>>, %arg24: memref<128x128xf32, #tpu.memory_space<vmem>>, %arg25: memref<128x128xf32, #tpu.memory_space<vmem>>, %arg26: memref<128x128xf32, #tpu.memory_space<vmem>>, %arg27: memref<1x128xf32, #tpu.memory_space<vmem>>, %arg28: memref<128x128xf32, #tpu.memory_space<vmem>>, %arg29: memref<1x128xf32, #tpu.memory_space<vmem>>, %arg30: memref<128x128xf32, #tpu.memory_space<vmem>>, %arg31: memref<128x128xf32, #tpu.memory_space<vmem>>, %arg32: memref<128x128xf32, #tpu.memory_space<vmem>>, %arg33: memref<1x128xf32, #tpu.memory_space<vmem>>, %arg34: memref<128x128xf32, #tpu.memory_space<vmem>>, %arg35: memref<1x128xf32, #tpu.memory_space<vmem>>, %arg36: memref<128x128xf32, #tpu.memory_space<vmem>>, %arg37: memref<128x128xf32, #tpu.memory_space<vmem>>, %arg38: memref<1x128xf32, #tpu.memory_space<vmem>>, %arg39: memref<128x128xf32, #tpu.memory_space<vmem>>, %arg40: memref<1x128xf32, #tpu.memory_space<vmem>>, %arg41: memref<16x128xf32, #tpu.memory_space<vmem>>, %arg42: memref<32x128xf32, #tpu.memory_space<vmem>>) attributes {dimension_semantics = [], scalar_prefetch = 0 : i64, scratch_operands = 0 : i64, tpu.core_type = #tpu.core_type<tc>} {
    %c0 = arith.constant 0 : index
    %c0_0 = arith.constant 0 : index
    %0 = vector.load %arg0[%c0, %c0_0] : memref<16x8xf32, #tpu.memory_space<vmem>>, vector<16x8xf32>
    %c0_1 = arith.constant 0 : index
    %c0_2 = arith.constant 0 : index
    %1 = vector.load %arg1[%c0_1, %c0_2] : memref<32x8xf32, #tpu.memory_space<vmem>>, vector<32x8xf32>
    %c0_3 = arith.constant 0 : index
    %c0_4 = arith.constant 0 : index
    %2 = vector.load %arg2[%c0_3, %c0_4] : memref<32x16xbf16, #tpu.memory_space<vmem>>, vector<32x16xbf16>
    %c0_5 = arith.constant 0 : index
    %c0_6 = arith.constant 0 : index
    %3 = vector.load %arg3[%c0_5, %c0_6] : memref<32x16xbf16, #tpu.memory_space<vmem>>, vector<32x16xbf16>
    %c0_7 = arith.constant 0 : index
    %c0_8 = arith.constant 0 : index
    %4 = vector.load %arg7[%c0_7, %c0_8] : memref<1x128xf32, #tpu.memory_space<vmem>>, vector<1x128xf32>
    %c0_9 = arith.constant 0 : index
    %c0_10 = arith.constant 0 : index
    %5 = vector.load %arg4[%c0_9, %c0_10] : memref<8x128xf32, #tpu.memory_space<vmem>>, vector<8x128xf32>
    %cst = arith.constant dense<0.000000e+00> : vector<32x128xf32>
    %6 = tpu.matmul %1, %5, %cst {dimension_numbers = #tpu.dot_dimension_numbers<[1], [0], [0], [1], [0, 0, 1, 1], [], []>} : vector<32x8xf32>, vector<8x128xf32>, vector<32x128xf32> -> vector<32x128xf32>
    %7 = vector.broadcast %4 : vector<1x128xf32> to vector<32x128xf32>
    %8 = arith.addf %7, %6 : vector<32x128xf32>
    %9 = arith.truncf %0 : vector<16x8xf32> to vector<16x8xbf16>
    %cst_11 = arith.constant dense<0.000000e+00> : vector<32x8xf32>
    %10 = tpu.matmul %2, %9, %cst_11 {dimension_numbers = #tpu.dot_dimension_numbers<[1], [0], [0], [1], [0, 0, 1, 1], [], []>} : vector<32x16xbf16>, vector<16x8xbf16>, vector<32x8xf32> -> vector<32x8xf32>
    %c0_12 = arith.constant 0 : index
    %c0_13 = arith.constant 0 : index
    %11 = vector.load %arg5[%c0_12, %c0_13] : memref<8x128xf32, #tpu.memory_space<vmem>>, vector<8x128xf32>
    %cst_14 = arith.constant dense<0.000000e+00> : vector<32x128xf32>
    %12 = tpu.matmul %10, %11, %cst_14 {dimension_numbers = #tpu.dot_dimension_numbers<[1], [0], [0], [1], [0, 0, 1, 1], [], []>} : vector<32x8xf32>, vector<8x128xf32>, vector<32x128xf32> -> vector<32x128xf32>
    %13 = arith.addf %8, %12 : vector<32x128xf32>
    %14 = arith.truncf %0 : vector<16x8xf32> to vector<16x8xbf16>
    %cst_15 = arith.constant dense<0.000000e+00> : vector<32x8xf32>
    %15 = tpu.matmul %3, %14, %cst_15 {dimension_numbers = #tpu.dot_dimension_numbers<[1], [0], [0], [1], [0, 0, 1, 1], [], []>} : vector<32x16xbf16>, vector<16x8xbf16>, vector<32x8xf32> -> vector<32x8xf32>
    %c0_16 = arith.constant 0 : index
    %c0_17 = arith.constant 0 : index
    %16 = vector.load %arg6[%c0_16, %c0_17] : memref<8x128xf32, #tpu.memory_space<vmem>>, vector<8x128xf32>
    %cst_18 = arith.constant dense<0.000000e+00> : vector<32x128xf32>
    %17 = tpu.matmul %15, %16, %cst_18 {dimension_numbers = #tpu.dot_dimension_numbers<[1], [0], [0], [1], [0, 0, 1, 1], [], []>} : vector<32x8xf32>, vector<8x128xf32>, vector<32x128xf32> -> vector<32x128xf32>
    %18 = arith.addf %13, %17 : vector<32x128xf32>
    %cst_19 = arith.constant 0.000000e+00 : f32
    %19 = vector.broadcast %cst_19 : f32 to vector<32x128xf32>
    %20 = arith.maximumf %18, %19 : vector<32x128xf32>
    %c0_20 = arith.constant 0 : index
    %c0_21 = arith.constant 0 : index
    %21 = vector.load %arg8[%c0_20, %c0_21] : memref<128x128xf32, #tpu.memory_space<vmem>>, vector<128x128xf32>
    %cst_22 = arith.constant dense<0.000000e+00> : vector<32x128xf32>
    %22 = tpu.matmul %20, %21, %cst_22 {dimension_numbers = #tpu.dot_dimension_numbers<[1], [0], [0], [1], [0, 0, 1, 1], [], []>} : vector<32x128xf32>, vector<128x128xf32>, vector<32x128xf32> -> vector<32x128xf32>
    %c0_23 = arith.constant 0 : index
    %c0_24 = arith.constant 0 : index
    %23 = vector.load %arg9[%c0_23, %c0_24] : memref<1x128xf32, #tpu.memory_space<vmem>>, vector<1x128xf32>
    %24 = vector.broadcast %23 : vector<1x128xf32> to vector<32x128xf32>
    %25 = arith.addf %22, %24 : vector<32x128xf32>
    %26 = arith.truncf %25 : vector<32x128xf32> to vector<32x128xbf16>
    %cst_25 = arith.constant dense<0.000000e+00> : vector<16x128xf32>
    %27 = tpu.matmul %3, %26, %cst_25 {dimension_numbers = #tpu.dot_dimension_numbers<[0], [0], [1], [1], [0, 1, 1, 1], [], []>} : vector<32x16xbf16>, vector<32x128xbf16>, vector<16x128xf32> -> vector<16x128xf32>
    %c0_26 = arith.constant 0 : index
    %c0_27 = arith.constant 0 : index
    %28 = vector.load %arg12[%c0_26, %c0_27] : memref<1x128xf32, #tpu.memory_space<vmem>>, vector<1x128xf32>
    %c0_28 = arith.constant 0 : index
    %c0_29 = arith.constant 0 : index
    %29 = vector.load %arg10[%c0_28, %c0_29] : memref<8x128xf32, #tpu.memory_space<vmem>>, vector<8x128xf32>
    %cst_30 = arith.constant dense<0.000000e+00> : vector<16x128xf32>
    %30 = tpu.matmul %0, %29, %cst_30 {dimension_numbers = #tpu.dot_dimension_numbers<[1], [0], [0], [1], [0, 0, 1, 1], [], []>} : vector<16x8xf32>, vector<8x128xf32>, vector<16x128xf32> -> vector<16x128xf32>
    %31 = vector.broadcast %28 : vector<1x128xf32> to vector<16x128xf32>
    %32 = arith.addf %31, %30 : vector<16x128xf32>
    %c0_31 = arith.constant 0 : index
    %c0_32 = arith.constant 0 : index
    %33 = vector.load %arg11[%c0_31, %c0_32] : memref<128x128xf32, #tpu.memory_space<vmem>>, vector<128x128xf32>
    %cst_33 = arith.constant dense<0.000000e+00> : vector<16x128xf32>
    %34 = tpu.matmul %27, %33, %cst_33 {dimension_numbers = #tpu.dot_dimension_numbers<[1], [0], [0], [1], [0, 0, 1, 1], [], []>} : vector<16x128xf32>, vector<128x128xf32>, vector<16x128xf32> -> vector<16x128xf32>
    %35 = arith.addf %32, %34 : vector<16x128xf32>
    %cst_34 = arith.constant 0.000000e+00 : f32
    %36 = vector.broadcast %cst_34 : f32 to vector<16x128xf32>
    %37 = arith.maximumf %35, %36 : vector<16x128xf32>
    %c0_35 = arith.constant 0 : index
    %c0_36 = arith.constant 0 : index
    %38 = vector.load %arg13[%c0_35, %c0_36] : memref<128x128xf32, #tpu.memory_space<vmem>>, vector<128x128xf32>
    %cst_37 = arith.constant dense<0.000000e+00> : vector<16x128xf32>
    %39 = tpu.matmul %37, %38, %cst_37 {dimension_numbers = #tpu.dot_dimension_numbers<[1], [0], [0], [1], [0, 0, 1, 1], [], []>} : vector<16x128xf32>, vector<128x128xf32>, vector<16x128xf32> -> vector<16x128xf32>
    %c0_38 = arith.constant 0 : index
    %c0_39 = arith.constant 0 : index
    %40 = vector.load %arg14[%c0_38, %c0_39] : memref<1x128xf32, #tpu.memory_space<vmem>>, vector<1x128xf32>
    %41 = vector.broadcast %40 : vector<1x128xf32> to vector<16x128xf32>
    %42 = arith.addf %39, %41 : vector<16x128xf32>
    %c0_40 = arith.constant 0 : index
    %c0_41 = arith.constant 0 : index
    %43 = vector.load %arg21[%c0_40, %c0_41] : memref<1x128xf32, #tpu.memory_space<vmem>>, vector<1x128xf32>
    %c0_42 = arith.constant 0 : index
    %c0_43 = arith.constant 0 : index
    %44 = vector.load %arg15[%c0_42, %c0_43] : memref<128x128xf32, #tpu.memory_space<vmem>>, vector<128x128xf32>
    %cst_44 = arith.constant dense<0.000000e+00> : vector<32x128xf32>
    %45 = tpu.matmul %25, %44, %cst_44 {dimension_numbers = #tpu.dot_dimension_numbers<[1], [0], [0], [1], [0, 0, 1, 1], [], []>} : vector<32x128xf32>, vector<128x128xf32>, vector<32x128xf32> -> vector<32x128xf32>
    %46 = vector.broadcast %43 : vector<1x128xf32> to vector<32x128xf32>
    %47 = arith.addf %46, %45 : vector<32x128xf32>
    %c0_45 = arith.constant 0 : index
    %c0_46 = arith.constant 0 : index
    %48 = vector.load %arg16[%c0_45, %c0_46] : memref<128x128xf32, #tpu.memory_space<vmem>>, vector<128x128xf32>
    %cst_47 = arith.constant dense<0.000000e+00> : vector<32x128xf32>
    %49 = tpu.matmul %25, %48, %cst_47 {dimension_numbers = #tpu.dot_dimension_numbers<[1], [0], [0], [1], [0, 0, 1, 1], [], []>} : vector<32x128xf32>, vector<128x128xf32>, vector<32x128xf32> -> vector<32x128xf32>
    %50 = arith.addf %47, %49 : vector<32x128xf32>
    %51 = arith.truncf %42 : vector<16x128xf32> to vector<16x128xbf16>
    %cst_48 = arith.constant dense<0.000000e+00> : vector<32x128xf32>
    %52 = tpu.matmul %2, %51, %cst_48 {dimension_numbers = #tpu.dot_dimension_numbers<[1], [0], [0], [1], [0, 0, 1, 1], [], []>} : vector<32x16xbf16>, vector<16x128xbf16>, vector<32x128xf32> -> vector<32x128xf32>
    %c0_49 = arith.constant 0 : index
    %c0_50 = arith.constant 0 : index
    %53 = vector.load %arg17[%c0_49, %c0_50] : memref<128x128xf32, #tpu.memory_space<vmem>>, vector<128x128xf32>
    %cst_51 = arith.constant dense<0.000000e+00> : vector<32x128xf32>
    %54 = tpu.matmul %52, %53, %cst_51 {dimension_numbers = #tpu.dot_dimension_numbers<[1], [0], [0], [1], [0, 0, 1, 1], [], []>} : vector<32x128xf32>, vector<128x128xf32>, vector<32x128xf32> -> vector<32x128xf32>
    %55 = arith.addf %50, %54 : vector<32x128xf32>
    %56 = arith.truncf %42 : vector<16x128xf32> to vector<16x128xbf16>
    %cst_52 = arith.constant dense<0.000000e+00> : vector<32x128xf32>
    %57 = tpu.matmul %2, %56, %cst_52 {dimension_numbers = #tpu.dot_dimension_numbers<[1], [0], [0], [1], [0, 0, 1, 1], [], []>} : vector<32x16xbf16>, vector<16x128xbf16>, vector<32x128xf32> -> vector<32x128xf32>
    %c0_53 = arith.constant 0 : index
    %c0_54 = arith.constant 0 : index
    %58 = vector.load %arg18[%c0_53, %c0_54] : memref<128x128xf32, #tpu.memory_space<vmem>>, vector<128x128xf32>
    %cst_55 = arith.constant dense<0.000000e+00> : vector<32x128xf32>
    %59 = tpu.matmul %57, %58, %cst_55 {dimension_numbers = #tpu.dot_dimension_numbers<[1], [0], [0], [1], [0, 0, 1, 1], [], []>} : vector<32x128xf32>, vector<128x128xf32>, vector<32x128xf32> -> vector<32x128xf32>
    %60 = arith.addf %55, %59 : vector<32x128xf32>
    %61 = arith.truncf %42 : vector<16x128xf32> to vector<16x128xbf16>
    %cst_56 = arith.constant dense<0.000000e+00> : vector<32x128xf32>
    %62 = tpu.matmul %3, %61, %cst_56 {dimension_numbers = #tpu.dot_dimension_numbers<[1], [0], [0], [1], [0, 0, 1, 1], [], []>} : vector<32x16xbf16>, vector<16x128xbf16>, vector<32x128xf32> -> vector<32x128xf32>
    %c0_57 = arith.constant 0 : index
    %c0_58 = arith.constant 0 : index
    %63 = vector.load %arg19[%c0_57, %c0_58] : memref<128x128xf32, #tpu.memory_space<vmem>>, vector<128x128xf32>
    %cst_59 = arith.constant dense<0.000000e+00> : vector<32x128xf32>
    %64 = tpu.matmul %62, %63, %cst_59 {dimension_numbers = #tpu.dot_dimension_numbers<[1], [0], [0], [1], [0, 0, 1, 1], [], []>} : vector<32x128xf32>, vector<128x128xf32>, vector<32x128xf32> -> vector<32x128xf32>
    %65 = arith.addf %60, %64 : vector<32x128xf32>
    %66 = arith.truncf %42 : vector<16x128xf32> to vector<16x128xbf16>
    %cst_60 = arith.constant dense<0.000000e+00> : vector<32x128xf32>
    %67 = tpu.matmul %3, %66, %cst_60 {dimension_numbers = #tpu.dot_dimension_numbers<[1], [0], [0], [1], [0, 0, 1, 1], [], []>} : vector<32x16xbf16>, vector<16x128xbf16>, vector<32x128xf32> -> vector<32x128xf32>
    %c0_61 = arith.constant 0 : index
    %c0_62 = arith.constant 0 : index
    %68 = vector.load %arg20[%c0_61, %c0_62] : memref<128x128xf32, #tpu.memory_space<vmem>>, vector<128x128xf32>
    %cst_63 = arith.constant dense<0.000000e+00> : vector<32x128xf32>
    %69 = tpu.matmul %67, %68, %cst_63 {dimension_numbers = #tpu.dot_dimension_numbers<[1], [0], [0], [1], [0, 0, 1, 1], [], []>} : vector<32x128xf32>, vector<128x128xf32>, vector<32x128xf32> -> vector<32x128xf32>
    %70 = arith.addf %65, %69 : vector<32x128xf32>
    %cst_64 = arith.constant 0.000000e+00 : f32
    %71 = vector.broadcast %cst_64 : f32 to vector<32x128xf32>
    %72 = arith.maximumf %70, %71 : vector<32x128xf32>
    %c0_65 = arith.constant 0 : index
    %c0_66 = arith.constant 0 : index
    %73 = vector.load %arg22[%c0_65, %c0_66] : memref<128x128xf32, #tpu.memory_space<vmem>>, vector<128x128xf32>
    %cst_67 = arith.constant dense<0.000000e+00> : vector<32x128xf32>
    %74 = tpu.matmul %72, %73, %cst_67 {dimension_numbers = #tpu.dot_dimension_numbers<[1], [0], [0], [1], [0, 0, 1, 1], [], []>} : vector<32x128xf32>, vector<128x128xf32>, vector<32x128xf32> -> vector<32x128xf32>
    %c0_68 = arith.constant 0 : index
    %c0_69 = arith.constant 0 : index
    %75 = vector.load %arg23[%c0_68, %c0_69] : memref<1x128xf32, #tpu.memory_space<vmem>>, vector<1x128xf32>
    %76 = vector.broadcast %75 : vector<1x128xf32> to vector<32x128xf32>
    %77 = arith.addf %74, %76 : vector<32x128xf32>
    %78 = arith.truncf %77 : vector<32x128xf32> to vector<32x128xbf16>
    %cst_70 = arith.constant dense<0.000000e+00> : vector<16x128xf32>
    %79 = tpu.matmul %3, %78, %cst_70 {dimension_numbers = #tpu.dot_dimension_numbers<[0], [0], [1], [1], [0, 1, 1, 1], [], []>} : vector<32x16xbf16>, vector<32x128xbf16>, vector<16x128xf32> -> vector<16x128xf32>
    %c0_71 = arith.constant 0 : index
    %c0_72 = arith.constant 0 : index
    %80 = vector.load %arg27[%c0_71, %c0_72] : memref<1x128xf32, #tpu.memory_space<vmem>>, vector<1x128xf32>
    %c0_73 = arith.constant 0 : index
    %c0_74 = arith.constant 0 : index
    %81 = vector.load %arg24[%c0_73, %c0_74] : memref<128x128xf32, #tpu.memory_space<vmem>>, vector<128x128xf32>
    %cst_75 = arith.constant dense<0.000000e+00> : vector<16x128xf32>
    %82 = tpu.matmul %42, %81, %cst_75 {dimension_numbers = #tpu.dot_dimension_numbers<[1], [0], [0], [1], [0, 0, 1, 1], [], []>} : vector<16x128xf32>, vector<128x128xf32>, vector<16x128xf32> -> vector<16x128xf32>
    %83 = vector.broadcast %80 : vector<1x128xf32> to vector<16x128xf32>
    %84 = arith.addf %83, %82 : vector<16x128xf32>
    %c0_76 = arith.constant 0 : index
    %c0_77 = arith.constant 0 : index
    %85 = vector.load %arg25[%c0_76, %c0_77] : memref<128x128xf32, #tpu.memory_space<vmem>>, vector<128x128xf32>
    %cst_78 = arith.constant dense<0.000000e+00> : vector<16x128xf32>
    %86 = tpu.matmul %42, %85, %cst_78 {dimension_numbers = #tpu.dot_dimension_numbers<[1], [0], [0], [1], [0, 0, 1, 1], [], []>} : vector<16x128xf32>, vector<128x128xf32>, vector<16x128xf32> -> vector<16x128xf32>
    %87 = arith.addf %84, %86 : vector<16x128xf32>
    %c0_79 = arith.constant 0 : index
    %c0_80 = arith.constant 0 : index
    %88 = vector.load %arg26[%c0_79, %c0_80] : memref<128x128xf32, #tpu.memory_space<vmem>>, vector<128x128xf32>
    %cst_81 = arith.constant dense<0.000000e+00> : vector<16x128xf32>
    %89 = tpu.matmul %79, %88, %cst_81 {dimension_numbers = #tpu.dot_dimension_numbers<[1], [0], [0], [1], [0, 0, 1, 1], [], []>} : vector<16x128xf32>, vector<128x128xf32>, vector<16x128xf32> -> vector<16x128xf32>
    %90 = arith.addf %87, %89 : vector<16x128xf32>
    %cst_82 = arith.constant 0.000000e+00 : f32
    %91 = vector.broadcast %cst_82 : f32 to vector<16x128xf32>
    %92 = arith.maximumf %90, %91 : vector<16x128xf32>
    %c0_83 = arith.constant 0 : index
    %c0_84 = arith.constant 0 : index
    %93 = vector.load %arg28[%c0_83, %c0_84] : memref<128x128xf32, #tpu.memory_space<vmem>>, vector<128x128xf32>
    %cst_85 = arith.constant dense<0.000000e+00> : vector<16x128xf32>
    %94 = tpu.matmul %92, %93, %cst_85 {dimension_numbers = #tpu.dot_dimension_numbers<[1], [0], [0], [1], [0, 0, 1, 1], [], []>} : vector<16x128xf32>, vector<128x128xf32>, vector<16x128xf32> -> vector<16x128xf32>
    %c0_86 = arith.constant 0 : index
    %c0_87 = arith.constant 0 : index
    %95 = vector.load %arg29[%c0_86, %c0_87] : memref<1x128xf32, #tpu.memory_space<vmem>>, vector<1x128xf32>
    %96 = vector.broadcast %95 : vector<1x128xf32> to vector<16x128xf32>
    %97 = arith.addf %94, %96 : vector<16x128xf32>
    %c0_88 = arith.constant 0 : index
    %c0_89 = arith.constant 0 : index
    %98 = vector.load %arg21[%c0_88, %c0_89] : memref<1x128xf32, #tpu.memory_space<vmem>>, vector<1x128xf32>
    %c0_90 = arith.constant 0 : index
    %c0_91 = arith.constant 0 : index
    %99 = vector.load %arg15[%c0_90, %c0_91] : memref<128x128xf32, #tpu.memory_space<vmem>>, vector<128x128xf32>
    %cst_92 = arith.constant dense<0.000000e+00> : vector<32x128xf32>
    %100 = tpu.matmul %77, %99, %cst_92 {dimension_numbers = #tpu.dot_dimension_numbers<[1], [0], [0], [1], [0, 0, 1, 1], [], []>} : vector<32x128xf32>, vector<128x128xf32>, vector<32x128xf32> -> vector<32x128xf32>
    %101 = vector.broadcast %98 : vector<1x128xf32> to vector<32x128xf32>
    %102 = arith.addf %101, %100 : vector<32x128xf32>
    %c0_93 = arith.constant 0 : index
    %c0_94 = arith.constant 0 : index
    %103 = vector.load %arg16[%c0_93, %c0_94] : memref<128x128xf32, #tpu.memory_space<vmem>>, vector<128x128xf32>
    %cst_95 = arith.constant dense<0.000000e+00> : vector<32x128xf32>
    %104 = tpu.matmul %25, %103, %cst_95 {dimension_numbers = #tpu.dot_dimension_numbers<[1], [0], [0], [1], [0, 0, 1, 1], [], []>} : vector<32x128xf32>, vector<128x128xf32>, vector<32x128xf32> -> vector<32x128xf32>
    %105 = arith.addf %102, %104 : vector<32x128xf32>
    %106 = arith.truncf %97 : vector<16x128xf32> to vector<16x128xbf16>
    %cst_96 = arith.constant dense<0.000000e+00> : vector<32x128xf32>
    %107 = tpu.matmul %2, %106, %cst_96 {dimension_numbers = #tpu.dot_dimension_numbers<[1], [0], [0], [1], [0, 0, 1, 1], [], []>} : vector<32x16xbf16>, vector<16x128xbf16>, vector<32x128xf32> -> vector<32x128xf32>
    %c0_97 = arith.constant 0 : index
    %c0_98 = arith.constant 0 : index
    %108 = vector.load %arg17[%c0_97, %c0_98] : memref<128x128xf32, #tpu.memory_space<vmem>>, vector<128x128xf32>
    %cst_99 = arith.constant dense<0.000000e+00> : vector<32x128xf32>
    %109 = tpu.matmul %107, %108, %cst_99 {dimension_numbers = #tpu.dot_dimension_numbers<[1], [0], [0], [1], [0, 0, 1, 1], [], []>} : vector<32x128xf32>, vector<128x128xf32>, vector<32x128xf32> -> vector<32x128xf32>
    %110 = arith.addf %105, %109 : vector<32x128xf32>
    %111 = arith.truncf %42 : vector<16x128xf32> to vector<16x128xbf16>
    %cst_100 = arith.constant dense<0.000000e+00> : vector<32x128xf32>
    %112 = tpu.matmul %2, %111, %cst_100 {dimension_numbers = #tpu.dot_dimension_numbers<[1], [0], [0], [1], [0, 0, 1, 1], [], []>} : vector<32x16xbf16>, vector<16x128xbf16>, vector<32x128xf32> -> vector<32x128xf32>
    %c0_101 = arith.constant 0 : index
    %c0_102 = arith.constant 0 : index
    %113 = vector.load %arg18[%c0_101, %c0_102] : memref<128x128xf32, #tpu.memory_space<vmem>>, vector<128x128xf32>
    %cst_103 = arith.constant dense<0.000000e+00> : vector<32x128xf32>
    %114 = tpu.matmul %112, %113, %cst_103 {dimension_numbers = #tpu.dot_dimension_numbers<[1], [0], [0], [1], [0, 0, 1, 1], [], []>} : vector<32x128xf32>, vector<128x128xf32>, vector<32x128xf32> -> vector<32x128xf32>
    %115 = arith.addf %110, %114 : vector<32x128xf32>
    %116 = arith.truncf %97 : vector<16x128xf32> to vector<16x128xbf16>
    %cst_104 = arith.constant dense<0.000000e+00> : vector<32x128xf32>
    %117 = tpu.matmul %3, %116, %cst_104 {dimension_numbers = #tpu.dot_dimension_numbers<[1], [0], [0], [1], [0, 0, 1, 1], [], []>} : vector<32x16xbf16>, vector<16x128xbf16>, vector<32x128xf32> -> vector<32x128xf32>
    %c0_105 = arith.constant 0 : index
    %c0_106 = arith.constant 0 : index
    %118 = vector.load %arg19[%c0_105, %c0_106] : memref<128x128xf32, #tpu.memory_space<vmem>>, vector<128x128xf32>
    %cst_107 = arith.constant dense<0.000000e+00> : vector<32x128xf32>
    %119 = tpu.matmul %117, %118, %cst_107 {dimension_numbers = #tpu.dot_dimension_numbers<[1], [0], [0], [1], [0, 0, 1, 1], [], []>} : vector<32x128xf32>, vector<128x128xf32>, vector<32x128xf32> -> vector<32x128xf32>
    %120 = arith.addf %115, %119 : vector<32x128xf32>
    %121 = arith.truncf %42 : vector<16x128xf32> to vector<16x128xbf16>
    %cst_108 = arith.constant dense<0.000000e+00> : vector<32x128xf32>
    %122 = tpu.matmul %3, %121, %cst_108 {dimension_numbers = #tpu.dot_dimension_numbers<[1], [0], [0], [1], [0, 0, 1, 1], [], []>} : vector<32x16xbf16>, vector<16x128xbf16>, vector<32x128xf32> -> vector<32x128xf32>
    %c0_109 = arith.constant 0 : index
    %c0_110 = arith.constant 0 : index
    %123 = vector.load %arg20[%c0_109, %c0_110] : memref<128x128xf32, #tpu.memory_space<vmem>>, vector<128x128xf32>
    %cst_111 = arith.constant dense<0.000000e+00> : vector<32x128xf32>
    %124 = tpu.matmul %122, %123, %cst_111 {dimension_numbers = #tpu.dot_dimension_numbers<[1], [0], [0], [1], [0, 0, 1, 1], [], []>} : vector<32x128xf32>, vector<128x128xf32>, vector<32x128xf32> -> vector<32x128xf32>
    %125 = arith.addf %120, %124 : vector<32x128xf32>
    %cst_112 = arith.constant 0.000000e+00 : f32
    %126 = vector.broadcast %cst_112 : f32 to vector<32x128xf32>
    %127 = arith.maximumf %125, %126 : vector<32x128xf32>
    %c0_113 = arith.constant 0 : index
    %c0_114 = arith.constant 0 : index
    %128 = vector.load %arg22[%c0_113, %c0_114] : memref<128x128xf32, #tpu.memory_space<vmem>>, vector<128x128xf32>
    %cst_115 = arith.constant dense<0.000000e+00> : vector<32x128xf32>
    %129 = tpu.matmul %127, %128, %cst_115 {dimension_numbers = #tpu.dot_dimension_numbers<[1], [0], [0], [1], [0, 0, 1, 1], [], []>} : vector<32x128xf32>, vector<128x128xf32>, vector<32x128xf32> -> vector<32x128xf32>
    %c0_116 = arith.constant 0 : index
    %c0_117 = arith.constant 0 : index
    %130 = vector.load %arg23[%c0_116, %c0_117] : memref<1x128xf32, #tpu.memory_space<vmem>>, vector<1x128xf32>
    %131 = vector.broadcast %130 : vector<1x128xf32> to vector<32x128xf32>
    %132 = arith.addf %129, %131 : vector<32x128xf32>
    %133 = arith.truncf %132 : vector<32x128xf32> to vector<32x128xbf16>
    %cst_118 = arith.constant dense<0.000000e+00> : vector<16x128xf32>
    %134 = tpu.matmul %3, %133, %cst_118 {dimension_numbers = #tpu.dot_dimension_numbers<[0], [0], [1], [1], [0, 1, 1, 1], [], []>} : vector<32x16xbf16>, vector<32x128xbf16>, vector<16x128xf32> -> vector<16x128xf32>
    %c0_119 = arith.constant 0 : index
    %c0_120 = arith.constant 0 : index
    %135 = vector.load %arg27[%c0_119, %c0_120] : memref<1x128xf32, #tpu.memory_space<vmem>>, vector<1x128xf32>
    %c0_121 = arith.constant 0 : index
    %c0_122 = arith.constant 0 : index
    %136 = vector.load %arg24[%c0_121, %c0_122] : memref<128x128xf32, #tpu.memory_space<vmem>>, vector<128x128xf32>
    %cst_123 = arith.constant dense<0.000000e+00> : vector<16x128xf32>
    %137 = tpu.matmul %97, %136, %cst_123 {dimension_numbers = #tpu.dot_dimension_numbers<[1], [0], [0], [1], [0, 0, 1, 1], [], []>} : vector<16x128xf32>, vector<128x128xf32>, vector<16x128xf32> -> vector<16x128xf32>
    %138 = vector.broadcast %135 : vector<1x128xf32> to vector<16x128xf32>
    %139 = arith.addf %138, %137 : vector<16x128xf32>
    %c0_124 = arith.constant 0 : index
    %c0_125 = arith.constant 0 : index
    %140 = vector.load %arg25[%c0_124, %c0_125] : memref<128x128xf32, #tpu.memory_space<vmem>>, vector<128x128xf32>
    %cst_126 = arith.constant dense<0.000000e+00> : vector<16x128xf32>
    %141 = tpu.matmul %42, %140, %cst_126 {dimension_numbers = #tpu.dot_dimension_numbers<[1], [0], [0], [1], [0, 0, 1, 1], [], []>} : vector<16x128xf32>, vector<128x128xf32>, vector<16x128xf32> -> vector<16x128xf32>
    %142 = arith.addf %139, %141 : vector<16x128xf32>
    %c0_127 = arith.constant 0 : index
    %c0_128 = arith.constant 0 : index
    %143 = vector.load %arg26[%c0_127, %c0_128] : memref<128x128xf32, #tpu.memory_space<vmem>>, vector<128x128xf32>
    %cst_129 = arith.constant dense<0.000000e+00> : vector<16x128xf32>
    %144 = tpu.matmul %134, %143, %cst_129 {dimension_numbers = #tpu.dot_dimension_numbers<[1], [0], [0], [1], [0, 0, 1, 1], [], []>} : vector<16x128xf32>, vector<128x128xf32>, vector<16x128xf32> -> vector<16x128xf32>
    %145 = arith.addf %142, %144 : vector<16x128xf32>
    %cst_130 = arith.constant 0.000000e+00 : f32
    %146 = vector.broadcast %cst_130 : f32 to vector<16x128xf32>
    %147 = arith.maximumf %145, %146 : vector<16x128xf32>
    %c0_131 = arith.constant 0 : index
    %c0_132 = arith.constant 0 : index
    %148 = vector.load %arg28[%c0_131, %c0_132] : memref<128x128xf32, #tpu.memory_space<vmem>>, vector<128x128xf32>
    %cst_133 = arith.constant dense<0.000000e+00> : vector<16x128xf32>
    %149 = tpu.matmul %147, %148, %cst_133 {dimension_numbers = #tpu.dot_dimension_numbers<[1], [0], [0], [1], [0, 0, 1, 1], [], []>} : vector<16x128xf32>, vector<128x128xf32>, vector<16x128xf32> -> vector<16x128xf32>
    %c0_134 = arith.constant 0 : index
    %c0_135 = arith.constant 0 : index
    %150 = vector.load %arg29[%c0_134, %c0_135] : memref<1x128xf32, #tpu.memory_space<vmem>>, vector<1x128xf32>
    %151 = vector.broadcast %150 : vector<1x128xf32> to vector<16x128xf32>
    %152 = arith.addf %149, %151 : vector<16x128xf32>
    %c0_136 = arith.constant 0 : index
    %c0_137 = arith.constant 0 : index
    %153 = vector.load %arg33[%c0_136, %c0_137] : memref<1x128xf32, #tpu.memory_space<vmem>>, vector<1x128xf32>
    %c0_138 = arith.constant 0 : index
    %c0_139 = arith.constant 0 : index
    %154 = vector.load %arg30[%c0_138, %c0_139] : memref<128x128xf32, #tpu.memory_space<vmem>>, vector<128x128xf32>
    %cst_140 = arith.constant dense<0.000000e+00> : vector<32x128xf32>
    %155 = tpu.matmul %132, %154, %cst_140 {dimension_numbers = #tpu.dot_dimension_numbers<[1], [0], [0], [1], [0, 0, 1, 1], [], []>} : vector<32x128xf32>, vector<128x128xf32>, vector<32x128xf32> -> vector<32x128xf32>
    %156 = vector.broadcast %153 : vector<1x128xf32> to vector<32x128xf32>
    %157 = arith.addf %156, %155 : vector<32x128xf32>
    %158 = arith.truncf %152 : vector<16x128xf32> to vector<16x128xbf16>
    %cst_141 = arith.constant dense<0.000000e+00> : vector<32x128xf32>
    %159 = tpu.matmul %2, %158, %cst_141 {dimension_numbers = #tpu.dot_dimension_numbers<[1], [0], [0], [1], [0, 0, 1, 1], [], []>} : vector<32x16xbf16>, vector<16x128xbf16>, vector<32x128xf32> -> vector<32x128xf32>
    %c0_142 = arith.constant 0 : index
    %c0_143 = arith.constant 0 : index
    %160 = vector.load %arg31[%c0_142, %c0_143] : memref<128x128xf32, #tpu.memory_space<vmem>>, vector<128x128xf32>
    %cst_144 = arith.constant dense<0.000000e+00> : vector<32x128xf32>
    %161 = tpu.matmul %159, %160, %cst_144 {dimension_numbers = #tpu.dot_dimension_numbers<[1], [0], [0], [1], [0, 0, 1, 1], [], []>} : vector<32x128xf32>, vector<128x128xf32>, vector<32x128xf32> -> vector<32x128xf32>
    %162 = arith.addf %157, %161 : vector<32x128xf32>
    %163 = arith.truncf %152 : vector<16x128xf32> to vector<16x128xbf16>
    %cst_145 = arith.constant dense<0.000000e+00> : vector<32x128xf32>
    %164 = tpu.matmul %3, %163, %cst_145 {dimension_numbers = #tpu.dot_dimension_numbers<[1], [0], [0], [1], [0, 0, 1, 1], [], []>} : vector<32x16xbf16>, vector<16x128xbf16>, vector<32x128xf32> -> vector<32x128xf32>
    %c0_146 = arith.constant 0 : index
    %c0_147 = arith.constant 0 : index
    %165 = vector.load %arg32[%c0_146, %c0_147] : memref<128x128xf32, #tpu.memory_space<vmem>>, vector<128x128xf32>
    %cst_148 = arith.constant dense<0.000000e+00> : vector<32x128xf32>
    %166 = tpu.matmul %164, %165, %cst_148 {dimension_numbers = #tpu.dot_dimension_numbers<[1], [0], [0], [1], [0, 0, 1, 1], [], []>} : vector<32x128xf32>, vector<128x128xf32>, vector<32x128xf32> -> vector<32x128xf32>
    %167 = arith.addf %162, %166 : vector<32x128xf32>
    %cst_149 = arith.constant 0.000000e+00 : f32
    %168 = vector.broadcast %cst_149 : f32 to vector<32x128xf32>
    %169 = arith.maximumf %167, %168 : vector<32x128xf32>
    %c0_150 = arith.constant 0 : index
    %c0_151 = arith.constant 0 : index
    %170 = vector.load %arg34[%c0_150, %c0_151] : memref<128x128xf32, #tpu.memory_space<vmem>>, vector<128x128xf32>
    %cst_152 = arith.constant dense<0.000000e+00> : vector<32x128xf32>
    %171 = tpu.matmul %169, %170, %cst_152 {dimension_numbers = #tpu.dot_dimension_numbers<[1], [0], [0], [1], [0, 0, 1, 1], [], []>} : vector<32x128xf32>, vector<128x128xf32>, vector<32x128xf32> -> vector<32x128xf32>
    %c0_153 = arith.constant 0 : index
    %c0_154 = arith.constant 0 : index
    %172 = vector.load %arg35[%c0_153, %c0_154] : memref<1x128xf32, #tpu.memory_space<vmem>>, vector<1x128xf32>
    %173 = vector.broadcast %172 : vector<1x128xf32> to vector<32x128xf32>
    %174 = arith.addf %171, %173 : vector<32x128xf32>
    %175 = arith.truncf %174 : vector<32x128xf32> to vector<32x128xbf16>
    %cst_155 = arith.constant dense<0.000000e+00> : vector<16x128xf32>
    %176 = tpu.matmul %3, %175, %cst_155 {dimension_numbers = #tpu.dot_dimension_numbers<[0], [0], [1], [1], [0, 1, 1, 1], [], []>} : vector<32x16xbf16>, vector<32x128xbf16>, vector<16x128xf32> -> vector<16x128xf32>
    %c0_156 = arith.constant 0 : index
    %c0_157 = arith.constant 0 : index
    %177 = vector.load %arg38[%c0_156, %c0_157] : memref<1x128xf32, #tpu.memory_space<vmem>>, vector<1x128xf32>
    %c0_158 = arith.constant 0 : index
    %c0_159 = arith.constant 0 : index
    %178 = vector.load %arg36[%c0_158, %c0_159] : memref<128x128xf32, #tpu.memory_space<vmem>>, vector<128x128xf32>
    %cst_160 = arith.constant dense<0.000000e+00> : vector<16x128xf32>
    %179 = tpu.matmul %152, %178, %cst_160 {dimension_numbers = #tpu.dot_dimension_numbers<[1], [0], [0], [1], [0, 0, 1, 1], [], []>} : vector<16x128xf32>, vector<128x128xf32>, vector<16x128xf32> -> vector<16x128xf32>
    %180 = vector.broadcast %177 : vector<1x128xf32> to vector<16x128xf32>
    %181 = arith.addf %180, %179 : vector<16x128xf32>
    %c0_161 = arith.constant 0 : index
    %c0_162 = arith.constant 0 : index
    %182 = vector.load %arg37[%c0_161, %c0_162] : memref<128x128xf32, #tpu.memory_space<vmem>>, vector<128x128xf32>
    %cst_163 = arith.constant dense<0.000000e+00> : vector<16x128xf32>
    %183 = tpu.matmul %176, %182, %cst_163 {dimension_numbers = #tpu.dot_dimension_numbers<[1], [0], [0], [1], [0, 0, 1, 1], [], []>} : vector<16x128xf32>, vector<128x128xf32>, vector<16x128xf32> -> vector<16x128xf32>
    %184 = arith.addf %181, %183 : vector<16x128xf32>
    %cst_164 = arith.constant 0.000000e+00 : f32
    %185 = vector.broadcast %cst_164 : f32 to vector<16x128xf32>
    %186 = arith.maximumf %184, %185 : vector<16x128xf32>
    %c0_165 = arith.constant 0 : index
    %c0_166 = arith.constant 0 : index
    %187 = vector.load %arg39[%c0_165, %c0_166] : memref<128x128xf32, #tpu.memory_space<vmem>>, vector<128x128xf32>
    %cst_167 = arith.constant dense<0.000000e+00> : vector<16x128xf32>
    %188 = tpu.matmul %186, %187, %cst_167 {dimension_numbers = #tpu.dot_dimension_numbers<[1], [0], [0], [1], [0, 0, 1, 1], [], []>} : vector<16x128xf32>, vector<128x128xf32>, vector<16x128xf32> -> vector<16x128xf32>
    %c0_168 = arith.constant 0 : index
    %c0_169 = arith.constant 0 : index
    %189 = vector.load %arg40[%c0_168, %c0_169] : memref<1x128xf32, #tpu.memory_space<vmem>>, vector<1x128xf32>
    %190 = vector.broadcast %189 : vector<1x128xf32> to vector<16x128xf32>
    %191 = arith.addf %188, %190 : vector<16x128xf32>
    %c0_170 = arith.constant 0 : index
    %c0_171 = arith.constant 0 : index
    %192 = vector.load %arg41[%c0_170, %c0_171] : memref<16x128xf32, #tpu.memory_space<vmem>>, vector<16x128xf32>
    tpu.vector_store %arg41[%c0_170, %c0_171], %191 {strides = array<i32>} : memref<16x128xf32, #tpu.memory_space<vmem>>, vector<16x128xf32>,
    %c0_172 = arith.constant 0 : index
    %c0_173 = arith.constant 0 : index
    %193 = vector.load %arg42[%c0_172, %c0_173] : memref<32x128xf32, #tpu.memory_space<vmem>>, vector<32x128xf32>
    tpu.vector_store %arg42[%c0_172, %c0_173], %174 {strides = array<i32>} : memref<32x128xf32, #tpu.memory_space<vmem>>, vector<32x128xf32>,
    return
  }
}

</mosaic_0001>

<llo_original>
// kernel: encode_process_decode.1
$region0: #{encode_process_decode.1}
  #allocation0 [shape = 'u32[]', space=smem, size = 0x4, offset = 0x4, fixed_abs, tag = 'smem constant byte address 0x4 - core index']
  #allocation1 [shape = 'u32[72,128]{1,0:T(1,128)}', space=vmem, size = 0x9000, scoped, tag = 'internal scratch']
  %s0 = inlined_call_operand.smem [shape: u32[43], index: -1, kind: input, shape index: {}]
  %s1 = sld [smem:[%s0]]
  %s2 = scalar_lea.smem %s0, 1
  %s3 = sld [smem:[%s2]]
  %s4 = scalar_lea.smem %s0, 2
  %s5 = sld [smem:[%s4]]
  %s6 = scalar_lea.smem %s0, 3
  %s7 = sld [smem:[%s6]]
  %s8 = scalar_lea.smem %s0, 4
  %s9 = sld [smem:[%s8]]
  %s10 = scalar_lea.smem %s0, 5
  %s11 = sld [smem:[%s10]]
  %s12 = scalar_lea.smem %s0, 6
  %s13 = sld [smem:[%s12]]
  %s14 = scalar_lea.smem %s0, 7
  %s15 = sld [smem:[%s14]]
  %s16 = scalar_lea.smem %s0, 8
  %s17 = sld [smem:[%s16]]
  %s18 = scalar_lea.smem %s0, 9
  %s19 = sld [smem:[%s18]]
  %s20 = scalar_lea.smem %s0, 10
  %s21 = sld [smem:[%s20]]
  %s22 = scalar_lea.smem %s0, 11
  %s23 = sld [smem:[%s22]]
  %s24 = scalar_lea.smem %s0, 12
  %s25 = sld [smem:[%s24]]
  %s26 = scalar_lea.smem %s0, 13
  %s27 = sld [smem:[%s26]]
  %s28 = scalar_lea.smem %s0, 14
  %s29 = sld [smem:[%s28]]
  %s30 = scalar_lea.smem %s0, 15
  %s31 = sld [smem:[%s30]]
  %s32 = scalar_lea.smem %s0, 16
  %s33 = sld [smem:[%s32]]
  %s34 = scalar_lea.smem %s0, 17
  %s35 = sld [smem:[%s34]]
  %s36 = scalar_lea.smem %s0, 18
  %s37 = sld [smem:[%s36]]
  %s38 = scalar_lea.smem %s0, 19
  %s39 = sld [smem:[%s38]]
  %s40 = scalar_lea.smem %s0, 20
  %s41 = sld [smem:[%s40]]
  %s42 = scalar_lea.smem %s0, 21
  %s43 = sld [smem:[%s42]]
  %s44 = scalar_lea.smem %s0, 22
  %s45 = sld [smem:[%s44]]
  %s46 = scalar_lea.smem %s0, 23
  %s47 = sld [smem:[%s46]]
  %s48 = scalar_lea.smem %s0, 24
  %s49 = sld [smem:[%s48]]
  %s50 = scalar_lea.smem %s0, 25
  %s51 = sld [smem:[%s50]]
  %s52 = scalar_lea.smem %s0, 26
  %s53 = sld [smem:[%s52]]
  %s54 = scalar_lea.smem %s0, 27
  %s55 = sld [smem:[%s54]]
  %s56 = scalar_lea.smem %s0, 28
  %s57 = sld [smem:[%s56]]
  %s58 = scalar_lea.smem %s0, 29
  %s59 = sld [smem:[%s58]]
  %s60 = scalar_lea.smem %s0, 30
  %s61 = sld [smem:[%s60]]
  %s62 = scalar_lea.smem %s0, 31
  %s63 = sld [smem:[%s62]]
  %s64 = scalar_lea.smem %s0, 32
  %s65 = sld [smem:[%s64]]
  %s66 = scalar_lea.smem %s0, 33
  %s67 = sld [smem:[%s66]]
  %s68 = scalar_lea.smem %s0, 34
  %s69 = sld [smem:[%s68]]
  %s70 = scalar_lea.smem %s0, 35
  %s71 = sld [smem:[%s70]]
  %s72 = scalar_lea.smem %s0, 36
  %s73 = sld [smem:[%s72]]
  %s74 = scalar_lea.smem %s0, 37
  %s75 = sld [smem:[%s74]]
  %s76 = scalar_lea.smem %s0, 38
  %s77 = sld [smem:[%s76]]
  %s78 = scalar_lea.smem %s0, 39
  %s79 = sld [smem:[%s78]]
  %s80 = scalar_lea.smem %s0, 40
  %s81 = sld [smem:[%s80]]
  %s82 = scalar_lea.smem %s0, 41
  %s83 = sld [smem:[%s82]]
  %s84 = scalar_lea.smem %s0, 42
  %s85 = sld [smem:[%s84]]
  %86 = xla_tuple %s83, %s85
  %s87 = sld [smem:[#allocation0]]
  $region266: #{encode_process_decode.1} parent=0
    _
  %s89 = ssub.s32 1, %s87
  %s90 = scalar_select 0, %s89, %s87
  $region1: #{encode_process_decode.1} parent=0
    #allocation2 [shape = 'u8[65536]{0}', space=vmem, size = 0x10000, scoped, tag = 'input window, operand 8, single buffered']
    #allocation3 [shape = 's32[1]{0}', space=sflag, size = 0x4, scoped, tag = 'scoped memory for encode_process_decode.1']
    #allocation4 [shape = 'u8[65536]{0}', space=vmem, size = 0x10000, scoped, tag = 'input window, operand 11, single buffered']
    #allocation5 [shape = 's32[1]{0}', space=sflag, size = 0x4, scoped, tag = 'scoped memory for encode_process_decode.1']
    #allocation6 [shape = 'u8[65536]{0}', space=vmem, size = 0x10000, scoped, tag = 'input window, operand 13, single buffered']
    #allocation7 [shape = 'u8[65536]{0}', space=vmem, size = 0x10000, scoped, tag = 'input window, operand 15, single buffered']
    #allocation8 [shape = 's32[1]{0}', space=sflag, size = 0x4, scoped, tag = 'scoped memory for encode_process_decode.1']
    #allocation9 [shape = 'u8[65536]{0}', space=vmem, size = 0x10000, scoped, tag = 'input window, operand 16, single buffered']
    #allocation10 [shape = 'u8[65536]{0}', space=vmem, size = 0x10000, scoped, tag = 'input window, operand 17, single buffered']
    #allocation11 [shape = 's32[1]{0}', space=sflag, size = 0x4, scoped, tag = 'scoped memory for encode_process_decode.1']
    #allocation12 [shape = 'u8[65536]{0}', space=vmem, size = 0x10000, scoped, tag = 'input window, operand 18, single buffered']
    #allocation13 [shape = 'u8[65536]{0}', space=vmem, size = 0x10000, scoped, tag = 'input window, operand 19, single buffered']
    #allocation14 [shape = 's32[1]{0}', space=sflag, size = 0x4, scoped, tag = 'scoped memory for encode_process_decode.1']
    #allocation15 [shape = 'u8[65536]{0}', space=vmem, size = 0x10000, scoped, tag = 'input window, operand 20, single buffered']
    #allocation16 [shape = 'u8[65536]{0}', space=vmem, size = 0x10000, scoped, tag = 'input window, operand 22, single buffered']
    #allocation17 [shape = 's32[1]{0}', space=sflag, size = 0x4, scoped, tag = 'scoped memory for encode_process_decode.1']
    #allocation18 [shape = 'u8[65536]{0}', space=vmem, size = 0x10000, scoped, tag = 'input window, operand 24, single buffered']
    #allocation19 [shape = 'u8[65536]{0}', space=vmem, size = 0x10000, scoped, tag = 'input window, operand 25, single buffered']
    #allocation20 [shape = 's32[1]{0}', space=sflag, size = 0x4, scoped, tag = 'scoped memory for encode_process_decode.1']
    #allocation21 [shape = 'u8[65536]{0}', space=vmem, size = 0x10000, scoped, tag = 'input window, operand 26, single buffered']
    #allocation22 [shape = 'u8[65536]{0}', space=vmem, size = 0x10000, scoped, tag = 'input window, operand 28, single buffered']
    #allocation23 [shape = 's32[1]{0}', space=sflag, size = 0x4, scoped, tag = 'scoped memory for encode_process_decode.1']
    #allocation24 [shape = 'u8[65536]{0}', space=vmem, size = 0x10000, scoped, tag = 'input window, operand 30, single buffered']
    #allocation25 [shape = 'u8[65536]{0}', space=vmem, size = 0x10000, scoped, tag = 'input window, operand 31, single buffered']
    #allocation26 [shape = 's32[1]{0}', space=sflag, size = 0x4, scoped, tag = 'scoped memory for encode_process_decode.1']
    #allocation27 [shape = 'u8[65536]{0}', space=vmem, size = 0x10000, scoped, tag = 'input window, operand 32, single buffered']
    #allocation28 [shape = 'u8[65536]{0}', space=vmem, size = 0x10000, scoped, tag = 'input window, operand 34, single buffered']
    #allocation29 [shape = 's32[1]{0}', space=sflag, size = 0x4, scoped, tag = 'scoped memory for encode_process_decode.1']
    #allocation30 [shape = 'u8[65536]{0}', space=vmem, size = 0x10000, scoped, tag = 'input window, operand 36, single buffered']
    #allocation31 [shape = 'u8[65536]{0}', space=vmem, size = 0x10000, scoped, tag = 'input window, operand 37, single buffered']
    #allocation32 [shape = 's32[1]{0}', space=sflag, size = 0x4, scoped, tag = 'scoped memory for encode_process_decode.1']
    #allocation33 [shape = 'u8[65536]{0}', space=vmem, size = 0x10000, scoped, tag = 'input window, operand 39, single buffered']
    %91 = vsyncpa [#allocation3], 0
    %92 = vsyncpa [#allocation5], 0
    %93 = vsyncpa [#allocation8], 0
    %94 = vsyncpa [#allocation11], 0
    %95 = vsyncpa [#allocation14], 0
    %96 = vsyncpa [#allocation17], 0
    %97 = vsyncpa [#allocation20], 0
    %98 = vsyncpa [#allocation23], 0
    %99 = vsyncpa [#allocation26], 0
    %100 = vsyncpa [#allocation29], 0
    %101 = vsyncpa [#allocation32], 0
    // Predicated region
    $region2: #{encode_process_decode.1} parent=1 // pred_check
      _
    $region3: #{encode_process_decode.1} parent=1 // pred_check_branch
      %103 = sbr.rel (0) target = $region5
    $region4: #{encode_process_decode.1} parent=1 // pred_region
      _
    $region5: #{encode_process_decode.1} parent=1 // pred_fallthru
      _
    // Predicated region
    $region6: #{encode_process_decode.1} parent=1 // pred_check
      _
    $region7: #{encode_process_decode.1} parent=1 // pred_check_branch
      %105 = sbr.rel (0) target = $region9
    $region8: #{encode_process_decode.1} parent=1 // pred_region
      _
    $region9: #{encode_process_decode.1} parent=1 // pred_fallthru
      _
    // Predicated region
    $region10: #{encode_process_decode.1} parent=1 // pred_check
      _
    $region11: #{encode_process_decode.1} parent=1 // pred_check_branch
      %107 = sbr.rel (0) target = $region13
    $region12: #{encode_process_decode.1} parent=1 // pred_region
      _
    $region13: #{encode_process_decode.1} parent=1 // pred_fallthru
      _
    // Predicated region
    $region14: #{encode_process_decode.1} parent=1 // pred_check
      _
    $region15: #{encode_process_decode.1} parent=1 // pred_check_branch
      %109 = sbr.rel (0) target = $region17
    $region16: #{encode_process_decode.1} parent=1 // pred_region
      _
    $region17: #{encode_process_decode.1} parent=1 // pred_fallthru
      _
    // Predicated region
    $region18: #{encode_process_decode.1} parent=1 // pred_check
      _
    $region19: #{encode_process_decode.1} parent=1 // pred_check_branch
      %111 = sbr.rel (0) target = $region21
    $region20: #{encode_process_decode.1} parent=1 // pred_region
      _
    $region21: #{encode_process_decode.1} parent=1 // pred_fallthru
      _
    // Predicated region
    $region22: #{encode_process_decode.1} parent=1 // pred_check
      _
    $region23: #{encode_process_decode.1} parent=1 // pred_check_branch
      %113 = sbr.rel (0) target = $region25
    $region24: #{encode_process_decode.1} parent=1 // pred_region
      _
    $region25: #{encode_process_decode.1} parent=1 // pred_fallthru
      _
    // Predicated region
    $region26: #{encode_process_decode.1} parent=1 // pred_check
      _
    $region27: #{encode_process_decode.1} parent=1 // pred_check_branch
      %115 = sbr.rel (0) target = $region29
    $region28: #{encode_process_decode.1} parent=1 // pred_region
      _
    $region29: #{encode_process_decode.1} parent=1 // pred_fallthru
      _
    // Predicated region
    $region30: #{encode_process_decode.1} parent=1 // pred_check
      _
    $region31: #{encode_process_decode.1} parent=1 // pred_check_branch
      %117 = sbr.rel (0) target = $region33
    $region32: #{encode_process_decode.1} parent=1 // pred_region
      _
    $region33: #{encode_process_decode.1} parent=1 // pred_fallthru
      _
    // Predicated region
    $region34: #{encode_process_decode.1} parent=1 // pred_check
      _
    $region35: #{encode_process_decode.1} parent=1 // pred_check_branch
      %119 = sbr.rel (0) target = $region37
    $region36: #{encode_process_decode.1} parent=1 // pred_region
      %121 = vsyncadd [#allocation3], 0
      %s122 = sshll.u32 %s17, 4
      %s123 = int_to_ptr.hbm [resolvable:$true] %s122
      %s124 = sshll.u32 [#allocation2], 4
      %s125 = int_to_ptr.vmem [resolvable:$true] %s124
      %130 = dma.hbm_to_vmem [thread:$0]  %s123, 2048, %s125, [#allocation3], 128, 128, 8
    $region37: #{encode_process_decode.1} parent=1 // pred_fallthru
      _
    // Predicated region
    $region38: #{encode_process_decode.1} parent=1 // pred_check
      _
    $region39: #{encode_process_decode.1} parent=1 // pred_check_branch
      %132 = sbr.rel (0) target = $region41
    $region40: #{encode_process_decode.1} parent=1 // pred_region
      _
    $region41: #{encode_process_decode.1} parent=1 // pred_fallthru
      _
    // Predicated region
    $region42: #{encode_process_decode.1} parent=1 // pred_check
      _
    $region43: #{encode_process_decode.1} parent=1 // pred_check_branch
      %134 = sbr.rel (0) target = $region45
    $region44: #{encode_process_decode.1} parent=1 // pred_region
      _
    $region45: #{encode_process_decode.1} parent=1 // pred_fallthru
      _
    // Predicated region
    $region46: #{encode_process_decode.1} parent=1 // pred_check
      _
    $region47: #{encode_process_decode.1} parent=1 // pred_check_branch
      %136 = sbr.rel (0) target = $region49
    $region48: #{encode_process_decode.1} parent=1 // pred_region
      %138 = vsyncadd [#allocation5], 0
      %s139 = sshll.u32 %s23, 4
      %s140 = int_to_ptr.hbm [resolvable:$true] %s139
      %s141 = sshll.u32 [#allocation4], 4
      %s142 = int_to_ptr.vmem [resolvable:$true] %s141
      %147 = dma.hbm_to_vmem [thread:$0]  %s140, 2048, %s142, [#allocation5], 128, 128, 8
    $region49: #{encode_process_decode.1} parent=1 // pred_fallthru
      _
    // Predicated region
    $region50: #{encode_process_decode.1} parent=1 // pred_check
      _
    $region51: #{encode_process_decode.1} parent=1 // pred_check_branch
      %149 = sbr.rel (0) target = $region53
    $region52: #{encode_process_decode.1} parent=1 // pred_region
      _
    $region53: #{encode_process_decode.1} parent=1 // pred_fallthru
      _
    // Predicated region
    $region54: #{encode_process_decode.1} parent=1 // pred_check
      _
    $region55: #{encode_process_decode.1} parent=1 // pred_check_branch
      %151 = sbr.rel (0) target = $region57
    $region56: #{encode_process_decode.1} parent=1 // pred_region
      %153 = vsyncadd [#allocation5], 0
      %s154 = sshll.u32 %s27, 4
      %s155 = int_to_ptr.hbm [resolvable:$true] %s154
      %s156 = sshll.u32 [#allocation6], 4
      %s157 = int_to_ptr.vmem [resolvable:$true] %s156
      %162 = dma.hbm_to_vmem [thread:$0]  %s155, 2048, %s157, [#allocation5], 128, 128, 8
    $region57: #{encode_process_decode.1} parent=1 // pred_fallthru
      _
    // Predicated region
    $region58: #{encode_process_decode.1} parent=1 // pred_check
      _
    $region59: #{encode_process_decode.1} parent=1 // pred_check_branch
      %164 = sbr.rel (0) target = $region61
    $region60: #{encode_process_decode.1} parent=1 // pred_region
      _
    $region61: #{encode_process_decode.1} parent=1 // pred_fallthru
      _
    // Predicated region
    $region62: #{encode_process_decode.1} parent=1 // pred_check
      _
    $region63: #{encode_process_decode.1} parent=1 // pred_check_branch
      %166 = sbr.rel (0) target = $region65
    $region64: #{encode_process_decode.1} parent=1 // pred_region
      %168 = vsyncadd [#allocation8], 0
      %s169 = sshll.u32 %s31, 4
      %s170 = int_to_ptr.hbm [resolvable:$true] %s169
      %s171 = sshll.u32 [#allocation7], 4
      %s172 = int_to_ptr.vmem [resolvable:$true] %s171
      %177 = dma.hbm_to_vmem [thread:$0]  %s170, 2048, %s172, [#allocation8], 128, 128, 8
    $region65: #{encode_process_decode.1} parent=1 // pred_fallthru
      _
    // Predicated region
    $region66: #{encode_process_decode.1} parent=1 // pred_check
      _
    $region67: #{encode_process_decode.1} parent=1 // pred_check_branch
      %179 = sbr.rel (0) target = $region69
    $region68: #{encode_process_decode.1} parent=1 // pred_region
      %181 = vsyncadd [#allocation8], 0
      %s182 = sshll.u32 %s33, 4
      %s183 = int_to_ptr.hbm [resolvable:$true] %s182
      %s184 = sshll.u32 [#allocation9], 4
      %s185 = int_to_ptr.vmem [resolvable:$true] %s184
      %190 = dma.hbm_to_vmem [thread:$0]  %s183, 2048, %s185, [#allocation8], 128, 128, 8
    $region69: #{encode_process_decode.1} parent=1 // pred_fallthru
      _
    // Predicated region
    $region70: #{encode_process_decode.1} parent=1 // pred_check
      _
    $region71: #{encode_process_decode.1} parent=1 // pred_check_branch
      %192 = sbr.rel (0) target = $region73
    $region72: #{encode_process_decode.1} parent=1 // pred_region
      %194 = vsyncadd [#allocation11], 0
      %s195 = sshll.u32 %s35, 4
      %s196 = int_to_ptr.hbm [resolvable:$true] %s195
      %s197 = sshll.u32 [#allocation10], 4
      %s198 = int_to_ptr.vmem [resolvable:$true] %s197
      %203 = dma.hbm_to_vmem [thread:$0]  %s196, 2048, %s198, [#allocation11], 128, 128, 8
    $region73: #{encode_process_decode.1} parent=1 // pred_fallthru
      _
    // Predicated region
    $region74: #{encode_process_decode.1} parent=1 // pred_check
      _
    $region75: #{encode_process_decode.1} parent=1 // pred_check_branch
      %205 = sbr.rel (0) target = $region77
    $region76: #{encode_process_decode.1} parent=1 // pred_region
      %207 = vsyncadd [#allocation11], 0
      %s208 = sshll.u32 %s37, 4
      %s209 = int_to_ptr.hbm [resolvable:$true] %s208
      %s210 = sshll.u32 [#allocation12], 4
      %s211 = int_to_ptr.vmem [resolvable:$true] %s210
      %216 = dma.hbm_to_vmem [thread:$0]  %s209, 2048, %s211, [#allocation11], 128, 128, 8
    $region77: #{encode_process_decode.1} parent=1 // pred_fallthru
      _
    // Predicated region
    $region78: #{encode_process_decode.1} parent=1 // pred_check
      _
    $region79: #{encode_process_decode.1} parent=1 // pred_check_branch
      %218 = sbr.rel (0) target = $region81
    $region80: #{encode_process_decode.1} parent=1 // pred_region
      %220 = vsyncadd [#allocation14], 0
      %s221 = sshll.u32 %s39, 4
      %s222 = int_to_ptr.hbm [resolvable:$true] %s221
      %s223 = sshll.u32 [#allocation13], 4
      %s224 = int_to_ptr.vmem [resolvable:$true] %s223
      %229 = dma.hbm_to_vmem [thread:$0]  %s222, 2048, %s224, [#allocation14], 128, 128, 8
    $region81: #{encode_process_decode.1} parent=1 // pred_fallthru
      _
    // Predicated region
    $region82: #{encode_process_decode.1} parent=1 // pred_check
      _
    $region83: #{encode_process_decode.1} parent=1 // pred_check_branch
      %231 = sbr.rel (0) target = $region85
    $region84: #{encode_process_decode.1} parent=1 // pred_region
      %233 = vsyncadd [#allocation14], 0
      %s234 = sshll.u32 %s41, 4
      %s235 = int_to_ptr.hbm [resolvable:$true] %s234
      %s236 = sshll.u32 [#allocation15], 4
      %s237 = int_to_ptr.vmem [resolvable:$true] %s236
      %242 = dma.hbm_to_vmem [thread:$0]  %s235, 2048, %s237, [#allocation14], 128, 128, 8
    $region85: #{encode_process_decode.1} parent=1 // pred_fallthru
      _
    // Predicated region
    $region86: #{encode_process_decode.1} parent=1 // pred_check
      _
    $region87: #{encode_process_decode.1} parent=1 // pred_check_branch
      %244 = sbr.rel (0) target = $region89
    $region88: #{encode_process_decode.1} parent=1 // pred_region
      _
    $region89: #{encode_process_decode.1} parent=1 // pred_fallthru
      _
    // Predicated region
    $region90: #{encode_process_decode.1} parent=1 // pred_check
      _
    $region91: #{encode_process_decode.1} parent=1 // pred_check_branch
      %246 = sbr.rel (0) target = $region93
    $region92: #{encode_process_decode.1} parent=1 // pred_region
      %248 = vsyncadd [#allocation17], 0
      %s249 = sshll.u32 %s45, 4
      %s250 = int_to_ptr.hbm [resolvable:$true] %s249
      %s251 = sshll.u32 [#allocation16], 4
      %s252 = int_to_ptr.vmem [resolvable:$true] %s251
      %257 = dma.hbm_to_vmem [thread:$0]  %s250, 2048, %s252, [#allocation17], 128, 128, 8
    $region93: #{encode_process_decode.1} parent=1 // pred_fallthru
      _
    // Predicated region
    $region94: #{encode_process_decode.1} parent=1 // pred_check
      _
    $region95: #{encode_process_decode.1} parent=1 // pred_check_branch
      %259 = sbr.rel (0) target = $region97
    $region96: #{encode_process_decode.1} parent=1 // pred_region
      _
    $region97: #{encode_process_decode.1} parent=1 // pred_fallthru
      _
    // Predicated region
    $region98: #{encode_process_decode.1} parent=1 // pred_check
      _
    $region99: #{encode_process_decode.1} parent=1 // pred_check_branch
      %261 = sbr.rel (0) target = $region101
    $region100: #{encode_process_decode.1} parent=1 // pred_region
      %263 = vsyncadd [#allocation17], 0
      %s264 = sshll.u32 %s49, 4
      %s265 = int_to_ptr.hbm [resolvable:$true] %s264
      %s266 = sshll.u32 [#allocation18], 4
      %s267 = int_to_ptr.vmem [resolvable:$true] %s266
      %272 = dma.hbm_to_vmem [thread:$0]  %s265, 2048, %s267, [#allocation17], 128, 128, 8
    $region101: #{encode_process_decode.1} parent=1 // pred_fallthru
      _
    // Predicated region
    $region102: #{encode_process_decode.1} parent=1 // pred_check
      _
    $region103: #{encode_process_decode.1} parent=1 // pred_check_branch
      %274 = sbr.rel (0) target = $region105
    $region104: #{encode_process_decode.1} parent=1 // pred_region
      %276 = vsyncadd [#allocation20], 0
      %s277 = sshll.u32 %s51, 4
      %s278 = int_to_ptr.hbm [resolvable:$true] %s277
      %s279 = sshll.u32 [#allocation19], 4
      %s280 = int_to_ptr.vmem [resolvable:$true] %s279
      %285 = dma.hbm_to_vmem [thread:$0]  %s278, 2048, %s280, [#allocation20], 128, 128, 8
    $region105: #{encode_process_decode.1} parent=1 // pred_fallthru
      _
    // Predicated region
    $region106: #{encode_process_decode.1} parent=1 // pred_check
      _
    $region107: #{encode_process_decode.1} parent=1 // pred_check_branch
      %287 = sbr.rel (0) target = $region109
    $region108: #{encode_process_decode.1} parent=1 // pred_region
      %289 = vsyncadd [#allocation20], 0
      %s290 = sshll.u32 %s53, 4
      %s291 = int_to_ptr.hbm [resolvable:$true] %s290
      %s292 = sshll.u32 [#allocation21], 4
      %s293 = int_to_ptr.vmem [resolvable:$true] %s292
      %298 = dma.hbm_to_vmem [thread:$0]  %s291, 2048, %s293, [#allocation20], 128, 128, 8
    $region109: #{encode_process_decode.1} parent=1 // pred_fallthru
      _
    // Predicated region
    $region110: #{encode_process_decode.1} parent=1 // pred_check
      _
    $region111: #{encode_process_decode.1} parent=1 // pred_check_branch
      %300 = sbr.rel (0) target = $region113
    $region112: #{encode_process_decode.1} parent=1 // pred_region
      _
    $region113: #{encode_process_decode.1} parent=1 // pred_fallthru
      _
    // Predicated region
    $region114: #{encode_process_decode.1} parent=1 // pred_check
      _
    $region115: #{encode_process_decode.1} parent=1 // pred_check_branch
      %302 = sbr.rel (0) target = $region117
    $region116: #{encode_process_decode.1} parent=1 // pred_region
      %304 = vsyncadd [#allocation23], 0
      %s305 = sshll.u32 %s57, 4
      %s306 = int_to_ptr.hbm [resolvable:$true] %s305
      %s307 = sshll.u32 [#allocation22], 4
      %s308 = int_to_ptr.vmem [resolvable:$true] %s307
      %313 = dma.hbm_to_vmem [thread:$0]  %s306, 2048, %s308, [#allocation23], 128, 128, 8
    $region117: #{encode_process_decode.1} parent=1 // pred_fallthru
      _
    // Predicated region
    $region118: #{encode_process_decode.1} parent=1 // pred_check
      _
    $region119: #{encode_process_decode.1} parent=1 // pred_check_branch
      %315 = sbr.rel (0) target = $region121
    $region120: #{encode_process_decode.1} parent=1 // pred_region
      _
    $region121: #{encode_process_decode.1} parent=1 // pred_fallthru
      _
    // Predicated region
    $region122: #{encode_process_decode.1} parent=1 // pred_check
      _
    $region123: #{encode_process_decode.1} parent=1 // pred_check_branch
      %317 = sbr.rel (0) target = $region125
    $region124: #{encode_process_decode.1} parent=1 // pred_region
      %319 = vsyncadd [#allocation23], 0
      %s320 = sshll.u32 %s61, 4
      %s321 = int_to_ptr.hbm [resolvable:$true] %s320
      %s322 = sshll.u32 [#allocation24], 4
      %s323 = int_to_ptr.vmem [resolvable:$true] %s322
      %328 = dma.hbm_to_vmem [thread:$0]  %s321, 2048, %s323, [#allocation23], 128, 128, 8
    $region125: #{encode_process_decode.1} parent=1 // pred_fallthru
      _
    // Predicated region
    $region126: #{encode_process_decode.1} parent=1 // pred_check
      _
    $region127: #{encode_process_decode.1} parent=1 // pred_check_branch
      %330 = sbr.rel (0) target = $region129
    $region128: #{encode_process_decode.1} parent=1 // pred_region
      %332 = vsyncadd [#allocation26], 0
      %s333 = sshll.u32 %s63, 4
      %s334 = int_to_ptr.hbm [resolvable:$true] %s333
      %s335 = sshll.u32 [#allocation25], 4
      %s336 = int_to_ptr.vmem [resolvable:$true] %s335
      %341 = dma.hbm_to_vmem [thread:$0]  %s334, 2048, %s336, [#allocation26], 128, 128, 8
    $region129: #{encode_process_decode.1} parent=1 // pred_fallthru
      _
    // Predicated region
    $region130: #{encode_process_decode.1} parent=1 // pred_check
      _
    $region131: #{encode_process_decode.1} parent=1 // pred_check_branch
      %343 = sbr.rel (0) target = $region133
    $region132: #{encode_process_decode.1} parent=1 // pred_region
      %345 = vsyncadd [#allocation26], 0
      %s346 = sshll.u32 %s65, 4
      %s347 = int_to_ptr.hbm [resolvable:$true] %s346
      %s348 = sshll.u32 [#allocation27], 4
      %s349 = int_to_ptr.vmem [resolvable:$true] %s348
      %354 = dma.hbm_to_vmem [thread:$0]  %s347, 2048, %s349, [#allocation26], 128, 128, 8
    $region133: #{encode_process_decode.1} parent=1 // pred_fallthru
      _
    // Predicated region
    $region134: #{encode_process_decode.1} parent=1 // pred_check
      _
    $region135: #{encode_process_decode.1} parent=1 // pred_check_branch
      %356 = sbr.rel (0) target = $region137
    $region136: #{encode_process_decode.1} parent=1 // pred_region
      _
    $region137: #{encode_process_decode.1} parent=1 // pred_fallthru
      _
    // Predicated region
    $region138: #{encode_process_decode.1} parent=1 // pred_check
      _
    $region139: #{encode_process_decode.1} parent=1 // pred_check_branch
      %358 = sbr.rel (0) target = $region141
    $region140: #{encode_process_decode.1} parent=1 // pred_region
      %360 = vsyncadd [#allocation29], 0
      %s361 = sshll.u32 %s69, 4
      %s362 = int_to_ptr.hbm [resolvable:$true] %s361
      %s363 = sshll.u32 [#allocation28], 4
      %s364 = int_to_ptr.vmem [resolvable:$true] %s363
      %369 = dma.hbm_to_vmem [thread:$0]  %s362, 2048, %s364, [#allocation29], 128, 128, 8
    $region141: #{encode_process_decode.1} parent=1 // pred_fallthru
      _
    // Predicated region
    $region142: #{encode_process_decode.1} parent=1 // pred_check
      _
    $region143: #{encode_process_decode.1} parent=1 // pred_check_branch
      %371 = sbr.rel (0) target = $region145
    $region144: #{encode_process_decode.1} parent=1 // pred_region
      _
    $region145: #{encode_process_decode.1} parent=1 // pred_fallthru
      _
    // Predicated region
    $region146: #{encode_process_decode.1} parent=1 // pred_check
      _
    $region147: #{encode_process_decode.1} parent=1 // pred_check_branch
      %373 = sbr.rel (0) target = $region149
    $region148: #{encode_process_decode.1} parent=1 // pred_region
      %375 = vsyncadd [#allocation29], 0
      %s376 = sshll.u32 %s73, 4
      %s377 = int_to_ptr.hbm [resolvable:$true] %s376
      %s378 = sshll.u32 [#allocation30], 4
      %s379 = int_to_ptr.vmem [resolvable:$true] %s378
      %384 = dma.hbm_to_vmem [thread:$0]  %s377, 2048, %s379, [#allocation29], 128, 128, 8
    $region149: #{encode_process_decode.1} parent=1 // pred_fallthru
      _
    // Predicated region
    $region150: #{encode_process_decode.1} parent=1 // pred_check
      _
    $region151: #{encode_process_decode.1} parent=1 // pred_check_branch
      %386 = sbr.rel (0) target = $region153
    $region152: #{encode_process_decode.1} parent=1 // pred_region
      %388 = vsyncadd [#allocation32], 0
      %s389 = sshll.u32 %s75, 4
      %s390 = int_to_ptr.hbm [resolvable:$true] %s389
      %s391 = sshll.u32 [#allocation31], 4
      %s392 = int_to_ptr.vmem [resolvable:$true] %s391
      %397 = dma.hbm_to_vmem [thread:$0]  %s390, 2048, %s392, [#allocation32], 128, 128, 8
    $region153: #{encode_process_decode.1} parent=1 // pred_fallthru
      _
    // Predicated region
    $region154: #{encode_process_decode.1} parent=1 // pred_check
      _
    $region155: #{encode_process_decode.1} parent=1 // pred_check_branch
      %399 = sbr.rel (0) target = $region157
    $region156: #{encode_process_decode.1} parent=1 // pred_region
      _
    $region157: #{encode_process_decode.1} parent=1 // pred_fallthru
      _
    // Predicated region
    $region158: #{encode_process_decode.1} parent=1 // pred_check
      _
    $region159: #{encode_process_decode.1} parent=1 // pred_check_branch
      %401 = sbr.rel (0) target = $region161
    $region160: #{encode_process_decode.1} parent=1 // pred_region
      %403 = vsyncadd [#allocation32], 0
      %s404 = sshll.u32 %s79, 4
      %s405 = int_to_ptr.hbm [resolvable:$true] %s404
      %s406 = sshll.u32 [#allocation33], 4
      %s407 = int_to_ptr.vmem [resolvable:$true] %s406
      %412 = dma.hbm_to_vmem [thread:$0]  %s405, 2048, %s407, [#allocation32], 128, 128, 8
    $region161: #{encode_process_decode.1} parent=1 // pred_fallthru
      _
    // Predicated region
    $region162: #{encode_process_decode.1} parent=1 // pred_check
      _
    $region163: #{encode_process_decode.1} parent=1 // pred_check_branch
      %414 = sbr.rel (0) target = $region165
    $region164: #{encode_process_decode.1} parent=1 // pred_region
      _
    $region165: #{encode_process_decode.1} parent=1 // pred_fallthru
      _
    // Predicated region
    $region166: #{encode_process_decode.1} parent=1 // pred_check
      _
    $region167: #{encode_process_decode.1} parent=1 // pred_check_branch
      %416 = sbr.rel (0) target = $region169
    $region168: #{encode_process_decode.1} parent=1 // pred_region
      %418 = dma.done [#allocation3], 2048
    $region169: #{encode_process_decode.1} parent=1 // pred_fallthru
      _
    // Predicated region
    $region170: #{encode_process_decode.1} parent=1 // pred_check
      _
    $region171: #{encode_process_decode.1} parent=1 // pred_check_branch
      %420 = sbr.rel (0) target = $region173
    $region172: #{encode_process_decode.1} parent=1 // pred_region
      %422 = dma.done [#allocation5], 2048
    $region173: #{encode_process_decode.1} parent=1 // pred_fallthru
      _
    // Predicated region
    $region174: #{encode_process_decode.1} parent=1 // pred_check
      _
    $region175: #{encode_process_decode.1} parent=1 // pred_check_branch
      %424 = sbr.rel (0) target = $region177
    $region176: #{encode_process_decode.1} parent=1 // pred_region
      %426 = dma.done [#allocation5], 2048
    $region177: #{encode_process_decode.1} parent=1 // pred_fallthru
      _
    // Predicated region
    $region178: #{encode_process_decode.1} parent=1 // pred_check
      _
    $region179: #{encode_process_decode.1} parent=1 // pred_check_branch
      %428 = sbr.rel (0) target = $region181
    $region180: #{encode_process_decode.1} parent=1 // pred_region
      %430 = dma.done [#allocation8], 2048
    $region181: #{encode_process_decode.1} parent=1 // pred_fallthru
      _
    // Predicated region
    $region182: #{encode_process_decode.1} parent=1 // pred_check
      _
    $region183: #{encode_process_decode.1} parent=1 // pred_check_branch
      %432 = sbr.rel (0) target = $region185
    $region184: #{encode_process_decode.1} parent=1 // pred_region
      %434 = dma.done [#allocation8], 2048
    $region185: #{encode_process_decode.1} parent=1 // pred_fallthru
      _
    // Predicated region
    $region186: #{encode_process_decode.1} parent=1 // pred_check
      _
    $region187: #{encode_process_decode.1} parent=1 // pred_check_branch
      %436 = sbr.rel (0) target = $region189
    $region188: #{encode_process_decode.1} parent=1 // pred_region
      %438 = dma.done [#allocation11], 2048
    $region189: #{encode_process_decode.1} parent=1 // pred_fallthru
      _
    // Predicated region
    $region190: #{encode_process_decode.1} parent=1 // pred_check
      _
    $region191: #{encode_process_decode.1} parent=1 // pred_check_branch
      %440 = sbr.rel (0) target = $region193
    $region192: #{encode_process_decode.1} parent=1 // pred_region
      %442 = dma.done [#allocation11], 2048
    $region193: #{encode_process_decode.1} parent=1 // pred_fallthru
      _
    // Predicated region
    $region194: #{encode_process_decode.1} parent=1 // pred_check
      _
    $region195: #{encode_process_decode.1} parent=1 // pred_check_branch
      %444 = sbr.rel (0) target = $region197
    $region196: #{encode_process_decode.1} parent=1 // pred_region
      %446 = dma.done [#allocation14], 2048
    $region197: #{encode_process_decode.1} parent=1 // pred_fallthru
      _
    // Predicated region
    $region198: #{encode_process_decode.1} parent=1 // pred_check
      _
    $region199: #{encode_process_decode.1} parent=1 // pred_check_branch
      %448 = sbr.rel (0) target = $region201
    $region200: #{encode_process_decode.1} parent=1 // pred_region
      %450 = dma.done [#allocation14], 2048
    $region201: #{encode_process_decode.1} parent=1 // pred_fallthru
      _
    // Predicated region
    $region202: #{encode_process_decode.1} parent=1 // pred_check
      _
    $region203: #{encode_process_decode.1} parent=1 // pred_check_branch
      %452 = sbr.rel (0) target = $region205
    $region204: #{encode_process_decode.1} parent=1 // pred_region
      %454 = dma.done [#allocation17], 2048
    $region205: #{encode_process_decode.1} parent=1 // pred_fallthru
      _
    // Predicated region
    $region206: #{encode_process_decode.1} parent=1 // pred_check
      _
    $region207: #{encode_process_decode.1} parent=1 // pred_check_branch
      %456 = sbr.rel (0) target = $region209
    $region208: #{encode_process_decode.1} parent=1 // pred_region
      %458 = dma.done [#allocation17], 2048
    $region209: #{encode_process_decode.1} parent=1 // pred_fallthru
      _
    // Predicated region
    $region210: #{encode_process_decode.1} parent=1 // pred_check
      _
    $region211: #{encode_process_decode.1} parent=1 // pred_check_branch
      %460 = sbr.rel (0) target = $region213
    $region212: #{encode_process_decode.1} parent=1 // pred_region
      %462 = dma.done [#allocation20], 2048
    $region213: #{encode_process_decode.1} parent=1 // pred_fallthru
      _
    // Predicated region
    $region214: #{encode_process_decode.1} parent=1 // pred_check
      _
    $region215: #{encode_process_decode.1} parent=1 // pred_check_branch
      %464 = sbr.rel (0) target = $region217
    $region216: #{encode_process_decode.1} parent=1 // pred_region
      %466 = dma.done [#allocation20], 2048
    $region217: #{encode_process_decode.1} parent=1 // pred_fallthru
      _
    // Predicated region
    $region218: #{encode_process_decode.1} parent=1 // pred_check
      _
    $region219: #{encode_process_decode.1} parent=1 // pred_check_branch
      %468 = sbr.rel (0) target = $region221
    $region220: #{encode_process_decode.1} parent=1 // pred_region
      %470 = dma.done [#allocation23], 2048
    $region221: #{encode_process_decode.1} parent=1 // pred_fallthru
      _
    // Predicated region
    $region222: #{encode_process_decode.1} parent=1 // pred_check
      _
    $region223: #{encode_process_decode.1} parent=1 // pred_check_branch
      %472 = sbr.rel (0) target = $region225
    $region224: #{encode_process_decode.1} parent=1 // pred_region
      %474 = dma.done [#allocation23], 2048
    $region225: #{encode_process_decode.1} parent=1 // pred_fallthru
      _
    // Predicated region
    $region226: #{encode_process_decode.1} parent=1 // pred_check
      _
    $region227: #{encode_process_decode.1} parent=1 // pred_check_branch
      %476 = sbr.rel (0) target = $region229
    $region228: #{encode_process_decode.1} parent=1 // pred_region
      %478 = dma.done [#allocation26], 2048
    $region229: #{encode_process_decode.1} parent=1 // pred_fallthru
      _
    // Predicated region
    $region230: #{encode_process_decode.1} parent=1 // pred_check
      _
    $region231: #{encode_process_decode.1} parent=1 // pred_check_branch
      %480 = sbr.rel (0) target = $region233
    $region232: #{encode_process_decode.1} parent=1 // pred_region
      %482 = dma.done [#allocation26], 2048
    $region233: #{encode_process_decode.1} parent=1 // pred_fallthru
      _
    // Predicated region
    $region234: #{encode_process_decode.1} parent=1 // pred_check
      _
    $region235: #{encode_process_decode.1} parent=1 // pred_check_branch
      %484 = sbr.rel (0) target = $region237
    $region236: #{encode_process_decode.1} parent=1 // pred_region
      %486 = dma.done [#allocation29], 2048
    $region237: #{encode_process_decode.1} parent=1 // pred_fallthru
      _
    // Predicated region
    $region238: #{encode_process_decode.1} parent=1 // pred_check
      _
    $region239: #{encode_process_decode.1} parent=1 // pred_check_branch
      %488 = sbr.rel (0) target = $region241
    $region240: #{encode_process_decode.1} parent=1 // pred_region
      %490 = dma.done [#allocation29], 2048
    $region241: #{encode_process_decode.1} parent=1 // pred_fallthru
      _
    // Predicated region
    $region242: #{encode_process_decode.1} parent=1 // pred_check
      _
    $region243: #{encode_process_decode.1} parent=1 // pred_check_branch
      %492 = sbr.rel (0) target = $region245
    $region244: #{encode_process_decode.1} parent=1 // pred_region
      %494 = dma.done [#allocation32], 2048
    $region245: #{encode_process_decode.1} parent=1 // pred_fallthru
      _
    // Predicated region
    $region246: #{encode_process_decode.1} parent=1 // pred_check
      _
    $region247: #{encode_process_decode.1} parent=1 // pred_check_branch
      %496 = sbr.rel (0) target = $region249
    $region248: #{encode_process_decode.1} parent=1 // pred_region
      %498 = dma.done [#allocation32], 2048
    $region249: #{encode_process_decode.1} parent=1 // pred_fallthru
      _
    %v500 = vld [vmem:[%s1] sm:$0xff]
    %v501 = vld [vmem:[%s1 + $0x8] sm:$0xff]
    %v502 = vld [vmem:[%s3] sm:$0xff]
    %v503 = vld [vmem:[%s3 + $0x8] sm:$0xff]
    %v504 = vld [vmem:[%s3 + $0x10] sm:$0xff]
    %v505 = vld [vmem:[%s3 + $0x18] sm:$0xff]
    %v506 = vld [vmem:[%s5] sm:$0xf]
    %v507 = vld [vmem:[%s5 + $0x4] sm:$0xf]
    %v508 = vld [vmem:[%s5 + $0x8] sm:$0xf]
    %v509 = vld [vmem:[%s5 + $0xc] sm:$0xf]
    %v510 = vld [vmem:[%s7] sm:$0xf]
    %v511 = vld [vmem:[%s7 + $0x4] sm:$0xf]
    %v512 = vld [vmem:[%s7 + $0x8] sm:$0xf]
    %v513 = vld [vmem:[%s7 + $0xc] sm:$0xf]
    %v514 = vld [vmem:[%s15] sm:$0x1]
    %v515 = vld [vmem:[%s9] sm:$0xff]
    %vm516 = vcmask 64512
    %v518 = vsel %vm516, %v502, 0
    %v521 = vsel %vm516, %v503, 0
    %v524 = vsel %vm516, %v504, 0
    %v527 = vsel %vm516, %v505, 0
    %529 = vmatpush.msra.mxu0 0.0
    %530 = vmatpush.msra.mxu0 0.0
    %531 = vmatpush.msra.mxu0 0.0
    %532 = vmatpush.msra.mxu0 0.0
    %533 = vmatpush.msra.mxu0 0.0
    %534 = vmatpush.msra.mxu0 0.0
    %535 = vmatpush.msra.mxu0 0.0
    %536 = vmatpush.msra.mxu0 0.0
    %537 = vmatpush.msra.mxu0 0.0
    %538 = vmatpush.msra.mxu0 0.0
    %539 = vmatpush.msra.mxu0 0.0
    %540 = vmatpush.msra.mxu0 0.0
    %541 = vmatpush.msra.mxu0 0.0
    %542 = vmatpush.msra.mxu0 0.0
    %543 = vmatpush.msra.mxu0 0.0
    %544 = vmatpush.msra.mxu0 %v515
    %545 = vmatmul.f32.gmra.mxu0 %v518
    %v546 = vpop.f32.mrf.mxu0
    %v547 = vadd.f32 0.0, %v546
    %548 = vmatmul.f32.gmra.mxu0 %v521
    %v549 = vpop.f32.mrf.mxu0
    %v550 = vadd.f32 0.0, %v549
    %551 = vmatmul.f32.gmra.mxu0 %v524
    %v552 = vpop.f32.mrf.mxu0
    %v553 = vadd.f32 0.0, %v552
    %554 = vmatmul.f32.gmra.mxu0 %v527
    %v555 = vpop.f32.mrf.mxu0
    %v556 = vadd.f32 0.0, %v555
    %557 = vdwg.mxu0
    %v559 = vperm.slane %v514, 0
    %v561 = vadd.f32 %v559, %v547
    %v562 = vadd.f32 %v559, %v550
    %v563 = vadd.f32 %v559, %v553
    %v564 = vadd.f32 %v559, %v556
    %v565 = vpack.c.bf16 %v501, %v500
    %v570 = vunpack.c.l.b16 %v506
    %v571 = vunpack.c.l.b16 %v507
    %v572 = vunpack.c.l.b16 %v508
    %v573 = vunpack.c.l.b16 %v509
    %v574 = vpack.c.b16 %v571, %v570
    %v575 = vpack.c.b16 %v573, %v572
    %vm576 = vcmask 130048
    %v578 = vsel %vm576, %v574, 0
    %v581 = vsel %vm576, %v575, 0
    %583 = vmatpush.bf16.msra.mxu0 0
    %584 = vmatpush.bf16.msra.mxu0 0
    %585 = vmatpush.bf16.msra.mxu0 0
    %586 = vmatpush.bf16.msra.mxu0 0
    %587 = vmatpush.bf16.msra.mxu0 0
    %588 = vmatpush.bf16.msra.mxu0 0
    %589 = vmatpush.bf16.msra.mxu0 0
    %590 = vmatpush.bf16.msra.mxu0 %v565
    %591 = vmatmul.bf16.gmra.mxu0 %v578
    %v592 = vpop.f32.mrf.mxu0
    %v593 = vadd.f32 0.0, %v592
    %v594 = vpop.f32.mrf.mxu0
    %v595 = vadd.f32 0.0, %v594
    %596 = vmatmul.bf16.gmra.mxu0 %v581
    %v597 = vpop.f32.mrf.mxu0
    %v598 = vadd.f32 0.0, %v597
    %v599 = vpop.f32.mrf.mxu0
    %v600 = vadd.f32 0.0, %v599
    %601 = vdwg.mxu0
    %v602 = vld [vmem:[%s11] sm:$0xff]
    %v604 = vsel %vm516, %v593, 0
    %v607 = vsel %vm516, %v595, 0
    %v610 = vsel %vm516, %v598, 0
    %v613 = vsel %vm516, %v600, 0
    %615 = vmatpush.msra.mxu0 0.0
    %616 = vmatpush.msra.mxu0 0.0
    %617 = vmatpush.msra.mxu0 0.0
    %618 = vmatpush.msra.mxu0 0.0
    %619 = vmatpush.msra.mxu0 0.0
    %620 = vmatpush.msra.mxu0 0.0
    %621 = vmatpush.msra.mxu0 0.0
    %622 = vmatpush.msra.mxu0 0.0
    %623 = vmatpush.msra.mxu0 0.0
    %624 = vmatpush.msra.mxu0 0.0
    %625 = vmatpush.msra.mxu0 0.0
    %626 = vmatpush.msra.mxu0 0.0
    %627 = vmatpush.msra.mxu0 0.0
    %628 = vmatpush.msra.mxu0 0.0
    %629 = vmatpush.msra.mxu0 0.0
    %630 = vmatpush.msra.mxu0 %v602
    %631 = vmatmul.f32.gmra.mxu0 %v604
    %v632 = vpop.f32.mrf.mxu0
    %v633 = vadd.f32 0.0, %v632
    %634 = vmatmul.f32.gmra.mxu0 %v607
    %v635 = vpop.f32.mrf.mxu0
    %v636 = vadd.f32 0.0, %v635
    %637 = vmatmul.f32.gmra.mxu0 %v610
    %v638 = vpop.f32.mrf.mxu0
    %v639 = vadd.f32 0.0, %v638
    %640 = vmatmul.f32.gmra.mxu0 %v613
    %v641 = vpop.f32.mrf.mxu0
    %v642 = vadd.f32 0.0, %v641
    %643 = vdwg.mxu0
    %v644 = vadd.f32 %v561, %v633
    %v645 = vadd.f32 %v562, %v636
    %v646 = vadd.f32 %v563, %v639
    %v647 = vadd.f32 %v564, %v642
    %v652 = vunpack.c.l.b16 %v510
    %v653 = vunpack.c.l.b16 %v511
    %v654 = vunpack.c.l.b16 %v512
    %v655 = vunpack.c.l.b16 %v513
    %v656 = vpack.c.b16 %v653, %v652
    %v657 = vpack.c.b16 %v655, %v654
    %v659 = vsel %vm576, %v656, 0
    %v662 = vsel %vm576, %v657, 0
    %664 = vmatpush.bf16.msra.mxu0 0
    %665 = vmatpush.bf16.msra.mxu0 0
    %666 = vmatpush.bf16.msra.mxu0 0
    %667 = vmatpush.bf16.msra.mxu0 0
    %668 = vmatpush.bf16.msra.mxu0 0
    %669 = vmatpush.bf16.msra.mxu0 0
    %670 = vmatpush.bf16.msra.mxu0 0
    %671 = vmatpush.bf16.msra.mxu0 %v565
    %672 = vmatmul.bf16.gmra.mxu0 %v659
    %v673 = vpop.f32.mrf.mxu0
    %v674 = vadd.f32 0.0, %v673
    %v675 = vpop.f32.mrf.mxu0
    %v676 = vadd.f32 0.0, %v675
    %677 = vmatmul.bf16.gmra.mxu0 %v662
    %v678 = vpop.f32.mrf.mxu0
    %v679 = vadd.f32 0.0, %v678
    %v680 = vpop.f32.mrf.mxu0
    %v681 = vadd.f32 0.0, %v680
    %682 = vdwg.mxu0
    %v683 = vld [vmem:[%s13] sm:$0xff]
    %v685 = vsel %vm516, %v674, 0
    %v688 = vsel %vm516, %v676, 0
    %v691 = vsel %vm516, %v679, 0
    %v694 = vsel %vm516, %v681, 0
    %696 = vmatpush.msra.mxu0 0.0
    %697 = vmatpush.msra.mxu0 0.0
    %698 = vmatpush.msra.mxu0 0.0
    %699 = vmatpush.msra.mxu0 0.0
    %700 = vmatpush.msra.mxu0 0.0
    %701 = vmatpush.msra.mxu0 0.0
    %702 = vmatpush.msra.mxu0 0.0
    %703 = vmatpush.msra.mxu0 0.0
    %704 = vmatpush.msra.mxu0 0.0
    %705 = vmatpush.msra.mxu0 0.0
    %706 = vmatpush.msra.mxu0 0.0
    %707 = vmatpush.msra.mxu0 0.0
    %708 = vmatpush.msra.mxu0 0.0
    %709 = vmatpush.msra.mxu0 0.0
    %710 = vmatpush.msra.mxu0 0.0
    %711 = vmatpush.msra.mxu0 %v683
    %712 = vmatmul.f32.gmra.mxu0 %v685
    %v713 = vpop.f32.mrf.mxu0
    %v714 = vadd.f32 0.0, %v713
    %715 = vmatmul.f32.gmra.mxu0 %v688
    %v716 = vpop.f32.mrf.mxu0
    %v717 = vadd.f32 0.0, %v716
    %718 = vmatmul.f32.gmra.mxu0 %v691
    %v719 = vpop.f32.mrf.mxu0
    %v720 = vadd.f32 0.0, %v719
    %721 = vmatmul.f32.gmra.mxu0 %v694
    %v722 = vpop.f32.mrf.mxu0
    %v723 = vadd.f32 0.0, %v722
    %724 = vdwg.mxu0
    %v725 = vadd.f32 %v644, %v714
    %v726 = vadd.f32 %v645, %v717
    %v727 = vadd.f32 %v646, %v720
    %v728 = vadd.f32 %v647, %v723
    %v729 = vmax.f32 %v725, 0.0
    %v730 = vmax.f32 %v726, 0.0
    %v731 = vmax.f32 %v727, 0.0
    %v732 = vmax.f32 %v728, 0.0
    %v733 = vld [vmem:[#allocation2] sm:$0xff]
    %v734 = vld [vmem:[#allocation2 + $0x8] sm:$0xff]
    %v735 = vld [vmem:[#allocation2 + $0x10] sm:$0xff]
    %v736 = vld [vmem:[#allocation2 + $0x18] sm:$0xff]
    %v737 = vld [vmem:[#allocation2 + $0x20] sm:$0xff]
    %v738 = vld [vmem:[#allocation2 + $0x28] sm:$0xff]
    %v739 = vld [vmem:[#allocation2 + $0x30] sm:$0xff]
    %v740 = vld [vmem:[#allocation2 + $0x38] sm:$0xff]
    %v741 = vld [vmem:[#allocation2 + $0x40] sm:$0xff]
    %v742 = vld [vmem:[#allocation2 + $0x48] sm:$0xff]
    %v743 = vld [vmem:[#allocation2 + $0x50] sm:$0xff]
    %v744 = vld [vmem:[#allocation2 + $0x58] sm:$0xff]
    %v745 = vld [vmem:[#allocation2 + $0x60] sm:$0xff]
    %v746 = vld [vmem:[#allocation2 + $0x68] sm:$0xff]
    %v747 = vld [vmem:[#allocation2 + $0x70] sm:$0xff]
    %v748 = vld [vmem:[#allocation2 + $0x78] sm:$0xff]
    %v749 = vld [vmem:[%s19] sm:$0x1]
    %v751 = vperm.slane %v749, 0
    %753 = vmatpush.msra.mxu0 %v748
    %754 = vmatpush.msra.mxu0 %v747
    %755 = vmatpush.msra.mxu0 %v746
    %756 = vmatpush.msra.mxu0 %v745
    %757 = vmatpush.msra.mxu0 %v744
    %758 = vmatpush.msra.mxu0 %v743
    %759 = vmatpush.msra.mxu0 %v742
    %760 = vmatpush.msra.mxu0 %v741
    %761 = vmatpush.msra.mxu0 %v740
    %762 = vmatpush.msra.mxu0 %v739
    %763 = vmatpush.msra.mxu0 %v738
    %764 = vmatpush.msra.mxu0 %v737
    %765 = vmatpush.msra.mxu0 %v736
    %766 = vmatpush.msra.mxu0 %v735
    %767 = vmatpush.msra.mxu0 %v734
    %768 = vmatpush.msra.mxu0 %v733
    %769 = vmatmul.f32.gmra.mxu0 %v729
    %v770 = vpop.f32.mrf.mxu0
    %v771 = vadd.f32 %v751, %v770
    %772 = vmatmul.f32.gmra.mxu0 %v730
    %v773 = vpop.f32.mrf.mxu0
    %v774 = vadd.f32 %v751, %v773
    %775 = vmatmul.f32.gmra.mxu0 %v731
    %v776 = vpop.f32.mrf.mxu0
    %v777 = vadd.f32 %v751, %v776
    %778 = vmatmul.f32.gmra.mxu0 %v732
    %v779 = vpop.f32.mrf.mxu0
    %v780 = vadd.f32 %v751, %v779
    %781 = vdwg.mxu0
    %v782 = vpack.c.bf16 %v774, %v771
    %v783 = vpack.c.bf16 %v780, %v777
    %786 = vxpose.xlu0.c.b16.start [1/8] %v656, 128
    %787 = vxpose.xlu0.c.b16.cont [2/8] %v657, 128
    %788 = vxpose.xlu0.c.b16.cont [3/8] 0, 128
    %789 = vxpose.xlu0.c.b16.cont [4/8] 0, 128
    %790 = vxpose.xlu0.c.b16.cont [5/8] 0, 128
    %791 = vxpose.xlu0.c.b16.cont [6/8] 0, 128
    %792 = vxpose.xlu0.c.b16.cont [7/8] 0, 128
    %793 = vxpose.xlu0.c.b16.end [8/8] 0, 128
    %v794 = vpop.trf.xlu0
    %v795 = vpop.trf.xlu0
    %v796 = vpop.trf.xlu0
    %v797 = vpop.trf.xlu0
    %v798 = vpop.trf.xlu0
    %v799 = vpop.trf.xlu0
    %v800 = vpop.trf.xlu0
    %v801 = vpop.trf.xlu0
    %vm802 = vcmask 261120
    %v804 = vsel %vm802, %v794, 0
    %806 = vmatpush.bf16.msra.mxu0 0
    %807 = vmatpush.bf16.msra.mxu0 0
    %808 = vmatpush.bf16.msra.mxu0 0
    %809 = vmatpush.bf16.msra.mxu0 0
    %810 = vmatpush.bf16.msra.mxu0 0
    %811 = vmatpush.bf16.msra.mxu0 0
    %812 = vmatpush.bf16.msra.mxu0 %v783
    %813 = vmatpush.bf16.msra.mxu0 %v782
    %814 = vmatmul.bf16.gmra.mxu0 %v804
    %v815 = vpop.f32.mrf.mxu0
    %v816 = vadd.f32 0.0, %v815
    %v817 = vpop.f32.mrf.mxu0
    %v818 = vadd.f32 0.0, %v817
    %819 = vdwg.mxu0
    %v820 = vld [vmem:[%s25] sm:$0x1]
    %v821 = vld [vmem:[%s21] sm:$0xff]
    %v823 = vsel %vm516, %v500, 0
    %v826 = vsel %vm516, %v501, 0
    %828 = vmatpush.msra.mxu0 0.0
    %829 = vmatpush.msra.mxu0 0.0
    %830 = vmatpush.msra.mxu0 0.0
    %831 = vmatpush.msra.mxu0 0.0
    %832 = vmatpush.msra.mxu0 0.0
    %833 = vmatpush.msra.mxu0 0.0
    %834 = vmatpush.msra.mxu0 0.0
    %835 = vmatpush.msra.mxu0 0.0
    %836 = vmatpush.msra.mxu0 0.0
    %837 = vmatpush.msra.mxu0 0.0
    %838 = vmatpush.msra.mxu0 0.0
    %839 = vmatpush.msra.mxu0 0.0
    %840 = vmatpush.msra.mxu0 0.0
    %841 = vmatpush.msra.mxu0 0.0
    %842 = vmatpush.msra.mxu0 0.0
    %843 = vmatpush.msra.mxu0 %v821
    %844 = vmatmul.f32.gmra.mxu0 %v823
    %v845 = vpop.f32.mrf.mxu0
    %v846 = vadd.f32 0.0, %v845
    %847 = vmatmul.f32.gmra.mxu0 %v826
    %v848 = vpop.f32.mrf.mxu0
    %v849 = vadd.f32 0.0, %v848
    %850 = vdwg.mxu0
    %v852 = vperm.slane %v820, 0
    %v854 = vadd.f32 %v852, %v846
    %v855 = vadd.f32 %v852, %v849
    %v856 = vld [vmem:[#allocation4] sm:$0xff]
    %v857 = vld [vmem:[#allocation4 + $0x8] sm:$0xff]
    %v858 = vld [vmem:[#allocation4 + $0x10] sm:$0xff]
    %v859 = vld [vmem:[#allocation4 + $0x18] sm:$0xff]
    %v860 = vld [vmem:[#allocation4 + $0x20] sm:$0xff]
    %v861 = vld [vmem:[#allocation4 + $0x28] sm:$0xff]
    %v862 = vld [vmem:[#allocation4 + $0x30] sm:$0xff]
    %v863 = vld [vmem:[#allocation4 + $0x38] sm:$0xff]
    %v864 = vld [vmem:[#allocation4 + $0x40] sm:$0xff]
    %v865 = vld [vmem:[#allocation4 + $0x48] sm:$0xff]
    %v866 = vld [vmem:[#allocation4 + $0x50] sm:$0xff]
    %v867 = vld [vmem:[#allocation4 + $0x58] sm:$0xff]
    %v868 = vld [vmem:[#allocation4 + $0x60] sm:$0xff]
    %v869 = vld [vmem:[#allocation4 + $0x68] sm:$0xff]
    %v870 = vld [vmem:[#allocation4 + $0x70] sm:$0xff]
    %v871 = vld [vmem:[#allocation4 + $0x78] sm:$0xff]
    %872 = vmatpush.msra.mxu0 %v871
    %873 = vmatpush.msra.mxu0 %v870
    %874 = vmatpush.msra.mxu0 %v869
    %875 = vmatpush.msra.mxu0 %v868
    %876 = vmatpush.msra.mxu0 %v867
    %877 = vmatpush.msra.mxu0 %v866
    %878 = vmatpush.msra.mxu0 %v865
    %879 = vmatpush.msra.mxu0 %v864
    %880 = vmatpush.msra.mxu0 %v863
    %881 = vmatpush.msra.mxu0 %v862
    %882 = vmatpush.msra.mxu0 %v861
    %883 = vmatpush.msra.mxu0 %v860
    %884 = vmatpush.msra.mxu0 %v859
    %885 = vmatpush.msra.mxu0 %v858
    %886 = vmatpush.msra.mxu0 %v857
    %887 = vmatpush.msra.mxu0 %v856
    %888 = vmatmul.f32.gmra.mxu0 %v816
    %v889 = vpop.f32.mrf.mxu0
    %v890 = vadd.f32 0.0, %v889
    %891 = vmatmul.f32.gmra.mxu0 %v818
    %v892 = vpop.f32.mrf.mxu0
    %v893 = vadd.f32 0.0, %v892
    %894 = vdwg.mxu0
    %v895 = vadd.f32 %v854, %v890
    %v896 = vadd.f32 %v855, %v893
    %v897 = vmax.f32 %v895, 0.0
    %v898 = vmax.f32 %v896, 0.0
    %v899 = vld [vmem:[#allocation6] sm:$0xff]
    %v900 = vld [vmem:[#allocation6 + $0x8] sm:$0xff]
    %v901 = vld [vmem:[#allocation6 + $0x10] sm:$0xff]
    %v902 = vld [vmem:[#allocation6 + $0x18] sm:$0xff]
    %v903 = vld [vmem:[#allocation6 + $0x20] sm:$0xff]
    %v904 = vld [vmem:[#allocation6 + $0x28] sm:$0xff]
    %v905 = vld [vmem:[#allocation6 + $0x30] sm:$0xff]
    %v906 = vld [vmem:[#allocation6 + $0x38] sm:$0xff]
    %v907 = vld [vmem:[#allocation6 + $0x40] sm:$0xff]
    %v908 = vld [vmem:[#allocation6 + $0x48] sm:$0xff]
    %v909 = vld [vmem:[#allocation6 + $0x50] sm:$0xff]
    %v910 = vld [vmem:[#allocation6 + $0x58] sm:$0xff]
    %v911 = vld [vmem:[#allocation6 + $0x60] sm:$0xff]
    %v912 = vld [vmem:[#allocation6 + $0x68] sm:$0xff]
    %v913 = vld [vmem:[#allocation6 + $0x70] sm:$0xff]
    %v914 = vld [vmem:[#allocation6 + $0x78] sm:$0xff]
    %v915 = vld [vmem:[%s29] sm:$0x1]
    %v917 = vperm.slane %v915, 0
    %919 = vmatpush.msra.mxu0 %v914
    %920 = vmatpush.msra.mxu0 %v913
    %921 = vmatpush.msra.mxu0 %v912
    %922 = vmatpush.msra.mxu0 %v911
    %923 = vmatpush.msra.mxu0 %v910
    %924 = vmatpush.msra.mxu0 %v909
    %925 = vmatpush.msra.mxu0 %v908
    %926 = vmatpush.msra.mxu0 %v907
    %927 = vmatpush.msra.mxu0 %v906
    %928 = vmatpush.msra.mxu0 %v905
    %929 = vmatpush.msra.mxu0 %v904
    %930 = vmatpush.msra.mxu0 %v903
    %931 = vmatpush.msra.mxu0 %v902
    %932 = vmatpush.msra.mxu0 %v901
    %933 = vmatpush.msra.mxu0 %v900
    %934 = vmatpush.msra.mxu0 %v899
    %935 = vmatmul.f32.gmra.mxu0 %v897
    %v936 = vpop.f32.mrf.mxu0
    %v937 = vadd.f32 %v917, %v936
    %938 = vmatmul.f32.gmra.mxu0 %v898
    %v939 = vpop.f32.mrf.mxu0
    %v940 = vadd.f32 %v917, %v939
    %941 = vdwg.mxu0
    %v942 = vld [vmem:[%s43] sm:$0x1]
    %v943 = vld [vmem:[#allocation7] sm:$0xff]
    %v944 = vld [vmem:[#allocation7 + $0x8] sm:$0xff]
    %v945 = vld [vmem:[#allocation7 + $0x10] sm:$0xff]
    %v946 = vld [vmem:[#allocation7 + $0x18] sm:$0xff]
    %v947 = vld [vmem:[#allocation7 + $0x20] sm:$0xff]
    %v948 = vld [vmem:[#allocation7 + $0x28] sm:$0xff]
    %v949 = vld [vmem:[#allocation7 + $0x30] sm:$0xff]
    %v950 = vld [vmem:[#allocation7 + $0x38] sm:$0xff]
    %v951 = vld [vmem:[#allocation7 + $0x40] sm:$0xff]
    %v952 = vld [vmem:[#allocation7 + $0x48] sm:$0xff]
    %v953 = vld [vmem:[#allocation7 + $0x50] sm:$0xff]
    %v954 = vld [vmem:[#allocation7 + $0x58] sm:$0xff]
    %v955 = vld [vmem:[#allocation7 + $0x60] sm:$0xff]
    %v956 = vld [vmem:[#allocation7 + $0x68] sm:$0xff]
    %v957 = vld [vmem:[#allocation7 + $0x70] sm:$0xff]
    %v958 = vld [vmem:[#allocation7 + $0x78] sm:$0xff]
    %959 = vmatpush.msra.mxu0 %v958
    %960 = vmatpush.msra.mxu0 %v957
    %961 = vmatpush.msra.mxu0 %v956
    %962 = vmatpush.msra.mxu0 %v955
    %963 = vmatpush.msra.mxu0 %v954
    %964 = vmatpush.msra.mxu0 %v953
    %965 = vmatpush.msra.mxu0 %v952
    %966 = vmatpush.msra.mxu0 %v951
    %967 = vmatpush.msra.mxu0 %v950
    %968 = vmatpush.msra.mxu0 %v949
    %969 = vmatpush.msra.mxu0 %v948
    %970 = vmatpush.msra.mxu0 %v947
    %971 = vmatpush.msra.mxu0 %v946
    %972 = vmatpush.msra.mxu0 %v945
    %973 = vmatpush.msra.mxu0 %v944
    %974 = vmatpush.msra.mxu0 %v943
    %975 = vmatmul.f32.gmra.mxu0 %v771
    %v976 = vpop.f32.mrf.mxu0
    %v977 = vadd.f32 0.0, %v976
    %978 = vmatmul.f32.gmra.mxu0 %v774
    %v979 = vpop.f32.mrf.mxu0
    %v980 = vadd.f32 0.0, %v979
    %981 = vmatmul.f32.gmra.mxu0 %v777
    %v982 = vpop.f32.mrf.mxu0
    %v983 = vadd.f32 0.0, %v982
    %984 = vmatmul.f32.gmra.mxu0 %v780
    %v985 = vpop.f32.mrf.mxu0
    %v986 = vadd.f32 0.0, %v985
    %987 = vdwg.mxu0
    %v989 = vperm.slane %v942, 0
    %v991 = vadd.f32 %v989, %v977
    %v992 = vadd.f32 %v989, %v980
    %v993 = vadd.f32 %v989, %v983
    %v994 = vadd.f32 %v989, %v986
    %v995 = vld [vmem:[#allocation9] sm:$0xff]
    %v996 = vld [vmem:[#allocation9 + $0x8] sm:$0xff]
    %v997 = vld [vmem:[#allocation9 + $0x10] sm:$0xff]
    %v998 = vld [vmem:[#allocation9 + $0x18] sm:$0xff]
    %v999 = vld [vmem:[#allocation9 + $0x20] sm:$0xff]
    %v1000 = vld [vmem:[#allocation9 + $0x28] sm:$0xff]
    %v1001 = vld [vmem:[#allocation9 + $0x30] sm:$0xff]
    %v1002 = vld [vmem:[#allocation9 + $0x38] sm:$0xff]
    %v1003 = vld [vmem:[#allocation9 + $0x40] sm:$0xff]
    %v1004 = vld [vmem:[#allocation9 + $0x48] sm:$0xff]
    %v1005 = vld [vmem:[#allocation9 + $0x50] sm:$0xff]
    %v1006 = vld [vmem:[#allocation9 + $0x58] sm:$0xff]
    %v1007 = vld [vmem:[#allocation9 + $0x60] sm:$0xff]
    %v1008 = vld [vmem:[#allocation9 + $0x68] sm:$0xff]
    %v1009 = vld [vmem:[#allocation9 + $0x70] sm:$0xff]
    %v1010 = vld [vmem:[#allocation9 + $0x78] sm:$0xff]
    %1011 = vmatpush.msra.mxu0 %v1010
    %1012 = vmatpush.msra.mxu0 %v1009
    %1013 = vmatpush.msra.mxu0 %v1008
    %1014 = vmatpush.msra.mxu0 %v1007
    %1015 = vmatpush.msra.mxu0 %v1006
    %1016 = vmatpush.msra.mxu0 %v1005
    %1017 = vmatpush.msra.mxu0 %v1004
    %1018 = vmatpush.msra.mxu0 %v1003
    %1019 = vmatpush.msra.mxu0 %v1002
    %1020 = vmatpush.msra.mxu0 %v1001
    %1021 = vmatpush.msra.mxu0 %v1000
    %1022 = vmatpush.msra.mxu0 %v999
    %1023 = vmatpush.msra.mxu0 %v998
    %1024 = vmatpush.msra.mxu0 %v997
    %1025 = vmatpush.msra.mxu0 %v996
    %1026 = vmatpush.msra.mxu0 %v995
    %1027 = vmatmul.f32.gmra.mxu0 %v771
    %v1028 = vpop.f32.mrf.mxu0
    %v1029 = vadd.f32 0.0, %v1028
    %1030 = vmatmul.f32.gmra.mxu0 %v774
    %v1031 = vpop.f32.mrf.mxu0
    %v1032 = vadd.f32 0.0, %v1031
    %1033 = vmatmul.f32.gmra.mxu0 %v777
    %v1034 = vpop.f32.mrf.mxu0
    %v1035 = vadd.f32 0.0, %v1034
    %1036 = vmatmul.f32.gmra.mxu0 %v780
    %v1037 = vpop.f32.mrf.mxu0
    %v1038 = vadd.f32 0.0, %v1037
    %1039 = vdwg.mxu0
    %v1040 = vadd.f32 %v991, %v1029
    %v1041 = vadd.f32 %v992, %v1032
    %v1042 = vadd.f32 %v993, %v1035
    %v1043 = vadd.f32 %v994, %v1038
    %v1044 = vpack.c.bf16 %v940, %v937
    %1045 = vmatpush.bf16.msra.mxu0 0
    %1046 = vmatpush.bf16.msra.mxu0 0
    %1047 = vmatpush.bf16.msra.mxu0 0
    %1048 = vmatpush.bf16.msra.mxu0 0
    %1049 = vmatpush.bf16.msra.mxu0 0
    %1050 = vmatpush.bf16.msra.mxu0 0
    %1051 = vmatpush.bf16.msra.mxu0 0
    %1052 = vmatpush.bf16.msra.mxu0 %v1044
    %1053 = vmatmul.bf16.gmra.mxu0 %v578
    %v1054 = vpop.f32.mrf.mxu0
    %v1055 = vadd.f32 0.0, %v1054
    %v1056 = vpop.f32.mrf.mxu0
    %v1057 = vadd.f32 0.0, %v1056
    %1058 = vmatmul.bf16.gmra.mxu0 %v581
    %v1059 = vpop.f32.mrf.mxu0
    %v1060 = vadd.f32 0.0, %v1059
    %v1061 = vpop.f32.mrf.mxu0
    %v1062 = vadd.f32 0.0, %v1061
    %1063 = vdwg.mxu0
    %v1064 = vld [vmem:[#allocation10] sm:$0xff]
    %v1065 = vld [vmem:[#allocation10 + $0x8] sm:$0xff]
    %v1066 = vld [vmem:[#allocation10 + $0x10] sm:$0xff]
    %v1067 = vld [vmem:[#allocation10 + $0x18] sm:$0xff]
    %v1068 = vld [vmem:[#allocation10 + $0x20] sm:$0xff]
    %v1069 = vld [vmem:[#allocation10 + $0x28] sm:$0xff]
    %v1070 = vld [vmem:[#allocation10 + $0x30] sm:$0xff]
    %v1071 = vld [vmem:[#allocation10 + $0x38] sm:$0xff]
    %v1072 = vld [vmem:[#allocation10 + $0x40] sm:$0xff]
    %v1073 = vld [vmem:[#allocation10 + $0x48] sm:$0xff]
    %v1074 = vld [vmem:[#allocation10 + $0x50] sm:$0xff]
    %v1075 = vld [vmem:[#allocation10 + $0x58] sm:$0xff]
    %v1076 = vld [vmem:[#allocation10 + $0x60] sm:$0xff]
    %v1077 = vld [vmem:[#allocation10 + $0x68] sm:$0xff]
    %v1078 = vld [vmem:[#allocation10 + $0x70] sm:$0xff]
    %v1079 = vld [vmem:[#allocation10 + $0x78] sm:$0xff]
    %1080 = vmatpush.msra.mxu0 %v1079
    %1081 = vmatpush.msra.mxu0 %v1078
    %1082 = vmatpush.msra.mxu0 %v1077
    %1083 = vmatpush.msra.mxu0 %v1076
    %1084 = vmatpush.msra.mxu0 %v1075
    %1085 = vmatpush.msra.mxu0 %v1074
    %1086 = vmatpush.msra.mxu0 %v1073
    %1087 = vmatpush.msra.mxu0 %v1072
    %1088 = vmatpush.msra.mxu0 %v1071
    %1089 = vmatpush.msra.mxu0 %v1070
    %1090 = vmatpush.msra.mxu0 %v1069
    %1091 = vmatpush.msra.mxu0 %v1068
    %1092 = vmatpush.msra.mxu0 %v1067
    %1093 = vmatpush.msra.mxu0 %v1066
    %1094 = vmatpush.msra.mxu0 %v1065
    %1095 = vmatpush.msra.mxu0 %v1064
    %1096 = vmatmul.f32.gmra.mxu0 %v1055
    %v1097 = vpop.f32.mrf.mxu0
    %v1098 = vadd.f32 0.0, %v1097
    %1099 = vmatmul.f32.gmra.mxu0 %v1057
    %v1100 = vpop.f32.mrf.mxu0
    %v1101 = vadd.f32 0.0, %v1100
    %1102 = vmatmul.f32.gmra.mxu0 %v1060
    %v1103 = vpop.f32.mrf.mxu0
    %v1104 = vadd.f32 0.0, %v1103
    %1105 = vmatmul.f32.gmra.mxu0 %v1062
    %v1106 = vpop.f32.mrf.mxu0
    %v1107 = vadd.f32 0.0, %v1106
    %1108 = vdwg.mxu0
    %v1109 = vadd.f32 %v1040, %v1098
    %v1110 = vadd.f32 %v1041, %v1101
    %v1111 = vadd.f32 %v1042, %v1104
    %v1112 = vadd.f32 %v1043, %v1107
    %v1113 = vld [vmem:[#allocation12] sm:$0xff]
    %v1114 = vld [vmem:[#allocation12 + $0x8] sm:$0xff]
    %v1115 = vld [vmem:[#allocation12 + $0x10] sm:$0xff]
    %v1116 = vld [vmem:[#allocation12 + $0x18] sm:$0xff]
    %v1117 = vld [vmem:[#allocation12 + $0x20] sm:$0xff]
    %v1118 = vld [vmem:[#allocation12 + $0x28] sm:$0xff]
    %v1119 = vld [vmem:[#allocation12 + $0x30] sm:$0xff]
    %v1120 = vld [vmem:[#allocation12 + $0x38] sm:$0xff]
    %v1121 = vld [vmem:[#allocation12 + $0x40] sm:$0xff]
    %v1122 = vld [vmem:[#allocation12 + $0x48] sm:$0xff]
    %v1123 = vld [vmem:[#allocation12 + $0x50] sm:$0xff]
    %v1124 = vld [vmem:[#allocation12 + $0x58] sm:$0xff]
    %v1125 = vld [vmem:[#allocation12 + $0x60] sm:$0xff]
    %v1126 = vld [vmem:[#allocation12 + $0x68] sm:$0xff]
    %v1127 = vld [vmem:[#allocation12 + $0x70] sm:$0xff]
    %v1128 = vld [vmem:[#allocation12 + $0x78] sm:$0xff]
    %1129 = vmatpush.msra.mxu0 %v1128
    %1130 = vmatpush.msra.mxu0 %v1127
    %1131 = vmatpush.msra.mxu0 %v1126
    %1132 = vmatpush.msra.mxu0 %v1125
    %1133 = vmatpush.msra.mxu0 %v1124
    %1134 = vmatpush.msra.mxu0 %v1123
    %1135 = vmatpush.msra.mxu0 %v1122
    %1136 = vmatpush.msra.mxu0 %v1121
    %1137 = vmatpush.msra.mxu0 %v1120
    %1138 = vmatpush.msra.mxu0 %v1119
    %1139 = vmatpush.msra.mxu0 %v1118
    %1140 = vmatpush.msra.mxu0 %v1117
    %1141 = vmatpush.msra.mxu0 %v1116
    %1142 = vmatpush.msra.mxu0 %v1115
    %1143 = vmatpush.msra.mxu0 %v1114
    %1144 = vmatpush.msra.mxu0 %v1113
    %1145 = vmatmul.f32.gmra.mxu0 %v1055
    %v1146 = vpop.f32.mrf.mxu0
    %v1147 = vadd.f32 0.0, %v1146
    %1148 = vmatmul.f32.gmra.mxu0 %v1057
    %v1149 = vpop.f32.mrf.mxu0
    %v1150 = vadd.f32 0.0, %v1149
    %1151 = vmatmul.f32.gmra.mxu0 %v1060
    %v1152 = vpop.f32.mrf.mxu0
    %v1153 = vadd.f32 0.0, %v1152
    %1154 = vmatmul.f32.gmra.mxu0 %v1062
    %v1155 = vpop.f32.mrf.mxu0
    %v1156 = vadd.f32 0.0, %v1155
    %1157 = vdwg.mxu0
    %v1158 = vadd.f32 %v1109, %v1147
    %v1159 = vadd.f32 %v1110, %v1150
    %v1160 = vadd.f32 %v1111, %v1153
    %v1161 = vadd.f32 %v1112, %v1156
    %1162 = vmatpush.bf16.msra.mxu0 0
    %1163 = vmatpush.bf16.msra.mxu0 0
    %1164 = vmatpush.bf16.msra.mxu0 0
    %1165 = vmatpush.bf16.msra.mxu0 0
    %1166 = vmatpush.bf16.msra.mxu0 0
    %1167 = vmatpush.bf16.msra.mxu0 0
    %1168 = vmatpush.bf16.msra.mxu0 0
    %1169 = vmatpush.bf16.msra.mxu0 %v1044
    %1170 = vmatmul.bf16.gmra.mxu0 %v659
    %v1171 = vpop.f32.mrf.mxu0
    %v1172 = vadd.f32 0.0, %v1171
    %v1173 = vpop.f32.mrf.mxu0
    %v1174 = vadd.f32 0.0, %v1173
    %1175 = vmatmul.bf16.gmra.mxu0 %v662
    %v1176 = vpop.f32.mrf.mxu0
    %v1177 = vadd.f32 0.0, %v1176
    %v1178 = vpop.f32.mrf.mxu0
    %v1179 = vadd.f32 0.0, %v1178
    %1180 = vdwg.mxu0
    %v1181 = vld [vmem:[#allocation13] sm:$0xff]
    %v1182 = vld [vmem:[#allocation13 + $0x8] sm:$0xff]
    %v1183 = vld [vmem:[#allocation13 + $0x10] sm:$0xff]
    %v1184 = vld [vmem:[#allocation13 + $0x18] sm:$0xff]
    %v1185 = vld [vmem:[#allocation13 + $0x20] sm:$0xff]
    %v1186 = vld [vmem:[#allocation13 + $0x28] sm:$0xff]
    %v1187 = vld [vmem:[#allocation13 + $0x30] sm:$0xff]
    %v1188 = vld [vmem:[#allocation13 + $0x38] sm:$0xff]
    %v1189 = vld [vmem:[#allocation13 + $0x40] sm:$0xff]
    %v1190 = vld [vmem:[#allocation13 + $0x48] sm:$0xff]
    %v1191 = vld [vmem:[#allocation13 + $0x50] sm:$0xff]
    %v1192 = vld [vmem:[#allocation13 + $0x58] sm:$0xff]
    %v1193 = vld [vmem:[#allocation13 + $0x60] sm:$0xff]
    %v1194 = vld [vmem:[#allocation13 + $0x68] sm:$0xff]
    %v1195 = vld [vmem:[#allocation13 + $0x70] sm:$0xff]
    %v1196 = vld [vmem:[#allocation13 + $0x78] sm:$0xff]
    %1197 = vmatpush.msra.mxu0 %v1196
    %1198 = vmatpush.msra.mxu0 %v1195
    %1199 = vmatpush.msra.mxu0 %v1194
    %1200 = vmatpush.msra.mxu0 %v1193
    %1201 = vmatpush.msra.mxu0 %v1192
    %1202 = vmatpush.msra.mxu0 %v1191
    %1203 = vmatpush.msra.mxu0 %v1190
    %1204 = vmatpush.msra.mxu0 %v1189
    %1205 = vmatpush.msra.mxu0 %v1188
    %1206 = vmatpush.msra.mxu0 %v1187
    %1207 = vmatpush.msra.mxu0 %v1186
    %1208 = vmatpush.msra.mxu0 %v1185
    %1209 = vmatpush.msra.mxu0 %v1184
    %1210 = vmatpush.msra.mxu0 %v1183
    %1211 = vmatpush.msra.mxu0 %v1182
    %1212 = vmatpush.msra.mxu0 %v1181
    %1213 = vmatmul.f32.gmra.mxu0 %v1172
    %v1214 = vpop.f32.mrf.mxu0
    %v1215 = vadd.f32 0.0, %v1214
    %1216 = vmatmul.f32.gmra.mxu0 %v1174
    %v1217 = vpop.f32.mrf.mxu0
    %v1218 = vadd.f32 0.0, %v1217
    %1219 = vmatmul.f32.gmra.mxu0 %v1177
    %v1220 = vpop.f32.mrf.mxu0
    %v1221 = vadd.f32 0.0, %v1220
    %1222 = vmatmul.f32.gmra.mxu0 %v1179
    %v1223 = vpop.f32.mrf.mxu0
    %v1224 = vadd.f32 0.0, %v1223
    %1225 = vdwg.mxu0
    %v1226 = vadd.f32 %v1158, %v1215
    %v1227 = vadd.f32 %v1159, %v1218
    %v1228 = vadd.f32 %v1160, %v1221
    %v1229 = vadd.f32 %v1161, %v1224
    %v1230 = vld [vmem:[#allocation15] sm:$0xff]
    %v1231 = vld [vmem:[#allocation15 + $0x8] sm:$0xff]
    %v1232 = vld [vmem:[#allocation15 + $0x10] sm:$0xff]
    %v1233 = vld [vmem:[#allocation15 + $0x18] sm:$0xff]
    %v1234 = vld [vmem:[#allocation15 + $0x20] sm:$0xff]
    %v1235 = vld [vmem:[#allocation15 + $0x28] sm:$0xff]
    %v1236 = vld [vmem:[#allocation15 + $0x30] sm:$0xff]
    %v1237 = vld [vmem:[#allocation15 + $0x38] sm:$0xff]
    %v1238 = vld [vmem:[#allocation15 + $0x40] sm:$0xff]
    %v1239 = vld [vmem:[#allocation15 + $0x48] sm:$0xff]
    %v1240 = vld [vmem:[#allocation15 + $0x50] sm:$0xff]
    %v1241 = vld [vmem:[#allocation15 + $0x58] sm:$0xff]
    %v1242 = vld [vmem:[#allocation15 + $0x60] sm:$0xff]
    %v1243 = vld [vmem:[#allocation15 + $0x68] sm:$0xff]
    %v1244 = vld [vmem:[#allocation15 + $0x70] sm:$0xff]
    %v1245 = vld [vmem:[#allocation15 + $0x78] sm:$0xff]
    %1246 = vmatpush.msra.mxu0 %v1245
    %1247 = vmatpush.msra.mxu0 %v1244
    %1248 = vmatpush.msra.mxu0 %v1243
    %1249 = vmatpush.msra.mxu0 %v1242
    %1250 = vmatpush.msra.mxu0 %v1241
    %1251 = vmatpush.msra.mxu0 %v1240
    %1252 = vmatpush.msra.mxu0 %v1239
    %1253 = vmatpush.msra.mxu0 %v1238
    %1254 = vmatpush.msra.mxu0 %v1237
    %1255 = vmatpush.msra.mxu0 %v1236
    %1256 = vmatpush.msra.mxu0 %v1235
    %1257 = vmatpush.msra.mxu0 %v1234
    %1258 = vmatpush.msra.mxu0 %v1233
    %1259 = vmatpush.msra.mxu0 %v1232
    %1260 = vmatpush.msra.mxu0 %v1231
    %1261 = vmatpush.msra.mxu0 %v1230
    %1262 = vmatmul.f32.gmra.mxu0 %v1172
    %v1263 = vpop.f32.mrf.mxu0
    %v1264 = vadd.f32 0.0, %v1263
    %1265 = vmatmul.f32.gmra.mxu0 %v1174
    %v1266 = vpop.f32.mrf.mxu0
    %v1267 = vadd.f32 0.0, %v1266
    %1268 = vmatmul.f32.gmra.mxu0 %v1177
    %v1269 = vpop.f32.mrf.mxu0
    %v1270 = vadd.f32 0.0, %v1269
    %1271 = vmatmul.f32.gmra.mxu0 %v1179
    %v1272 = vpop.f32.mrf.mxu0
    %v1273 = vadd.f32 0.0, %v1272
    %1274 = vdwg.mxu0
    %v1275 = vadd.f32 %v1226, %v1264
    %v1276 = vadd.f32 %v1227, %v1267
    %v1277 = vadd.f32 %v1228, %v1270
    %v1278 = vadd.f32 %v1229, %v1273
    %v1279 = vmax.f32 %v1275, 0.0
    %v1280 = vmax.f32 %v1276, 0.0
    %v1281 = vmax.f32 %v1277, 0.0
    %v1282 = vmax.f32 %v1278, 0.0
    %v1283 = vld [vmem:[#allocation16] sm:$0xff]
    %v1284 = vld [vmem:[#allocation16 + $0x8] sm:$0xff]
    %v1285 = vld [vmem:[#allocation16 + $0x10] sm:$0xff]
    %v1286 = vld [vmem:[#allocation16 + $0x18] sm:$0xff]
    %v1287 = vld [vmem:[#allocation16 + $0x20] sm:$0xff]
    %v1288 = vld [vmem:[#allocation16 + $0x28] sm:$0xff]
    %v1289 = vld [vmem:[#allocation16 + $0x30] sm:$0xff]
    %v1290 = vld [vmem:[#allocation16 + $0x38] sm:$0xff]
    %v1291 = vld [vmem:[#allocation16 + $0x40] sm:$0xff]
    %v1292 = vld [vmem:[#allocation16 + $0x48] sm:$0xff]
    %v1293 = vld [vmem:[#allocation16 + $0x50] sm:$0xff]
    %v1294 = vld [vmem:[#allocation16 + $0x58] sm:$0xff]
    %v1295 = vld [vmem:[#allocation16 + $0x60] sm:$0xff]
    %v1296 = vld [vmem:[#allocation16 + $0x68] sm:$0xff]
    %v1297 = vld [vmem:[#allocation16 + $0x70] sm:$0xff]
    %v1298 = vld [vmem:[#allocation16 + $0x78] sm:$0xff]
    %v1299 = vld [vmem:[%s47] sm:$0x1]
    %v1301 = vperm.slane %v1299, 0
    %1303 = vmatpush.msra.mxu0 %v1298
    %1304 = vmatpush.msra.mxu0 %v1297
    %1305 = vmatpush.msra.mxu0 %v1296
    %1306 = vmatpush.msra.mxu0 %v1295
    %1307 = vmatpush.msra.mxu0 %v1294
    %1308 = vmatpush.msra.mxu0 %v1293
    %1309 = vmatpush.msra.mxu0 %v1292
    %1310 = vmatpush.msra.mxu0 %v1291
    %1311 = vmatpush.msra.mxu0 %v1290
    %1312 = vmatpush.msra.mxu0 %v1289
    %1313 = vmatpush.msra.mxu0 %v1288
    %1314 = vmatpush.msra.mxu0 %v1287
    %1315 = vmatpush.msra.mxu0 %v1286
    %1316 = vmatpush.msra.mxu0 %v1285
    %1317 = vmatpush.msra.mxu0 %v1284
    %1318 = vmatpush.msra.mxu0 %v1283
    %1319 = vmatmul.f32.gmra.mxu0 %v1279
    %v1320 = vpop.f32.mrf.mxu0
    %v1321 = vadd.f32 %v1301, %v1320
    %1322 = vmatmul.f32.gmra.mxu0 %v1280
    %v1323 = vpop.f32.mrf.mxu0
    %v1324 = vadd.f32 %v1301, %v1323
    %1325 = vmatmul.f32.gmra.mxu0 %v1281
    %v1326 = vpop.f32.mrf.mxu0
    %v1327 = vadd.f32 %v1301, %v1326
    %1328 = vmatmul.f32.gmra.mxu0 %v1282
    %v1329 = vpop.f32.mrf.mxu0
    %v1330 = vadd.f32 %v1301, %v1329
    %1331 = vdwg.mxu0
    %v1332 = vpack.c.bf16 %v1324, %v1321
    %v1333 = vpack.c.bf16 %v1330, %v1327
    %1334 = vmatpush.bf16.msra.mxu0 0
    %1335 = vmatpush.bf16.msra.mxu0 0
    %1336 = vmatpush.bf16.msra.mxu0 0
    %1337 = vmatpush.bf16.msra.mxu0 0
    %1338 = vmatpush.bf16.msra.mxu0 0
    %1339 = vmatpush.bf16.msra.mxu0 0
    %1340 = vmatpush.bf16.msra.mxu0 %v1333
    %1341 = vmatpush.bf16.msra.mxu0 %v1332
    %1342 = vmatmul.bf16.gmra.mxu0 %v804
    %v1343 = vpop.f32.mrf.mxu0
    %v1344 = vadd.f32 0.0, %v1343
    %v1345 = vpop.f32.mrf.mxu0
    %v1346 = vadd.f32 0.0, %v1345
    %1347 = vdwg.mxu0
    %v1348 = vld [vmem:[%s55] sm:$0x1]
    %v1349 = vld [vmem:[#allocation18] sm:$0xff]
    %v1350 = vld [vmem:[#allocation18 + $0x8] sm:$0xff]
    %v1351 = vld [vmem:[#allocation18 + $0x10] sm:$0xff]
    %v1352 = vld [vmem:[#allocation18 + $0x18] sm:$0xff]
    %v1353 = vld [vmem:[#allocation18 + $0x20] sm:$0xff]
    %v1354 = vld [vmem:[#allocation18 + $0x28] sm:$0xff]
    %v1355 = vld [vmem:[#allocation18 + $0x30] sm:$0xff]
    %v1356 = vld [vmem:[#allocation18 + $0x38] sm:$0xff]
    %v1357 = vld [vmem:[#allocation18 + $0x40] sm:$0xff]
    %v1358 = vld [vmem:[#allocation18 + $0x48] sm:$0xff]
    %v1359 = vld [vmem:[#allocation18 + $0x50] sm:$0xff]
    %v1360 = vld [vmem:[#allocation18 + $0x58] sm:$0xff]
    %v1361 = vld [vmem:[#allocation18 + $0x60] sm:$0xff]
    %v1362 = vld [vmem:[#allocation18 + $0x68] sm:$0xff]
    %v1363 = vld [vmem:[#allocation18 + $0x70] sm:$0xff]
    %v1364 = vld [vmem:[#allocation18 + $0x78] sm:$0xff]
    %1365 = vmatpush.msra.mxu0 %v1364
    %1366 = vmatpush.msra.mxu0 %v1363
    %1367 = vmatpush.msra.mxu0 %v1362
    %1368 = vmatpush.msra.mxu0 %v1361
    %1369 = vmatpush.msra.mxu0 %v1360
    %1370 = vmatpush.msra.mxu0 %v1359
    %1371 = vmatpush.msra.mxu0 %v1358
    %1372 = vmatpush.msra.mxu0 %v1357
    %1373 = vmatpush.msra.mxu0 %v1356
    %1374 = vmatpush.msra.mxu0 %v1355
    %1375 = vmatpush.msra.mxu0 %v1354
    %1376 = vmatpush.msra.mxu0 %v1353
    %1377 = vmatpush.msra.mxu0 %v1352
    %1378 = vmatpush.msra.mxu0 %v1351
    %1379 = vmatpush.msra.mxu0 %v1350
    %1380 = vmatpush.msra.mxu0 %v1349
    %1381 = vmatmul.f32.gmra.mxu0 %v937
    %v1382 = vpop.f32.mrf.mxu0
    %v1383 = vadd.f32 0.0, %v1382
    %1384 = vmatmul.f32.gmra.mxu0 %v940
    %v1385 = vpop.f32.mrf.mxu0
    %v1386 = vadd.f32 0.0, %v1385
    %1387 = vdwg.mxu0
    %v1389 = vperm.slane %v1348, 0
    %v1391 = vadd.f32 %v1389, %v1383
    %v1392 = vadd.f32 %v1389, %v1386
    %v1393 = vld [vmem:[#allocation19] sm:$0xff]
    %v1394 = vld [vmem:[#allocation19 + $0x8] sm:$0xff]
    %v1395 = vld [vmem:[#allocation19 + $0x10] sm:$0xff]
    %v1396 = vld [vmem:[#allocation19 + $0x18] sm:$0xff]
    %v1397 = vld [vmem:[#allocation19 + $0x20] sm:$0xff]
    %v1398 = vld [vmem:[#allocation19 + $0x28] sm:$0xff]
    %v1399 = vld [vmem:[#allocation19 + $0x30] sm:$0xff]
    %v1400 = vld [vmem:[#allocation19 + $0x38] sm:$0xff]
    %v1401 = vld [vmem:[#allocation19 + $0x40] sm:$0xff]
    %v1402 = vld [vmem:[#allocation19 + $0x48] sm:$0xff]
    %v1403 = vld [vmem:[#allocation19 + $0x50] sm:$0xff]
    %v1404 = vld [vmem:[#allocation19 + $0x58] sm:$0xff]
    %v1405 = vld [vmem:[#allocation19 + $0x60] sm:$0xff]
    %v1406 = vld [vmem:[#allocation19 + $0x68] sm:$0xff]
    %v1407 = vld [vmem:[#allocation19 + $0x70] sm:$0xff]
    %v1408 = vld [vmem:[#allocation19 + $0x78] sm:$0xff]
    %1409 = vmatpush.msra.mxu0 %v1408
    %1410 = vmatpush.msra.mxu0 %v1407
    %1411 = vmatpush.msra.mxu0 %v1406
    %1412 = vmatpush.msra.mxu0 %v1405
    %1413 = vmatpush.msra.mxu0 %v1404
    %1414 = vmatpush.msra.mxu0 %v1403
    %1415 = vmatpush.msra.mxu0 %v1402
    %1416 = vmatpush.msra.mxu0 %v1401
    %1417 = vmatpush.msra.mxu0 %v1400
    %1418 = vmatpush.msra.mxu0 %v1399
    %1419 = vmatpush.msra.mxu0 %v1398
    %1420 = vmatpush.msra.mxu0 %v1397
    %1421 = vmatpush.msra.mxu0 %v1396
    %1422 = vmatpush.msra.mxu0 %v1395
    %1423 = vmatpush.msra.mxu0 %v1394
    %1424 = vmatpush.msra.mxu0 %v1393
    %1425 = vmatmul.f32.gmra.mxu0 %v937
    %v1426 = vpop.f32.mrf.mxu0
    %v1427 = vadd.f32 0.0, %v1426
    %1428 = vmatmul.f32.gmra.mxu0 %v940
    %v1429 = vpop.f32.mrf.mxu0
    %v1430 = vadd.f32 0.0, %v1429
    %1431 = vdwg.mxu0
    %v1432 = vadd.f32 %v1391, %v1427
    %v1433 = vadd.f32 %v1392, %v1430
    %v1434 = vld [vmem:[#allocation21] sm:$0xff]
    %v1435 = vld [vmem:[#allocation21 + $0x8] sm:$0xff]
    %v1436 = vld [vmem:[#allocation21 + $0x10] sm:$0xff]
    %v1437 = vld [vmem:[#allocation21 + $0x18] sm:$0xff]
    %v1438 = vld [vmem:[#allocation21 + $0x20] sm:$0xff]
    %v1439 = vld [vmem:[#allocation21 + $0x28] sm:$0xff]
    %v1440 = vld [vmem:[#allocation21 + $0x30] sm:$0xff]
    %v1441 = vld [vmem:[#allocation21 + $0x38] sm:$0xff]
    %v1442 = vld [vmem:[#allocation21 + $0x40] sm:$0xff]
    %v1443 = vld [vmem:[#allocation21 + $0x48] sm:$0xff]
    %v1444 = vld [vmem:[#allocation21 + $0x50] sm:$0xff]
    %v1445 = vld [vmem:[#allocation21 + $0x58] sm:$0xff]
    %v1446 = vld [vmem:[#allocation21 + $0x60] sm:$0xff]
    %v1447 = vld [vmem:[#allocation21 + $0x68] sm:$0xff]
    %v1448 = vld [vmem:[#allocation21 + $0x70] sm:$0xff]
    %v1449 = vld [vmem:[#allocation21 + $0x78] sm:$0xff]
    %1450 = vmatpush.msra.mxu0 %v1449
    %1451 = vmatpush.msra.mxu0 %v1448
    %1452 = vmatpush.msra.mxu0 %v1447
    %1453 = vmatpush.msra.mxu0 %v1446
    %1454 = vmatpush.msra.mxu0 %v1445
    %1455 = vmatpush.msra.mxu0 %v1444
    %1456 = vmatpush.msra.mxu0 %v1443
    %1457 = vmatpush.msra.mxu0 %v1442
    %1458 = vmatpush.msra.mxu0 %v1441
    %1459 = vmatpush.msra.mxu0 %v1440
    %1460 = vmatpush.msra.mxu0 %v1439
    %1461 = vmatpush.msra.mxu0 %v1438
    %1462 = vmatpush.msra.mxu0 %v1437
    %1463 = vmatpush.msra.mxu0 %v1436
    %1464 = vmatpush.msra.mxu0 %v1435
    %1465 = vmatpush.msra.mxu0 %v1434
    %1466 = vmatmul.f32.gmra.mxu0 %v1344
    %v1467 = vpop.f32.mrf.mxu0
    %v1468 = vadd.f32 0.0, %v1467
    %1469 = vmatmul.f32.gmra.mxu0 %v1346
    %v1470 = vpop.f32.mrf.mxu0
    %v1471 = vadd.f32 0.0, %v1470
    %1472 = vdwg.mxu0
    %v1473 = vadd.f32 %v1432, %v1468
    %v1474 = vadd.f32 %v1433, %v1471
    %v1475 = vmax.f32 %v1473, 0.0
    %v1476 = vmax.f32 %v1474, 0.0
    %v1477 = vld [vmem:[#allocation22] sm:$0xff]
    %v1478 = vld [vmem:[#allocation22 + $0x8] sm:$0xff]
    %v1479 = vld [vmem:[#allocation22 + $0x10] sm:$0xff]
    %v1480 = vld [vmem:[#allocation22 + $0x18] sm:$0xff]
    %v1481 = vld [vmem:[#allocation22 + $0x20] sm:$0xff]
    %v1482 = vld [vmem:[#allocation22 + $0x28] sm:$0xff]
    %v1483 = vld [vmem:[#allocation22 + $0x30] sm:$0xff]
    %v1484 = vld [vmem:[#allocation22 + $0x38] sm:$0xff]
    %v1485 = vld [vmem:[#allocation22 + $0x40] sm:$0xff]
    %v1486 = vld [vmem:[#allocation22 + $0x48] sm:$0xff]
    %v1487 = vld [vmem:[#allocation22 + $0x50] sm:$0xff]
    %v1488 = vld [vmem:[#allocation22 + $0x58] sm:$0xff]
    %v1489 = vld [vmem:[#allocation22 + $0x60] sm:$0xff]
    %v1490 = vld [vmem:[#allocation22 + $0x68] sm:$0xff]
    %v1491 = vld [vmem:[#allocation22 + $0x70] sm:$0xff]
    %v1492 = vld [vmem:[#allocation22 + $0x78] sm:$0xff]
    %v1493 = vld [vmem:[%s59] sm:$0x1]
    %v1495 = vperm.slane %v1493, 0
    %1497 = vmatpush.msra.mxu0 %v1492
    %1498 = vmatpush.msra.mxu0 %v1491
    %1499 = vmatpush.msra.mxu0 %v1490
    %1500 = vmatpush.msra.mxu0 %v1489
    %1501 = vmatpush.msra.mxu0 %v1488
    %1502 = vmatpush.msra.mxu0 %v1487
    %1503 = vmatpush.msra.mxu0 %v1486
    %1504 = vmatpush.msra.mxu0 %v1485
    %1505 = vmatpush.msra.mxu0 %v1484
    %1506 = vmatpush.msra.mxu0 %v1483
    %1507 = vmatpush.msra.mxu0 %v1482
    %1508 = vmatpush.msra.mxu0 %v1481
    %1509 = vmatpush.msra.mxu0 %v1480
    %1510 = vmatpush.msra.mxu0 %v1479
    %1511 = vmatpush.msra.mxu0 %v1478
    %1512 = vmatpush.msra.mxu0 %v1477
    %1513 = vmatmul.f32.gmra.mxu0 %v1475
    %v1514 = vpop.f32.mrf.mxu0
    %v1515 = vadd.f32 %v1495, %v1514
    %1516 = vmatmul.f32.gmra.mxu0 %v1476
    %v1517 = vpop.f32.mrf.mxu0
    %v1518 = vadd.f32 %v1495, %v1517
    %1519 = vdwg.mxu0
    %1520 = vmatpush.msra.mxu0 %v958
    %1521 = vmatpush.msra.mxu0 %v957
    %1522 = vmatpush.msra.mxu0 %v956
    %1523 = vmatpush.msra.mxu0 %v955
    %1524 = vmatpush.msra.mxu0 %v954
    %1525 = vmatpush.msra.mxu0 %v953
    %1526 = vmatpush.msra.mxu0 %v952
    %1527 = vmatpush.msra.mxu0 %v951
    %1528 = vmatpush.msra.mxu0 %v950
    %1529 = vmatpush.msra.mxu0 %v949
    %1530 = vmatpush.msra.mxu0 %v948
    %1531 = vmatpush.msra.mxu0 %v947
    %1532 = vmatpush.msra.mxu0 %v946
    %1533 = vmatpush.msra.mxu0 %v945
    %1534 = vmatpush.msra.mxu0 %v944
    %1535 = vmatpush.msra.mxu0 %v943
    %1536 = vmatmul.f32.gmra.mxu0 %v1321
    %v1537 = vpop.f32.mrf.mxu0
    %v1538 = vadd.f32 0.0, %v1537
    %1539 = vmatmul.f32.gmra.mxu0 %v1324
    %v1540 = vpop.f32.mrf.mxu0
    %v1541 = vadd.f32 0.0, %v1540
    %1542 = vmatmul.f32.gmra.mxu0 %v1327
    %v1543 = vpop.f32.mrf.mxu0
    %v1544 = vadd.f32 0.0, %v1543
    %1545 = vmatmul.f32.gmra.mxu0 %v1330
    %v1546 = vpop.f32.mrf.mxu0
    %v1547 = vadd.f32 0.0, %v1546
    %1548 = vdwg.mxu0
    %v1549 = vadd.f32 %v989, %v1538
    %v1550 = vadd.f32 %v989, %v1541
    %v1551 = vadd.f32 %v989, %v1544
    %v1552 = vadd.f32 %v989, %v1547
    %v1553 = vadd.f32 %v1549, %v1029
    %v1554 = vadd.f32 %v1550, %v1032
    %v1555 = vadd.f32 %v1551, %v1035
    %v1556 = vadd.f32 %v1552, %v1038
    %v1557 = vpack.c.bf16 %v1518, %v1515
    %1558 = vmatpush.bf16.msra.mxu0 0
    %1559 = vmatpush.bf16.msra.mxu0 0
    %1560 = vmatpush.bf16.msra.mxu0 0
    %1561 = vmatpush.bf16.msra.mxu0 0
    %1562 = vmatpush.bf16.msra.mxu0 0
    %1563 = vmatpush.bf16.msra.mxu0 0
    %1564 = vmatpush.bf16.msra.mxu0 0
    %1565 = vmatpush.bf16.msra.mxu0 %v1557
    %1566 = vmatmul.bf16.gmra.mxu0 %v578
    %v1567 = vpop.f32.mrf.mxu0
    %v1568 = vadd.f32 0.0, %v1567
    %v1569 = vpop.f32.mrf.mxu0
    %v1570 = vadd.f32 0.0, %v1569
    %1571 = vmatmul.bf16.gmra.mxu0 %v581
    %v1572 = vpop.f32.mrf.mxu0
    %v1573 = vadd.f32 0.0, %v1572
    %v1574 = vpop.f32.mrf.mxu0
    %v1575 = vadd.f32 0.0, %v1574
    %1576 = vdwg.mxu0
    %1577 = vmatpush.msra.mxu0 %v1079
    %1578 = vmatpush.msra.mxu0 %v1078
    %1579 = vmatpush.msra.mxu0 %v1077
    %1580 = vmatpush.msra.mxu0 %v1076
    %1581 = vmatpush.msra.mxu0 %v1075
    %1582 = vmatpush.msra.mxu0 %v1074
    %1583 = vmatpush.msra.mxu0 %v1073
    %1584 = vmatpush.msra.mxu0 %v1072
    %1585 = vmatpush.msra.mxu0 %v1071
    %1586 = vmatpush.msra.mxu0 %v1070
    %1587 = vmatpush.msra.mxu0 %v1069
    %1588 = vmatpush.msra.mxu0 %v1068
    %1589 = vmatpush.msra.mxu0 %v1067
    %1590 = vmatpush.msra.mxu0 %v1066
    %1591 = vmatpush.msra.mxu0 %v1065
    %1592 = vmatpush.msra.mxu0 %v1064
    %1593 = vmatmul.f32.gmra.mxu0 %v1568
    %v1594 = vpop.f32.mrf.mxu0
    %v1595 = vadd.f32 0.0, %v1594
    %1596 = vmatmul.f32.gmra.mxu0 %v1570
    %v1597 = vpop.f32.mrf.mxu0
    %v1598 = vadd.f32 0.0, %v1597
    %1599 = vmatmul.f32.gmra.mxu0 %v1573
    %v1600 = vpop.f32.mrf.mxu0
    %v1601 = vadd.f32 0.0, %v1600
    %1602 = vmatmul.f32.gmra.mxu0 %v1575
    %v1603 = vpop.f32.mrf.mxu0
    %v1604 = vadd.f32 0.0, %v1603
    %1605 = vdwg.mxu0
    %v1606 = vadd.f32 %v1553, %v1595
    %v1607 = vadd.f32 %v1554, %v1598
    %v1608 = vadd.f32 %v1555, %v1601
    %v1609 = vadd.f32 %v1556, %v1604
    %v1610 = vadd.f32 %v1606, %v1147
    %v1611 = vadd.f32 %v1607, %v1150
    %v1612 = vadd.f32 %v1608, %v1153
    %v1613 = vadd.f32 %v1609, %v1156
    %1614 = vmatpush.bf16.msra.mxu0 0
    %1615 = vmatpush.bf16.msra.mxu0 0
    %1616 = vmatpush.bf16.msra.mxu0 0
    %1617 = vmatpush.bf16.msra.mxu0 0
    %1618 = vmatpush.bf16.msra.mxu0 0
    %1619 = vmatpush.bf16.msra.mxu0 0
    %1620 = vmatpush.bf16.msra.mxu0 0
    %1621 = vmatpush.bf16.msra.mxu0 %v1557
    %1622 = vmatmul.bf16.gmra.mxu0 %v659
    %v1623 = vpop.f32.mrf.mxu0
    %v1624 = vadd.f32 0.0, %v1623
    %v1625 = vpop.f32.mrf.mxu0
    %v1626 = vadd.f32 0.0, %v1625
    %1627 = vmatmul.bf16.gmra.mxu0 %v662
    %v1628 = vpop.f32.mrf.mxu0
    %v1629 = vadd.f32 0.0, %v1628
    %v1630 = vpop.f32.mrf.mxu0
    %v1631 = vadd.f32 0.0, %v1630
    %1632 = vdwg.mxu0
    %1633 = vmatpush.msra.mxu0 %v1196
    %1634 = vmatpush.msra.mxu0 %v1195
    %1635 = vmatpush.msra.mxu0 %v1194
    %1636 = vmatpush.msra.mxu0 %v1193
    %1637 = vmatpush.msra.mxu0 %v1192
    %1638 = vmatpush.msra.mxu0 %v1191
    %1639 = vmatpush.msra.mxu0 %v1190
    %1640 = vmatpush.msra.mxu0 %v1189
    %1641 = vmatpush.msra.mxu0 %v1188
    %1642 = vmatpush.msra.mxu0 %v1187
    %1643 = vmatpush.msra.mxu0 %v1186
    %1644 = vmatpush.msra.mxu0 %v1185
    %1645 = vmatpush.msra.mxu0 %v1184
    %1646 = vmatpush.msra.mxu0 %v1183
    %1647 = vmatpush.msra.mxu0 %v1182
    %1648 = vmatpush.msra.mxu0 %v1181
    %1649 = vmatmul.f32.gmra.mxu0 %v1624
    %v1650 = vpop.f32.mrf.mxu0
    %v1651 = vadd.f32 0.0, %v1650
    %1652 = vmatmul.f32.gmra.mxu0 %v1626
    %v1653 = vpop.f32.mrf.mxu0
    %v1654 = vadd.f32 0.0, %v1653
    %1655 = vmatmul.f32.gmra.mxu0 %v1629
    %v1656 = vpop.f32.mrf.mxu0
    %v1657 = vadd.f32 0.0, %v1656
    %1658 = vmatmul.f32.gmra.mxu0 %v1631
    %v1659 = vpop.f32.mrf.mxu0
    %v1660 = vadd.f32 0.0, %v1659
    %1661 = vdwg.mxu0
    %v1662 = vadd.f32 %v1610, %v1651
    %v1663 = vadd.f32 %v1611, %v1654
    %v1664 = vadd.f32 %v1612, %v1657
    %v1665 = vadd.f32 %v1613, %v1660
    %v1666 = vadd.f32 %v1662, %v1264
    %v1667 = vadd.f32 %v1663, %v1267
    %v1668 = vadd.f32 %v1664, %v1270
    %v1669 = vadd.f32 %v1665, %v1273
    %v1670 = vmax.f32 %v1666, 0.0
    %v1671 = vmax.f32 %v1667, 0.0
    %v1672 = vmax.f32 %v1668, 0.0
    %v1673 = vmax.f32 %v1669, 0.0
    %1674 = vmatpush.msra.mxu0 %v1298
    %1675 = vmatpush.msra.mxu0 %v1297
    %1676 = vmatpush.msra.mxu0 %v1296
    %1677 = vmatpush.msra.mxu0 %v1295
    %1678 = vmatpush.msra.mxu0 %v1294
    %1679 = vmatpush.msra.mxu0 %v1293
    %1680 = vmatpush.msra.mxu0 %v1292
    %1681 = vmatpush.msra.mxu0 %v1291
    %1682 = vmatpush.msra.mxu0 %v1290
    %1683 = vmatpush.msra.mxu0 %v1289
    %1684 = vmatpush.msra.mxu0 %v1288
    %1685 = vmatpush.msra.mxu0 %v1287
    %1686 = vmatpush.msra.mxu0 %v1286
    %1687 = vmatpush.msra.mxu0 %v1285
    %1688 = vmatpush.msra.mxu0 %v1284
    %1689 = vmatpush.msra.mxu0 %v1283
    %1690 = vmatmul.f32.gmra.mxu0 %v1670
    %v1691 = vpop.f32.mrf.mxu0
    %v1692 = vadd.f32 %v1301, %v1691
    %1693 = vmatmul.f32.gmra.mxu0 %v1671
    %v1694 = vpop.f32.mrf.mxu0
    %v1695 = vadd.f32 %v1301, %v1694
    %1696 = vmatmul.f32.gmra.mxu0 %v1672
    %v1697 = vpop.f32.mrf.mxu0
    %v1698 = vadd.f32 %v1301, %v1697
    %1699 = vmatmul.f32.gmra.mxu0 %v1673
    %v1700 = vpop.f32.mrf.mxu0
    %v1701 = vadd.f32 %v1301, %v1700
    %1702 = vdwg.mxu0
    %v1703 = vpack.c.bf16 %v1695, %v1692
    %v1704 = vpack.c.bf16 %v1701, %v1698
    %1705 = vmatpush.bf16.msra.mxu0 0
    %1706 = vmatpush.bf16.msra.mxu0 0
    %1707 = vmatpush.bf16.msra.mxu0 0
    %1708 = vmatpush.bf16.msra.mxu0 0
    %1709 = vmatpush.bf16.msra.mxu0 0
    %1710 = vmatpush.bf16.msra.mxu0 0
    %1711 = vmatpush.bf16.msra.mxu0 %v1704
    %1712 = vmatpush.bf16.msra.mxu0 %v1703
    %1713 = vmatmul.bf16.gmra.mxu0 %v804
    %v1714 = vpop.f32.mrf.mxu0
    %v1715 = vadd.f32 0.0, %v1714
    %v1716 = vpop.f32.mrf.mxu0
    %v1717 = vadd.f32 0.0, %v1716
    %1718 = vdwg.mxu0
    %1719 = vmatpush.msra.mxu0 %v1364
    %1720 = vmatpush.msra.mxu0 %v1363
    %1721 = vmatpush.msra.mxu0 %v1362
    %1722 = vmatpush.msra.mxu0 %v1361
    %1723 = vmatpush.msra.mxu0 %v1360
    %1724 = vmatpush.msra.mxu0 %v1359
    %1725 = vmatpush.msra.mxu0 %v1358
    %1726 = vmatpush.msra.mxu0 %v1357
    %1727 = vmatpush.msra.mxu0 %v1356
    %1728 = vmatpush.msra.mxu0 %v1355
    %1729 = vmatpush.msra.mxu0 %v1354
    %1730 = vmatpush.msra.mxu0 %v1353
    %1731 = vmatpush.msra.mxu0 %v1352
    %1732 = vmatpush.msra.mxu0 %v1351
    %1733 = vmatpush.msra.mxu0 %v1350
    %1734 = vmatpush.msra.mxu0 %v1349
    %1735 = vmatmul.f32.gmra.mxu0 %v1515
    %v1736 = vpop.f32.mrf.mxu0
    %v1737 = vadd.f32 0.0, %v1736
    %1738 = vmatmul.f32.gmra.mxu0 %v1518
    %v1739 = vpop.f32.mrf.mxu0
    %v1740 = vadd.f32 0.0, %v1739
    %1741 = vdwg.mxu0
    %v1742 = vadd.f32 %v1389, %v1737
    %v1743 = vadd.f32 %v1389, %v1740
    %v1744 = vadd.f32 %v1742, %v1427
    %v1745 = vadd.f32 %v1743, %v1430
    %1746 = vmatpush.msra.mxu0 %v1449
    %1747 = vmatpush.msra.mxu0 %v1448
    %1748 = vmatpush.msra.mxu0 %v1447
    %1749 = vmatpush.msra.mxu0 %v1446
    %1750 = vmatpush.msra.mxu0 %v1445
    %1751 = vmatpush.msra.mxu0 %v1444
    %1752 = vmatpush.msra.mxu0 %v1443
    %1753 = vmatpush.msra.mxu0 %v1442
    %1754 = vmatpush.msra.mxu0 %v1441
    %1755 = vmatpush.msra.mxu0 %v1440
    %1756 = vmatpush.msra.mxu0 %v1439
    %1757 = vmatpush.msra.mxu0 %v1438
    %1758 = vmatpush.msra.mxu0 %v1437
    %1759 = vmatpush.msra.mxu0 %v1436
    %1760 = vmatpush.msra.mxu0 %v1435
    %1761 = vmatpush.msra.mxu0 %v1434
    %1762 = vmatmul.f32.gmra.mxu0 %v1715
    %v1763 = vpop.f32.mrf.mxu0
    %v1764 = vadd.f32 0.0, %v1763
    %1765 = vmatmul.f32.gmra.mxu0 %v1717
    %v1766 = vpop.f32.mrf.mxu0
    %v1767 = vadd.f32 0.0, %v1766
    %1768 = vdwg.mxu0
    %v1769 = vadd.f32 %v1744, %v1764
    %v1770 = vadd.f32 %v1745, %v1767
    %v1771 = vmax.f32 %v1769, 0.0
    %v1772 = vmax.f32 %v1770, 0.0
    %1773 = vmatpush.msra.mxu0 %v1492
    %1774 = vmatpush.msra.mxu0 %v1491
    %1775 = vmatpush.msra.mxu0 %v1490
    %1776 = vmatpush.msra.mxu0 %v1489
    %1777 = vmatpush.msra.mxu0 %v1488
    %1778 = vmatpush.msra.mxu0 %v1487
    %1779 = vmatpush.msra.mxu0 %v1486
    %1780 = vmatpush.msra.mxu0 %v1485
    %1781 = vmatpush.msra.mxu0 %v1484
    %1782 = vmatpush.msra.mxu0 %v1483
    %1783 = vmatpush.msra.mxu0 %v1482
    %1784 = vmatpush.msra.mxu0 %v1481
    %1785 = vmatpush.msra.mxu0 %v1480
    %1786 = vmatpush.msra.mxu0 %v1479
    %1787 = vmatpush.msra.mxu0 %v1478
    %1788 = vmatpush.msra.mxu0 %v1477
    %1789 = vmatmul.f32.gmra.mxu0 %v1771
    %v1790 = vpop.f32.mrf.mxu0
    %v1791 = vadd.f32 %v1495, %v1790
    %1792 = vmatmul.f32.gmra.mxu0 %v1772
    %v1793 = vpop.f32.mrf.mxu0
    %v1794 = vadd.f32 %v1495, %v1793
    %1795 = vdwg.mxu0
    %v1796 = vld [vmem:[%s67] sm:$0x1]
    %v1797 = vld [vmem:[#allocation24] sm:$0xff]
    %v1798 = vld [vmem:[#allocation24 + $0x8] sm:$0xff]
    %v1799 = vld [vmem:[#allocation24 + $0x10] sm:$0xff]
    %v1800 = vld [vmem:[#allocation24 + $0x18] sm:$0xff]
    %v1801 = vld [vmem:[#allocation24 + $0x20] sm:$0xff]
    %v1802 = vld [vmem:[#allocation24 + $0x28] sm:$0xff]
    %v1803 = vld [vmem:[#allocation24 + $0x30] sm:$0xff]
    %v1804 = vld [vmem:[#allocation24 + $0x38] sm:$0xff]
    %v1805 = vld [vmem:[#allocation24 + $0x40] sm:$0xff]
    %v1806 = vld [vmem:[#allocation24 + $0x48] sm:$0xff]
    %v1807 = vld [vmem:[#allocation24 + $0x50] sm:$0xff]
    %v1808 = vld [vmem:[#allocation24 + $0x58] sm:$0xff]
    %v1809 = vld [vmem:[#allocation24 + $0x60] sm:$0xff]
    %v1810 = vld [vmem:[#allocation24 + $0x68] sm:$0xff]
    %v1811 = vld [vmem:[#allocation24 + $0x70] sm:$0xff]
    %v1812 = vld [vmem:[#allocation24 + $0x78] sm:$0xff]
    %1813 = vmatpush.msra.mxu0 %v1812
    %1814 = vmatpush.msra.mxu0 %v1811
    %1815 = vmatpush.msra.mxu0 %v1810
    %1816 = vmatpush.msra.mxu0 %v1809
    %1817 = vmatpush.msra.mxu0 %v1808
    %1818 = vmatpush.msra.mxu0 %v1807
    %1819 = vmatpush.msra.mxu0 %v1806
    %1820 = vmatpush.msra.mxu0 %v1805
    %1821 = vmatpush.msra.mxu0 %v1804
    %1822 = vmatpush.msra.mxu0 %v1803
    %1823 = vmatpush.msra.mxu0 %v1802
    %1824 = vmatpush.msra.mxu0 %v1801
    %1825 = vmatpush.msra.mxu0 %v1800
    %1826 = vmatpush.msra.mxu0 %v1799
    %1827 = vmatpush.msra.mxu0 %v1798
    %1828 = vmatpush.msra.mxu0 %v1797
    %1829 = vmatmul.f32.gmra.mxu0 %v1692
    %v1830 = vpop.f32.mrf.mxu0
    %v1831 = vadd.f32 0.0, %v1830
    %1832 = vmatmul.f32.gmra.mxu0 %v1695
    %v1833 = vpop.f32.mrf.mxu0
    %v1834 = vadd.f32 0.0, %v1833
    %1835 = vmatmul.f32.gmra.mxu0 %v1698
    %v1836 = vpop.f32.mrf.mxu0
    %v1837 = vadd.f32 0.0, %v1836
    %1838 = vmatmul.f32.gmra.mxu0 %v1701
    %v1839 = vpop.f32.mrf.mxu0
    %v1840 = vadd.f32 0.0, %v1839
    %1841 = vdwg.mxu0
    %v1843 = vperm.slane %v1796, 0
    %v1845 = vadd.f32 %v1843, %v1831
    %v1846 = vadd.f32 %v1843, %v1834
    %v1847 = vadd.f32 %v1843, %v1837
    %v1848 = vadd.f32 %v1843, %v1840
    %v1849 = vpack.c.bf16 %v1794, %v1791
    %1850 = vmatpush.bf16.msra.mxu0 0
    %1851 = vmatpush.bf16.msra.mxu0 0
    %1852 = vmatpush.bf16.msra.mxu0 0
    %1853 = vmatpush.bf16.msra.mxu0 0
    %1854 = vmatpush.bf16.msra.mxu0 0
    %1855 = vmatpush.bf16.msra.mxu0 0
    %1856 = vmatpush.bf16.msra.mxu0 0
    %1857 = vmatpush.bf16.msra.mxu0 %v1849
    %1858 = vmatmul.bf16.gmra.mxu0 %v578
    %v1859 = vpop.f32.mrf.mxu0
    %v1860 = vadd.f32 0.0, %v1859
    %v1861 = vpop.f32.mrf.mxu0
    %v1862 = vadd.f32 0.0, %v1861
    %1863 = vmatmul.bf16.gmra.mxu0 %v581
    %v1864 = vpop.f32.mrf.mxu0
    %v1865 = vadd.f32 0.0, %v1864
    %v1866 = vpop.f32.mrf.mxu0
    %v1867 = vadd.f32 0.0, %v1866
    %1868 = vdwg.mxu0
    %v1869 = vld [vmem:[#allocation25] sm:$0xff]
    %v1870 = vld [vmem:[#allocation25 + $0x8] sm:$0xff]
    %v1871 = vld [vmem:[#allocation25 + $0x10] sm:$0xff]
    %v1872 = vld [vmem:[#allocation25 + $0x18] sm:$0xff]
    %v1873 = vld [vmem:[#allocation25 + $0x20] sm:$0xff]
    %v1874 = vld [vmem:[#allocation25 + $0x28] sm:$0xff]
    %v1875 = vld [vmem:[#allocation25 + $0x30] sm:$0xff]
    %v1876 = vld [vmem:[#allocation25 + $0x38] sm:$0xff]
    %v1877 = vld [vmem:[#allocation25 + $0x40] sm:$0xff]
    %v1878 = vld [vmem:[#allocation25 + $0x48] sm:$0xff]
    %v1879 = vld [vmem:[#allocation25 + $0x50] sm:$0xff]
    %v1880 = vld [vmem:[#allocation25 + $0x58] sm:$0xff]
    %v1881 = vld [vmem:[#allocation25 + $0x60] sm:$0xff]
    %v1882 = vld [vmem:[#allocation25 + $0x68] sm:$0xff]
    %v1883 = vld [vmem:[#allocation25 + $0x70] sm:$0xff]
    %v1884 = vld [vmem:[#allocation25 + $0x78] sm:$0xff]
    %1885 = vmatpush.msra.mxu0 %v1884
    %1886 = vmatpush.msra.mxu0 %v1883
    %1887 = vmatpush.msra.mxu0 %v1882
    %1888 = vmatpush.msra.mxu0 %v1881
    %1889 = vmatpush.msra.mxu0 %v1880
    %1890 = vmatpush.msra.mxu0 %v1879
    %1891 = vmatpush.msra.mxu0 %v1878
    %1892 = vmatpush.msra.mxu0 %v1877
    %1893 = vmatpush.msra.mxu0 %v1876
    %1894 = vmatpush.msra.mxu0 %v1875
    %1895 = vmatpush.msra.mxu0 %v1874
    %1896 = vmatpush.msra.mxu0 %v1873
    %1897 = vmatpush.msra.mxu0 %v1872
    %1898 = vmatpush.msra.mxu0 %v1871
    %1899 = vmatpush.msra.mxu0 %v1870
    %1900 = vmatpush.msra.mxu0 %v1869
    %1901 = vmatmul.f32.gmra.mxu0 %v1860
    %v1902 = vpop.f32.mrf.mxu0
    %v1903 = vadd.f32 0.0, %v1902
    %1904 = vmatmul.f32.gmra.mxu0 %v1862
    %v1905 = vpop.f32.mrf.mxu0
    %v1906 = vadd.f32 0.0, %v1905
    %1907 = vmatmul.f32.gmra.mxu0 %v1865
    %v1908 = vpop.f32.mrf.mxu0
    %v1909 = vadd.f32 0.0, %v1908
    %1910 = vmatmul.f32.gmra.mxu0 %v1867
    %v1911 = vpop.f32.mrf.mxu0
    %v1912 = vadd.f32 0.0, %v1911
    %1913 = vdwg.mxu0
    %v1914 = vadd.f32 %v1845, %v1903
    %v1915 = vadd.f32 %v1846, %v1906
    %v1916 = vadd.f32 %v1847, %v1909
    %v1917 = vadd.f32 %v1848, %v1912
    %1918 = vmatpush.bf16.msra.mxu0 0
    %1919 = vmatpush.bf16.msra.mxu0 0
    %1920 = vmatpush.bf16.msra.mxu0 0
    %1921 = vmatpush.bf16.msra.mxu0 0
    %1922 = vmatpush.bf16.msra.mxu0 0
    %1923 = vmatpush.bf16.msra.mxu0 0
    %1924 = vmatpush.bf16.msra.mxu0 0
    %1925 = vmatpush.bf16.msra.mxu0 %v1849
    %1926 = vmatmul.bf16.gmra.mxu0 %v659
    %v1927 = vpop.f32.mrf.mxu0
    %v1928 = vadd.f32 0.0, %v1927
    %v1929 = vpop.f32.mrf.mxu0
    %v1930 = vadd.f32 0.0, %v1929
    %1931 = vmatmul.bf16.gmra.mxu0 %v662
    %v1932 = vpop.f32.mrf.mxu0
    %v1933 = vadd.f32 0.0, %v1932
    %v1934 = vpop.f32.mrf.mxu0
    %v1935 = vadd.f32 0.0, %v1934
    %1936 = vdwg.mxu0
    %v1937 = vld [vmem:[#allocation27] sm:$0xff]
    %v1938 = vld [vmem:[#allocation27 + $0x8] sm:$0xff]
    %v1939 = vld [vmem:[#allocation27 + $0x10] sm:$0xff]
    %v1940 = vld [vmem:[#allocation27 + $0x18] sm:$0xff]
    %v1941 = vld [vmem:[#allocation27 + $0x20] sm:$0xff]
    %v1942 = vld [vmem:[#allocation27 + $0x28] sm:$0xff]
    %v1943 = vld [vmem:[#allocation27 + $0x30] sm:$0xff]
    %v1944 = vld [vmem:[#allocation27 + $0x38] sm:$0xff]
    %v1945 = vld [vmem:[#allocation27 + $0x40] sm:$0xff]
    %v1946 = vld [vmem:[#allocation27 + $0x48] sm:$0xff]
    %v1947 = vld [vmem:[#allocation27 + $0x50] sm:$0xff]
    %v1948 = vld [vmem:[#allocation27 + $0x58] sm:$0xff]
    %v1949 = vld [vmem:[#allocation27 + $0x60] sm:$0xff]
    %v1950 = vld [vmem:[#allocation27 + $0x68] sm:$0xff]
    %v1951 = vld [vmem:[#allocation27 + $0x70] sm:$0xff]
    %v1952 = vld [vmem:[#allocation27 + $0x78] sm:$0xff]
    %1953 = vmatpush.msra.mxu0 %v1952
    %1954 = vmatpush.msra.mxu0 %v1951
    %1955 = vmatpush.msra.mxu0 %v1950
    %1956 = vmatpush.msra.mxu0 %v1949
    %1957 = vmatpush.msra.mxu0 %v1948
    %1958 = vmatpush.msra.mxu0 %v1947
    %1959 = vmatpush.msra.mxu0 %v1946
    %1960 = vmatpush.msra.mxu0 %v1945
    %1961 = vmatpush.msra.mxu0 %v1944
    %1962 = vmatpush.msra.mxu0 %v1943
    %1963 = vmatpush.msra.mxu0 %v1942
    %1964 = vmatpush.msra.mxu0 %v1941
    %1965 = vmatpush.msra.mxu0 %v1940
    %1966 = vmatpush.msra.mxu0 %v1939
    %1967 = vmatpush.msra.mxu0 %v1938
    %1968 = vmatpush.msra.mxu0 %v1937
    %1969 = vmatmul.f32.gmra.mxu0 %v1928
    %v1970 = vpop.f32.mrf.mxu0
    %v1971 = vadd.f32 0.0, %v1970
    %1972 = vmatmul.f32.gmra.mxu0 %v1930
    %v1973 = vpop.f32.mrf.mxu0
    %v1974 = vadd.f32 0.0, %v1973
    %1975 = vmatmul.f32.gmra.mxu0 %v1933
    %v1976 = vpop.f32.mrf.mxu0
    %v1977 = vadd.f32 0.0, %v1976
    %1978 = vmatmul.f32.gmra.mxu0 %v1935
    %v1979 = vpop.f32.mrf.mxu0
    %v1980 = vadd.f32 0.0, %v1979
    %1981 = vdwg.mxu0
    %v1982 = vadd.f32 %v1914, %v1971
    %v1983 = vadd.f32 %v1915, %v1974
    %v1984 = vadd.f32 %v1916, %v1977
    %v1985 = vadd.f32 %v1917, %v1980
    %v1986 = vmax.f32 %v1982, 0.0
    %v1987 = vmax.f32 %v1983, 0.0
    %v1988 = vmax.f32 %v1984, 0.0
    %v1989 = vmax.f32 %v1985, 0.0
    %v1990 = vld [vmem:[#allocation28] sm:$0xff]
    %v1991 = vld [vmem:[#allocation28 + $0x8] sm:$0xff]
    %v1992 = vld [vmem:[#allocation28 + $0x10] sm:$0xff]
    %v1993 = vld [vmem:[#allocation28 + $0x18] sm:$0xff]
    %v1994 = vld [vmem:[#allocation28 + $0x20] sm:$0xff]
    %v1995 = vld [vmem:[#allocation28 + $0x28] sm:$0xff]
    %v1996 = vld [vmem:[#allocation28 + $0x30] sm:$0xff]
    %v1997 = vld [vmem:[#allocation28 + $0x38] sm:$0xff]
    %v1998 = vld [vmem:[#allocation28 + $0x40] sm:$0xff]
    %v1999 = vld [vmem:[#allocation28 + $0x48] sm:$0xff]
    %v2000 = vld [vmem:[#allocation28 + $0x50] sm:$0xff]
    %v2001 = vld [vmem:[#allocation28 + $0x58] sm:$0xff]
    %v2002 = vld [vmem:[#allocation28 + $0x60] sm:$0xff]
    %v2003 = vld [vmem:[#allocation28 + $0x68] sm:$0xff]
    %v2004 = vld [vmem:[#allocation28 + $0x70] sm:$0xff]
    %v2005 = vld [vmem:[#allocation28 + $0x78] sm:$0xff]
    %v2006 = vld [vmem:[%s71] sm:$0x1]
    %v2008 = vperm.slane %v2006, 0
    %2010 = vmatpush.msra.mxu0 %v2005
    %2011 = vmatpush.msra.mxu0 %v2004
    %2012 = vmatpush.msra.mxu0 %v2003
    %2013 = vmatpush.msra.mxu0 %v2002
    %2014 = vmatpush.msra.mxu0 %v2001
    %2015 = vmatpush.msra.mxu0 %v2000
    %2016 = vmatpush.msra.mxu0 %v1999
    %2017 = vmatpush.msra.mxu0 %v1998
    %2018 = vmatpush.msra.mxu0 %v1997
    %2019 = vmatpush.msra.mxu0 %v1996
    %2020 = vmatpush.msra.mxu0 %v1995
    %2021 = vmatpush.msra.mxu0 %v1994
    %2022 = vmatpush.msra.mxu0 %v1993
    %2023 = vmatpush.msra.mxu0 %v1992
    %2024 = vmatpush.msra.mxu0 %v1991
    %2025 = vmatpush.msra.mxu0 %v1990
    %2026 = vmatmul.f32.gmra.mxu0 %v1986
    %v2027 = vpop.f32.mrf.mxu0
    %v2028 = vadd.f32 %v2008, %v2027
    %2029 = vmatmul.f32.gmra.mxu0 %v1987
    %v2030 = vpop.f32.mrf.mxu0
    %v2031 = vadd.f32 %v2008, %v2030
    %2032 = vmatmul.f32.gmra.mxu0 %v1988
    %v2033 = vpop.f32.mrf.mxu0
    %v2034 = vadd.f32 %v2008, %v2033
    %2035 = vmatmul.f32.gmra.mxu0 %v1989
    %v2036 = vpop.f32.mrf.mxu0
    %v2037 = vadd.f32 %v2008, %v2036
    %2038 = vdwg.mxu0
    %v2039 = vpack.c.bf16 %v2031, %v2028
    %v2040 = vpack.c.bf16 %v2037, %v2034
    %2041 = vmatpush.bf16.msra.mxu0 0
    %2042 = vmatpush.bf16.msra.mxu0 0
    %2043 = vmatpush.bf16.msra.mxu0 0
    %2044 = vmatpush.bf16.msra.mxu0 0
    %2045 = vmatpush.bf16.msra.mxu0 0
    %2046 = vmatpush.bf16.msra.mxu0 0
    %2047 = vmatpush.bf16.msra.mxu0 %v2040
    %2048 = vmatpush.bf16.msra.mxu0 %v2039
    %2049 = vmatmul.bf16.gmra.mxu0 %v804
    %v2050 = vpop.f32.mrf.mxu0
    %v2051 = vadd.f32 0.0, %v2050
    %v2052 = vpop.f32.mrf.mxu0
    %v2053 = vadd.f32 0.0, %v2052
    %2054 = vdwg.mxu0
    %v2055 = vld [vmem:[%s77] sm:$0x1]
    %v2056 = vld [vmem:[#allocation30] sm:$0xff]
    %v2057 = vld [vmem:[#allocation30 + $0x8] sm:$0xff]
    %v2058 = vld [vmem:[#allocation30 + $0x10] sm:$0xff]
    %v2059 = vld [vmem:[#allocation30 + $0x18] sm:$0xff]
    %v2060 = vld [vmem:[#allocation30 + $0x20] sm:$0xff]
    %v2061 = vld [vmem:[#allocation30 + $0x28] sm:$0xff]
    %v2062 = vld [vmem:[#allocation30 + $0x30] sm:$0xff]
    %v2063 = vld [vmem:[#allocation30 + $0x38] sm:$0xff]
    %v2064 = vld [vmem:[#allocation30 + $0x40] sm:$0xff]
    %v2065 = vld [vmem:[#allocation30 + $0x48] sm:$0xff]
    %v2066 = vld [vmem:[#allocation30 + $0x50] sm:$0xff]
    %v2067 = vld [vmem:[#allocation30 + $0x58] sm:$0xff]
    %v2068 = vld [vmem:[#allocation30 + $0x60] sm:$0xff]
    %v2069 = vld [vmem:[#allocation30 + $0x68] sm:$0xff]
    %v2070 = vld [vmem:[#allocation30 + $0x70] sm:$0xff]
    %v2071 = vld [vmem:[#allocation30 + $0x78] sm:$0xff]
    %2072 = vmatpush.msra.mxu0 %v2071
    %2073 = vmatpush.msra.mxu0 %v2070
    %2074 = vmatpush.msra.mxu0 %v2069
    %2075 = vmatpush.msra.mxu0 %v2068
    %2076 = vmatpush.msra.mxu0 %v2067
    %2077 = vmatpush.msra.mxu0 %v2066
    %2078 = vmatpush.msra.mxu0 %v2065
    %2079 = vmatpush.msra.mxu0 %v2064
    %2080 = vmatpush.msra.mxu0 %v2063
    %2081 = vmatpush.msra.mxu0 %v2062
    %2082 = vmatpush.msra.mxu0 %v2061
    %2083 = vmatpush.msra.mxu0 %v2060
    %2084 = vmatpush.msra.mxu0 %v2059
    %2085 = vmatpush.msra.mxu0 %v2058
    %2086 = vmatpush.msra.mxu0 %v2057
    %2087 = vmatpush.msra.mxu0 %v2056
    %2088 = vmatmul.f32.gmra.mxu0 %v1791
    %v2089 = vpop.f32.mrf.mxu0
    %v2090 = vadd.f32 0.0, %v2089
    %2091 = vmatmul.f32.gmra.mxu0 %v1794
    %v2092 = vpop.f32.mrf.mxu0
    %v2093 = vadd.f32 0.0, %v2092
    %2094 = vdwg.mxu0
    %v2096 = vperm.slane %v2055, 0
    %v2098 = vadd.f32 %v2096, %v2090
    %v2099 = vadd.f32 %v2096, %v2093
    %v2100 = vld [vmem:[#allocation31] sm:$0xff]
    %v2101 = vld [vmem:[#allocation31 + $0x8] sm:$0xff]
    %v2102 = vld [vmem:[#allocation31 + $0x10] sm:$0xff]
    %v2103 = vld [vmem:[#allocation31 + $0x18] sm:$0xff]
    %v2104 = vld [vmem:[#allocation31 + $0x20] sm:$0xff]
    %v2105 = vld [vmem:[#allocation31 + $0x28] sm:$0xff]
    %v2106 = vld [vmem:[#allocation31 + $0x30] sm:$0xff]
    %v2107 = vld [vmem:[#allocation31 + $0x38] sm:$0xff]
    %v2108 = vld [vmem:[#allocation31 + $0x40] sm:$0xff]
    %v2109 = vld [vmem:[#allocation31 + $0x48] sm:$0xff]
    %v2110 = vld [vmem:[#allocation31 + $0x50] sm:$0xff]
    %v2111 = vld [vmem:[#allocation31 + $0x58] sm:$0xff]
    %v2112 = vld [vmem:[#allocation31 + $0x60] sm:$0xff]
    %v2113 = vld [vmem:[#allocation31 + $0x68] sm:$0xff]
    %v2114 = vld [vmem:[#allocation31 + $0x70] sm:$0xff]
    %v2115 = vld [vmem:[#allocation31 + $0x78] sm:$0xff]
    %2116 = vmatpush.msra.mxu0 %v2115
    %2117 = vmatpush.msra.mxu0 %v2114
    %2118 = vmatpush.msra.mxu0 %v2113
    %2119 = vmatpush.msra.mxu0 %v2112
    %2120 = vmatpush.msra.mxu0 %v2111
    %2121 = vmatpush.msra.mxu0 %v2110
    %2122 = vmatpush.msra.mxu0 %v2109
    %2123 = vmatpush.msra.mxu0 %v2108
    %2124 = vmatpush.msra.mxu0 %v2107
    %2125 = vmatpush.msra.mxu0 %v2106
    %2126 = vmatpush.msra.mxu0 %v2105
    %2127 = vmatpush.msra.mxu0 %v2104
    %2128 = vmatpush.msra.mxu0 %v2103
    %2129 = vmatpush.msra.mxu0 %v2102
    %2130 = vmatpush.msra.mxu0 %v2101
    %2131 = vmatpush.msra.mxu0 %v2100
    %2132 = vmatmul.f32.gmra.mxu0 %v2051
    %v2133 = vpop.f32.mrf.mxu0
    %v2134 = vadd.f32 0.0, %v2133
    %2135 = vmatmul.f32.gmra.mxu0 %v2053
    %v2136 = vpop.f32.mrf.mxu0
    %v2137 = vadd.f32 0.0, %v2136
    %2138 = vdwg.mxu0
    %v2139 = vadd.f32 %v2098, %v2134
    %v2140 = vadd.f32 %v2099, %v2137
    %v2141 = vmax.f32 %v2139, 0.0
    %v2142 = vmax.f32 %v2140, 0.0
    %v2143 = vld [vmem:[#allocation33] sm:$0xff]
    %v2144 = vld [vmem:[#allocation33 + $0x8] sm:$0xff]
    %v2145 = vld [vmem:[#allocation33 + $0x10] sm:$0xff]
    %v2146 = vld [vmem:[#allocation33 + $0x18] sm:$0xff]
    %v2147 = vld [vmem:[#allocation33 + $0x20] sm:$0xff]
    %v2148 = vld [vmem:[#allocation33 + $0x28] sm:$0xff]
    %v2149 = vld [vmem:[#allocation33 + $0x30] sm:$0xff]
    %v2150 = vld [vmem:[#allocation33 + $0x38] sm:$0xff]
    %v2151 = vld [vmem:[#allocation33 + $0x40] sm:$0xff]
    %v2152 = vld [vmem:[#allocation33 + $0x48] sm:$0xff]
    %v2153 = vld [vmem:[#allocation33 + $0x50] sm:$0xff]
    %v2154 = vld [vmem:[#allocation33 + $0x58] sm:$0xff]
    %v2155 = vld [vmem:[#allocation33 + $0x60] sm:$0xff]
    %v2156 = vld [vmem:[#allocation33 + $0x68] sm:$0xff]
    %v2157 = vld [vmem:[#allocation33 + $0x70] sm:$0xff]
    %v2158 = vld [vmem:[#allocation33 + $0x78] sm:$0xff]
    %v2159 = vld [vmem:[%s81] sm:$0x1]
    %v2161 = vperm.slane %v2159, 0
    %2163 = vmatpush.msra.mxu0 %v2158
    %2164 = vmatpush.msra.mxu0 %v2157
    %2165 = vmatpush.msra.mxu0 %v2156
    %2166 = vmatpush.msra.mxu0 %v2155
    %2167 = vmatpush.msra.mxu0 %v2154
    %2168 = vmatpush.msra.mxu0 %v2153
    %2169 = vmatpush.msra.mxu0 %v2152
    %2170 = vmatpush.msra.mxu0 %v2151
    %2171 = vmatpush.msra.mxu0 %v2150
    %2172 = vmatpush.msra.mxu0 %v2149
    %2173 = vmatpush.msra.mxu0 %v2148
    %2174 = vmatpush.msra.mxu0 %v2147
    %2175 = vmatpush.msra.mxu0 %v2146
    %2176 = vmatpush.msra.mxu0 %v2145
    %2177 = vmatpush.msra.mxu0 %v2144
    %2178 = vmatpush.msra.mxu0 %v2143
    %2179 = vmatmul.f32.gmra.mxu0 %v2141
    %v2180 = vpop.f32.mrf.mxu0
    %v2181 = vadd.f32 %v2161, %v2180
    %2182 = vmatmul.f32.gmra.mxu0 %v2142
    %v2183 = vpop.f32.mrf.mxu0
    %v2184 = vadd.f32 %v2161, %v2183
    %2185 = vdwg.mxu0
    %2186 = vst [vmem:[%s83] sm:$0xff] %v2181
    %2187 = vst [vmem:[%s83 + $0x8] sm:$0xff] %v2184
    %2188 = vst [vmem:[%s85] sm:$0xff] %v2028
    %2189 = vst [vmem:[%s85 + $0x8] sm:$0xff] %v2031
    %2190 = vst [vmem:[%s85 + $0x10] sm:$0xff] %v2034
    %2191 = vst [vmem:[%s85 + $0x18] sm:$0xff] %v2037
    // Predicated region
    $region250: #{encode_process_decode.1} parent=1 // pred_check
      _
    $region251: #{encode_process_decode.1} parent=1 // pred_check_branch
      %2193 = sbr.rel (0) target = $region253
    $region252: #{encode_process_decode.1} parent=1 // pred_region
      _
    $region253: #{encode_process_decode.1} parent=1 // pred_fallthru
      _
    // Predicated region
    $region254: #{encode_process_decode.1} parent=1 // pred_check
      _
    $region255: #{encode_process_decode.1} parent=1 // pred_check_branch
      %2195 = sbr.rel (0) target = $region257
    $region256: #{encode_process_decode.1} parent=1 // pred_region
      _
    $region257: #{encode_process_decode.1} parent=1 // pred_fallthru
      _
    // Predicated region
    $region258: #{encode_process_decode.1} parent=1 // pred_check
      _
    $region259: #{encode_process_decode.1} parent=1 // pred_check_branch
      %2197 = sbr.rel (0) target = $region261
    $region260: #{encode_process_decode.1} parent=1 // pred_region
      _
    $region261: #{encode_process_decode.1} parent=1 // pred_fallthru
      _
    // Predicated region
    $region262: #{encode_process_decode.1} parent=1 // pred_check
      _
    $region263: #{encode_process_decode.1} parent=1 // pred_check_branch
      %2199 = sbr.rel (0) target = $region265
    $region264: #{encode_process_decode.1} parent=1 // pred_region
      _
    $region265: #{encode_process_decode.1} parent=1 // pred_fallthru
      _
    %2200 = vsyncpa [#allocation3], 1
    %2201 = vsyncpa [#allocation5], 1
    %2202 = vsyncpa [#allocation8], 1
    %2203 = vsyncpa [#allocation11], 1
    %2204 = vsyncpa [#allocation14], 1
    %2205 = vsyncpa [#allocation17], 1
    %2206 = vsyncpa [#allocation20], 1
    %2207 = vsyncpa [#allocation23], 1
    %2208 = vsyncpa [#allocation26], 1
    %2209 = vsyncpa [#allocation29], 1
    %2210 = vsyncpa [#allocation32], 1

</llo_original>
